<compile_context>
chip_gen: v6e
topology: v6e:2x2x1
jax: 0.10.0
libtpu: 0.0.40
codegen_flags: <defaults>
</compile_context>

<pallas_src>
import functools

import numpy as np
import jax
import jax.numpy as jnp
from jax.experimental import pallas as pl
from jax.experimental.pallas import tpu as pltpu


@functools.lru_cache(maxsize=None)
def _centered_dft_planes_np(n, transpose=False):
    """numpy (4, n, n) f32 planes [re, im, re+im, re-im] of the shifted DFT matrix A,
    where A @ x == fftshift(fft(ifftshift(x))).  Cached as numpy (never device-committed)
    so multi-device runs don't inherit a wrong-device constant."""
    eye = np.eye(n, dtype=np.complex128)
    a = np.fft.fftshift(np.fft.fft(np.fft.ifftshift(eye, axes=0), axis=0), axes=0)
    if transpose:
        a = a.T
    re, im = a.real, a.imag
    return np.stack([re, im, re + im, re - im]).astype(np.float32)


def _dot(a, b):
    # Default precision: single-pass bf16 multiplies, f32 accumulation on the MXU.
    return jnp.dot(a, b, preferred_element_type=jnp.float32)


def dc_kernel(im_ref, mask_ref, k0_ref, ah_ref, awt_ref, out_ref, ur_scr, ui_scr):
    Bt, _, H, W = im_ref.shape
    inv_hw = np.float32(1.0 / (H * W))

    # Grid-invariant shifted-DFT constants, 4 bf16 planes each.
    ah_re, ah_im, ah_sum, ah_dif = ah_ref[0], ah_ref[1], ah_ref[2], ah_ref[3]       # (H,H)
    awt_re, awt_im, awt_sum, awt_dif = awt_ref[0], awt_ref[1], awt_ref[2], awt_ref[3]  # (W,W)

    # ---- stage A (fused over batch): T = X @ A_W^T on the stacked (Bt*H, W) slab ----
    im = im_ref[...]                                  # (Bt, 2, H, W) bf16
    xr = im[:, 0].reshape(Bt * H, W)
    xi = im[:, 1].reshape(Bt * H, W)
    p1 = _dot(xr, awt_re)
    p2 = _dot(xi, awt_im)
    p3 = _dot(xr + xi, awt_sum)                       # Gauss 3-multiply
    tr = p1 - p2                                      # f32 (Bt*H, W)
    ti = p3 - p1 - p2

    # ---- stage B (per image): K = A_H @ T ; DC blend ; U = conj(A_H) @ K_dc ----
    for b in range(Bt):
        trb = tr[b * H:(b + 1) * H].astype(jnp.bfloat16)
        tib = ti[b * H:(b + 1) * H].astype(jnp.bfloat16)
        q1 = _dot(ah_re, trb)
        q2 = _dot(ah_im, tib)
        q3 = _dot(ah_sum, trb + tib)
        kr = q1 - q2                                  # f32 (H, W) k-space
        ki = q3 - q1 - q2

        # data consistency: k_dc = (1-m)*k + m*k0  ==  k - m*(k - k0), in f32
        m = mask_ref[b, 0].astype(jnp.float32)
        kdr = kr - m * (kr - k0_ref[b, 0])
        kdi = ki - m * (ki - k0_ref[b, 1])

        kdrb = kdr.astype(jnp.bfloat16)
        kdib = kdi.astype(jnp.bfloat16)
        r1 = _dot(ah_re, kdrb)
        r2 = _dot(ah_im, kdib)
        r3 = _dot(ah_dif, kdrb + kdib)                # conj(A_H) on the left
        ur_scr[b * H:(b + 1) * H, :] = r1 + r2
        ui_scr[b * H:(b + 1) * H, :] = r3 - r1 + r2

    # ---- stage C (fused over batch): Y = U @ conj(A_W^T) / (H*W) ----
    ur = ur_scr[...].astype(jnp.bfloat16)
    ui = ui_scr[...].astype(jnp.bfloat16)
    s1 = _dot(ur, awt_re)
    s2 = _dot(ui, awt_im)
    s3 = _dot(ur + ui, awt_dif)                       # conj(A_W^T) on the right
    yr = (s1 + s2) * inv_hw
    yi = (s3 - s1 + s2) * inv_hw
    for b in range(Bt):
        out_ref[b, 0] = yr[b * H:(b + 1) * H]
        out_ref[b, 1] = yi[b * H:(b + 1) * H]


def _vmem_estimate(bt, H, W):
    tile = bt * H * W
    est = 0
    est += 2 * tile * 2 * 2       # im_recon bf16, double-buffered
    est += 2 * tile * 1 * 2       # mask bf16, double-buffered
    est += 2 * tile * 2 * 4       # k0 f32, double-buffered
    est += 2 * tile * 2 * 4       # out f32, double-buffered
    est += 4 * H * H * 2          # A_H planes bf16 (single-buffered)
    est += 4 * W * W * 2          # A_W^T planes bf16 (single-buffered)
    est += 2 * tile * 4           # ur/ui scratch f32
    est += 16 * tile * 4          # live f32 intermediates (conservative)
    return est


def _vmem_cap_bytes():
    try:
        return int(0.75 * pltpu.get_tpu_info().vmem_capacity_bytes)
    except Exception:
        return 48 * 1024 * 1024   # safe on every generation (v7x has 64 MiB physical)


def _choose_bt(B, H, W, budget):
    bt = max(1, min(B, -(-256 // H)))       # enough rows to fill a 256-wide MXU pass
    while bt > 1 and _vmem_estimate(bt, H, W) > budget:
        bt -= 1
    while B % bt:                           # largest divisor of B not exceeding bt
        bt -= 1
    # Prefer >=2 grid steps (both v7x TensorCores busy) if halving Bt still fills the MXU.
    if B // bt < 2 <= B:
        half = bt // 2
        while half > 1 and B % half:
            half -= 1
        if half >= 1 and half * H >= 256:
            bt = half
    return bt


def data_consistency_pallas(im_recon, mask, k0):
    B, C, H, W = im_recon.shape
    assert C == 2 and k0.shape == (B, 2, H, W)

    cap = _vmem_cap_bytes()
    Bt = _choose_bt(B, H, W, cap)
    grid = (B // Bt,)

    # bf16 at the boundary for the matmul-only operands; k0 / blend / output stay f32.
    im_bf = im_recon.astype(jnp.bfloat16)
    mask_bf = jnp.broadcast_to(mask, (B, 1, H, W)).astype(jnp.bfloat16)
    k0_f32 = k0.astype(jnp.float32)

    ah = jnp.asarray(_centered_dft_planes_np(H, False), dtype=jnp.bfloat16)   # (4, H, H)
    awt = jnp.asarray(_centered_dft_planes_np(W, True), dtype=jnp.bfloat16)   # (4, W, W)

    vmem_limit = min(max(int(1.25 * _vmem_estimate(Bt, H, W)), 32 * 1024 * 1024), cap)

    def call(single_buffer_consts):
        const_kwargs = (
            dict(pipeline_mode=pl.Buffered(1)) if single_buffer_consts else {}
        )
        return pl.pallas_call(
            dc_kernel,
            out_shape=jax.ShapeDtypeStruct((B, 2, H, W), jnp.float32),
            grid=grid,
            in_specs=[
                pl.BlockSpec((Bt, 2, H, W), lambda b: (b, 0, 0, 0)),   # im_recon (bf16)
                pl.BlockSpec((Bt, 1, H, W), lambda b: (b, 0, 0, 0)),   # mask (bf16)
                pl.BlockSpec((Bt, 2, H, W), lambda b: (b, 0, 0, 0)),   # k0 (f32)
                pl.BlockSpec((4, H, H), lambda b: (0, 0, 0), **const_kwargs),   # A_H planes
                pl.BlockSpec((4, W, W), lambda b: (0, 0, 0), **const_kwargs),   # A_W^T planes
            ],
            out_specs=pl.BlockSpec((Bt, 2, H, W), lambda b: (b, 0, 0, 0)),
            scratch_shapes=[
                pltpu.VMEM((Bt * H, W), jnp.float32),   # stacked U real
                pltpu.VMEM((Bt * H, W), jnp.float32),   # stacked U imag
            ],
            compiler_params=pltpu.CompilerParams(
                dimension_semantics=("parallel",),
                vmem_limit_bytes=vmem_limit,
            ),
        )(im_bf, mask_bf, k0_f32, ah, awt)

    try:
        return call(True)
    except Exception:
        # TODO(synk): drop this fallback once single-buffered (Buffered(1)) grid-invariant
        # inputs are accepted by every deployed JAX/Mosaic version.
        return call(False)


def data_consistency_reference(im_recon, mask, k0):
    """Pure-JAX reference mirroring the PyTorch forward exactly (f32)."""
    x = im_recon[:, 0] + 1j * im_recon[:, 1]
    k = jnp.fft.ifftshift(x, axes=(-2, -1))
    k = jnp.fft.fft2(k)
    k = jnp.fft.fftshift(k, axes=(-2, -1))
    k = jnp.stack([k.real, k.imag], axis=1)
    k_dc = (1.0 - mask) * k + mask * k0
    kc = k_dc[:, 0] + 1j * k_dc[:, 1]
    im = jnp.fft.ifftshift(kc, axes=(-2, -1))
    im = jnp.fft.ifft2(im)
    im = jnp.fft.fftshift(im, axes=(-2, -1))
    return jnp.stack([im.real, im.imag], axis=1)


if __name__ == "__main__":
    B, H, W = 2, 16, 16
    key = jax.random.PRNGKey(0)
    k_im, k_k0, k_m = jax.random.split(key, 3)

    im_recon = jax.random.normal(k_im, (B, 2, H, W), dtype=jnp.float32)
    k0 = jax.random.normal(k_k0, (B, 2, H, W), dtype=jnp.float32)
    mask = (jax.random.uniform(k_m, (B, 1, H, W)) < 0.4).astype(jnp.float32)

    out = jax.block_until_ready(data_consistency_pallas(im_recon, mask, k0))
    ref = jax.block_until_ready(data_consistency_reference(im_recon, mask, k0))

    out_np, ref_np = np.asarray(out), np.asarray(ref)
    # Tolerances sized for bf16-input / single-pass-bf16 MXU matmuls chained through four
    # DFT stages with Gauss recombination; any semantic error (wrong shift / conjugate /
    # missing 1/(H*W) scale / wrong blend) produces O(1) deviations.
    np.testing.assert_allclose(out_np, ref_np, rtol=5e-2, atol=5e-2)
    rel_l2 = np.linalg.norm(out_np - ref_np) / np.linalg.norm(ref_np)
    assert rel_l2 < 2.5e-2, f"relative L2 error too large: {rel_l2}"

    print("KERNEL_OK")
</pallas_src>

<mosaic_0001>
module attributes {stable_mosaic.version = 11 : i64} {
  func.func @dc_kernel(%arg0: i32, %arg1: memref<2x2x16x16xbf16, #tpu.memory_space<vmem>>, %arg2: memref<2x1x16x16xbf16, #tpu.memory_space<vmem>>, %arg3: memref<2x2x16x16xf32, #tpu.memory_space<vmem>>, %arg4: memref<4x16x16xbf16, #tpu.memory_space<vmem>>, %arg5: memref<4x16x16xbf16, #tpu.memory_space<vmem>>, %arg6: memref<2x2x16x16xf32, #tpu.memory_space<vmem>>, %arg7: memref<32x16xf32, #tpu.memory_space<vmem>>, %arg8: memref<32x16xf32, #tpu.memory_space<vmem>>) attributes {dimension_semantics = [#tpu.dimension_semantics<parallel>], iteration_bounds = array<i64: 1>, scalar_prefetch = 0 : i64, scratch_operands = 2 : i64, tpu.core_type = #tpu.core_type<tc>, window_params = [{transform_indices = @transform_0, window_bounds = array<i64: 2, 2, 16, 16>}, {transform_indices = @transform_1, window_bounds = array<i64: 2, 1, 16, 16>}, {transform_indices = @transform_2, window_bounds = array<i64: 2, 2, 16, 16>}, {pipeline_mode = #tpu.pipeline_mode<synchronous>, transform_indices = @transform_3, window_bounds = array<i64: 4, 16, 16>}, {pipeline_mode = #tpu.pipeline_mode<synchronous>, transform_indices = @transform_4, window_bounds = array<i64: 4, 16, 16>}, {transform_indices = @transform_5, window_bounds = array<i64: 2, 2, 16, 16>}]} {
    %c0 = arith.constant 0 : index
    %c0_0 = arith.constant 0 : index
    %c0_1 = arith.constant 0 : index
    %0 = vector.load %arg4[%c0, %c0_0, %c0_1] : memref<4x16x16xbf16, #tpu.memory_space<vmem>>, vector<1x16x16xbf16>
    %1 = vector.shape_cast %0 : vector<1x16x16xbf16> to vector<16x16xbf16>
    %c1 = arith.constant 1 : index
    %c0_2 = arith.constant 0 : index
    %c0_3 = arith.constant 0 : index
    %2 = vector.load %arg4[%c1, %c0_2, %c0_3] : memref<4x16x16xbf16, #tpu.memory_space<vmem>>, vector<1x16x16xbf16>
    %3 = vector.shape_cast %2 : vector<1x16x16xbf16> to vector<16x16xbf16>
    %c2 = arith.constant 2 : index
    %c0_4 = arith.constant 0 : index
    %c0_5 = arith.constant 0 : index
    %4 = vector.load %arg4[%c2, %c0_4, %c0_5] : memref<4x16x16xbf16, #tpu.memory_space<vmem>>, vector<1x16x16xbf16>
    %5 = vector.shape_cast %4 : vector<1x16x16xbf16> to vector<16x16xbf16>
    %c3 = arith.constant 3 : index
    %c0_6 = arith.constant 0 : index
    %c0_7 = arith.constant 0 : index
    %6 = vector.load %arg4[%c3, %c0_6, %c0_7] : memref<4x16x16xbf16, #tpu.memory_space<vmem>>, vector<1x16x16xbf16>
    %7 = vector.shape_cast %6 : vector<1x16x16xbf16> to vector<16x16xbf16>
    %c0_8 = arith.constant 0 : index
    %c0_9 = arith.constant 0 : index
    %c0_10 = arith.constant 0 : index
    %8 = vector.load %arg5[%c0_8, %c0_9, %c0_10] : memref<4x16x16xbf16, #tpu.memory_space<vmem>>, vector<1x16x16xbf16>
    %9 = vector.shape_cast %8 : vector<1x16x16xbf16> to vector<16x16xbf16>
    %c1_11 = arith.constant 1 : index
    %c0_12 = arith.constant 0 : index
    %c0_13 = arith.constant 0 : index
    %10 = vector.load %arg5[%c1_11, %c0_12, %c0_13] : memref<4x16x16xbf16, #tpu.memory_space<vmem>>, vector<1x16x16xbf16>
    %11 = vector.shape_cast %10 : vector<1x16x16xbf16> to vector<16x16xbf16>
    %c2_14 = arith.constant 2 : index
    %c0_15 = arith.constant 0 : index
    %c0_16 = arith.constant 0 : index
    %12 = vector.load %arg5[%c2_14, %c0_15, %c0_16] : memref<4x16x16xbf16, #tpu.memory_space<vmem>>, vector<1x16x16xbf16>
    %13 = vector.shape_cast %12 : vector<1x16x16xbf16> to vector<16x16xbf16>
    %c3_17 = arith.constant 3 : index
    %c0_18 = arith.constant 0 : index
    %c0_19 = arith.constant 0 : index
    %14 = vector.load %arg5[%c3_17, %c0_18, %c0_19] : memref<4x16x16xbf16, #tpu.memory_space<vmem>>, vector<1x16x16xbf16>
    %15 = vector.shape_cast %14 : vector<1x16x16xbf16> to vector<16x16xbf16>
    %c0_20 = arith.constant 0 : index
    %c0_21 = arith.constant 0 : index
    %c0_22 = arith.constant 0 : index
    %c0_23 = arith.constant 0 : index
    %16 = vector.load %arg1[%c0_20, %c0_21, %c0_22, %c0_23] : memref<2x2x16x16xbf16, #tpu.memory_space<vmem>>, vector<2x2x16x16xbf16>
    %17 = vector.extract_strided_slice %16 {offsets = [0, 0, 0, 0], sizes = [2, 1, 16, 16], strides = [1, 1, 1, 1]} : vector<2x2x16x16xbf16> to vector<2x1x16x16xbf16>
    %18 = vector.shape_cast %17 : vector<2x1x16x16xbf16> to vector<2x16x16xbf16>
    %19 = vector.shape_cast %18 : vector<2x16x16xbf16> to vector<32x16xbf16>
    %20 = vector.extract_strided_slice %16 {offsets = [0, 1, 0, 0], sizes = [2, 1, 16, 16], strides = [1, 1, 1, 1]} : vector<2x2x16x16xbf16> to vector<2x1x16x16xbf16>
    %21 = vector.shape_cast %20 : vector<2x1x16x16xbf16> to vector<2x16x16xbf16>
    %22 = vector.shape_cast %21 : vector<2x16x16xbf16> to vector<32x16xbf16>
    %cst = arith.constant dense<0.000000e+00> : vector<32x16xf32>
    %23 = tpu.matmul %19, %9, %cst {dimension_numbers = #tpu.dot_dimension_numbers<[1], [0], [0], [1], [0, 0, 1, 1], [], []>} : vector<32x16xbf16>, vector<16x16xbf16>, vector<32x16xf32> -> vector<32x16xf32>
    %cst_24 = arith.constant dense<0.000000e+00> : vector<32x16xf32>
    %24 = tpu.matmul %22, %11, %cst_24 {dimension_numbers = #tpu.dot_dimension_numbers<[1], [0], [0], [1], [0, 0, 1, 1], [], []>} : vector<32x16xbf16>, vector<16x16xbf16>, vector<32x16xf32> -> vector<32x16xf32>
    %25 = arith.addf %19, %22 : vector<32x16xbf16>
    %cst_25 = arith.constant dense<0.000000e+00> : vector<32x16xf32>
    %26 = tpu.matmul %25, %13, %cst_25 {dimension_numbers = #tpu.dot_dimension_numbers<[1], [0], [0], [1], [0, 0, 1, 1], [], []>} : vector<32x16xbf16>, vector<16x16xbf16>, vector<32x16xf32> -> vector<32x16xf32>
    %27 = arith.subf %23, %24 : vector<32x16xf32>
    %28 = arith.subf %26, %23 : vector<32x16xf32>
    %29 = arith.subf %28, %24 : vector<32x16xf32>
    %30 = vector.extract_strided_slice %27 {offsets = [0, 0], sizes = [16, 16], strides = [1, 1]} : vector<32x16xf32> to vector<16x16xf32>
    %31 = arith.truncf %30 : vector<16x16xf32> to vector<16x16xbf16>
    %32 = vector.extract_strided_slice %29 {offsets = [0, 0], sizes = [16, 16], strides = [1, 1]} : vector<32x16xf32> to vector<16x16xf32>
    %33 = arith.truncf %32 : vector<16x16xf32> to vector<16x16xbf16>
    %cst_26 = arith.constant dense<0.000000e+00> : vector<16x16xf32>
    %34 = tpu.matmul %1, %31, %cst_26 {dimension_numbers = #tpu.dot_dimension_numbers<[1], [0], [0], [1], [0, 0, 1, 1], [], []>} : vector<16x16xbf16>, vector<16x16xbf16>, vector<16x16xf32> -> vector<16x16xf32>
    %cst_27 = arith.constant dense<0.000000e+00> : vector<16x16xf32>
    %35 = tpu.matmul %3, %33, %cst_27 {dimension_numbers = #tpu.dot_dimension_numbers<[1], [0], [0], [1], [0, 0, 1, 1], [], []>} : vector<16x16xbf16>, vector<16x16xbf16>, vector<16x16xf32> -> vector<16x16xf32>
    %36 = arith.addf %31, %33 : vector<16x16xbf16>
    %cst_28 = arith.constant dense<0.000000e+00> : vector<16x16xf32>
    %37 = tpu.matmul %5, %36, %cst_28 {dimension_numbers = #tpu.dot_dimension_numbers<[1], [0], [0], [1], [0, 0, 1, 1], [], []>} : vector<16x16xbf16>, vector<16x16xbf16>, vector<16x16xf32> -> vector<16x16xf32>
    %38 = arith.subf %34, %35 : vector<16x16xf32>
    %39 = arith.subf %37, %34 : vector<16x16xf32>
    %40 = arith.subf %39, %35 : vector<16x16xf32>
    %c0_29 = arith.constant 0 : index
    %c0_30 = arith.constant 0 : index
    %c0_31 = arith.constant 0 : index
    %c0_32 = arith.constant 0 : index
    %41 = vector.load %arg2[%c0_29, %c0_30, %c0_31, %c0_32] : memref<2x1x16x16xbf16, #tpu.memory_space<vmem>>, vector<1x1x16x16xbf16>
    %42 = vector.shape_cast %41 : vector<1x1x16x16xbf16> to vector<16x16xbf16>
    %43 = arith.extf %42 : vector<16x16xbf16> to vector<16x16xf32>
    %c0_33 = arith.constant 0 : index
    %c0_34 = arith.constant 0 : index
    %c0_35 = arith.constant 0 : index
    %c0_36 = arith.constant 0 : index
    %44 = vector.load %arg3[%c0_33, %c0_34, %c0_35, %c0_36] : memref<2x2x16x16xf32, #tpu.memory_space<vmem>>, vector<1x1x16x16xf32>
    %45 = vector.shape_cast %44 : vector<1x1x16x16xf32> to vector<16x16xf32>
    %46 = arith.subf %38, %45 : vector<16x16xf32>
    %47 = arith.mulf %43, %46 : vector<16x16xf32>
    %48 = arith.subf %38, %47 : vector<16x16xf32>
    %c0_37 = arith.constant 0 : index
    %c1_38 = arith.constant 1 : index
    %c0_39 = arith.constant 0 : index
    %c0_40 = arith.constant 0 : index
    %49 = vector.load %arg3[%c0_37, %c1_38, %c0_39, %c0_40] : memref<2x2x16x16xf32, #tpu.memory_space<vmem>>, vector<1x1x16x16xf32>
    %50 = vector.shape_cast %49 : vector<1x1x16x16xf32> to vector<16x16xf32>
    %51 = arith.subf %40, %50 : vector<16x16xf32>
    %52 = arith.mulf %43, %51 : vector<16x16xf32>
    %53 = arith.subf %40, %52 : vector<16x16xf32>
    %54 = arith.truncf %48 : vector<16x16xf32> to vector<16x16xbf16>
    %55 = arith.truncf %53 : vector<16x16xf32> to vector<16x16xbf16>
    %cst_41 = arith.constant dense<0.000000e+00> : vector<16x16xf32>
    %56 = tpu.matmul %1, %54, %cst_41 {dimension_numbers = #tpu.dot_dimension_numbers<[1], [0], [0], [1], [0, 0, 1, 1], [], []>} : vector<16x16xbf16>, vector<16x16xbf16>, vector<16x16xf32> -> vector<16x16xf32>
    %cst_42 = arith.constant dense<0.000000e+00> : vector<16x16xf32>
    %57 = tpu.matmul %3, %55, %cst_42 {dimension_numbers = #tpu.dot_dimension_numbers<[1], [0], [0], [1], [0, 0, 1, 1], [], []>} : vector<16x16xbf16>, vector<16x16xbf16>, vector<16x16xf32> -> vector<16x16xf32>
    %58 = arith.addf %54, %55 : vector<16x16xbf16>
    %cst_43 = arith.constant dense<0.000000e+00> : vector<16x16xf32>
    %59 = tpu.matmul %7, %58, %cst_43 {dimension_numbers = #tpu.dot_dimension_numbers<[1], [0], [0], [1], [0, 0, 1, 1], [], []>} : vector<16x16xbf16>, vector<16x16xbf16>, vector<16x16xf32> -> vector<16x16xf32>
    %60 = arith.addf %56, %57 : vector<16x16xf32>
    %c0_44 = arith.constant 0 : index
    %c0_45 = arith.constant 0 : index
    %61 = vector.load %arg7[%c0_44, %c0_45] : memref<32x16xf32, #tpu.memory_space<vmem>>, vector<16x16xf32>
    tpu.vector_store %arg7[%c0_44, %c0_45], %60 {strides = array<i32>} : memref<32x16xf32, #tpu.memory_space<vmem>>, vector<16x16xf32>,
    %62 = arith.subf %59, %56 : vector<16x16xf32>
    %63 = arith.addf %62, %57 : vector<16x16xf32>
    %c0_46 = arith.constant 0 : index
    %c0_47 = arith.constant 0 : index
    %64 = vector.load %arg8[%c0_46, %c0_47] : memref<32x16xf32, #tpu.memory_space<vmem>>, vector<16x16xf32>
    tpu.vector_store %arg8[%c0_46, %c0_47], %63 {strides = array<i32>} : memref<32x16xf32, #tpu.memory_space<vmem>>, vector<16x16xf32>,
    %65 = vector.extract_strided_slice %27 {offsets = [16, 0], sizes = [16, 16], strides = [1, 1]} : vector<32x16xf32> to vector<16x16xf32>
    %66 = arith.truncf %65 : vector<16x16xf32> to vector<16x16xbf16>
    %67 = vector.extract_strided_slice %29 {offsets = [16, 0], sizes = [16, 16], strides = [1, 1]} : vector<32x16xf32> to vector<16x16xf32>
    %68 = arith.truncf %67 : vector<16x16xf32> to vector<16x16xbf16>
    %cst_48 = arith.constant dense<0.000000e+00> : vector<16x16xf32>
    %69 = tpu.matmul %1, %66, %cst_48 {dimension_numbers = #tpu.dot_dimension_numbers<[1], [0], [0], [1], [0, 0, 1, 1], [], []>} : vector<16x16xbf16>, vector<16x16xbf16>, vector<16x16xf32> -> vector<16x16xf32>
    %cst_49 = arith.constant dense<0.000000e+00> : vector<16x16xf32>
    %70 = tpu.matmul %3, %68, %cst_49 {dimension_numbers = #tpu.dot_dimension_numbers<[1], [0], [0], [1], [0, 0, 1, 1], [], []>} : vector<16x16xbf16>, vector<16x16xbf16>, vector<16x16xf32> -> vector<16x16xf32>
    %71 = arith.addf %66, %68 : vector<16x16xbf16>
    %cst_50 = arith.constant dense<0.000000e+00> : vector<16x16xf32>
    %72 = tpu.matmul %5, %71, %cst_50 {dimension_numbers = #tpu.dot_dimension_numbers<[1], [0], [0], [1], [0, 0, 1, 1], [], []>} : vector<16x16xbf16>, vector<16x16xbf16>, vector<16x16xf32> -> vector<16x16xf32>
    %73 = arith.subf %69, %70 : vector<16x16xf32>
    %74 = arith.subf %72, %69 : vector<16x16xf32>
    %75 = arith.subf %74, %70 : vector<16x16xf32>
    %c1_51 = arith.constant 1 : index
    %c0_52 = arith.constant 0 : index
    %c0_53 = arith.constant 0 : index
    %c0_54 = arith.constant 0 : index
    %76 = vector.load %arg2[%c1_51, %c0_52, %c0_53, %c0_54] : memref<2x1x16x16xbf16, #tpu.memory_space<vmem>>, vector<1x1x16x16xbf16>
    %77 = vector.shape_cast %76 : vector<1x1x16x16xbf16> to vector<16x16xbf16>
    %78 = arith.extf %77 : vector<16x16xbf16> to vector<16x16xf32>
    %c1_55 = arith.constant 1 : index
    %c0_56 = arith.constant 0 : index
    %c0_57 = arith.constant 0 : index
    %c0_58 = arith.constant 0 : index
    %79 = vector.load %arg3[%c1_55, %c0_56, %c0_57, %c0_58] : memref<2x2x16x16xf32, #tpu.memory_space<vmem>>, vector<1x1x16x16xf32>
    %80 = vector.shape_cast %79 : vector<1x1x16x16xf32> to vector<16x16xf32>
    %81 = arith.subf %73, %80 : vector<16x16xf32>
    %82 = arith.mulf %78, %81 : vector<16x16xf32>
    %83 = arith.subf %73, %82 : vector<16x16xf32>
    %c1_59 = arith.constant 1 : index
    %c1_60 = arith.constant 1 : index
    %c0_61 = arith.constant 0 : index
    %c0_62 = arith.constant 0 : index
    %84 = vector.load %arg3[%c1_59, %c1_60, %c0_61, %c0_62] : memref<2x2x16x16xf32, #tpu.memory_space<vmem>>, vector<1x1x16x16xf32>
    %85 = vector.shape_cast %84 : vector<1x1x16x16xf32> to vector<16x16xf32>
    %86 = arith.subf %75, %85 : vector<16x16xf32>
    %87 = arith.mulf %78, %86 : vector<16x16xf32>
    %88 = arith.subf %75, %87 : vector<16x16xf32>
    %89 = arith.truncf %83 : vector<16x16xf32> to vector<16x16xbf16>
    %90 = arith.truncf %88 : vector<16x16xf32> to vector<16x16xbf16>
    %cst_63 = arith.constant dense<0.000000e+00> : vector<16x16xf32>
    %91 = tpu.matmul %1, %89, %cst_63 {dimension_numbers = #tpu.dot_dimension_numbers<[1], [0], [0], [1], [0, 0, 1, 1], [], []>} : vector<16x16xbf16>, vector<16x16xbf16>, vector<16x16xf32> -> vector<16x16xf32>
    %cst_64 = arith.constant dense<0.000000e+00> : vector<16x16xf32>
    %92 = tpu.matmul %3, %90, %cst_64 {dimension_numbers = #tpu.dot_dimension_numbers<[1], [0], [0], [1], [0, 0, 1, 1], [], []>} : vector<16x16xbf16>, vector<16x16xbf16>, vector<16x16xf32> -> vector<16x16xf32>
    %93 = arith.addf %89, %90 : vector<16x16xbf16>
    %cst_65 = arith.constant dense<0.000000e+00> : vector<16x16xf32>
    %94 = tpu.matmul %7, %93, %cst_65 {dimension_numbers = #tpu.dot_dimension_numbers<[1], [0], [0], [1], [0, 0, 1, 1], [], []>} : vector<16x16xbf16>, vector<16x16xbf16>, vector<16x16xf32> -> vector<16x16xf32>
    %95 = arith.addf %91, %92 : vector<16x16xf32>
    %c16 = arith.constant 16 : index
    %c0_66 = arith.constant 0 : index
    %96 = vector.load %arg7[%c16, %c0_66] : memref<32x16xf32, #tpu.memory_space<vmem>>, vector<16x16xf32>
    tpu.vector_store %arg7[%c16, %c0_66], %95 {strides = array<i32>} : memref<32x16xf32, #tpu.memory_space<vmem>>, vector<16x16xf32>,
    %97 = arith.subf %94, %91 : vector<16x16xf32>
    %98 = arith.addf %97, %92 : vector<16x16xf32>
    %c16_67 = arith.constant 16 : index
    %c0_68 = arith.constant 0 : index
    %99 = vector.load %arg8[%c16_67, %c0_68] : memref<32x16xf32, #tpu.memory_space<vmem>>, vector<16x16xf32>
    tpu.vector_store %arg8[%c16_67, %c0_68], %98 {strides = array<i32>} : memref<32x16xf32, #tpu.memory_space<vmem>>, vector<16x16xf32>,
    %c0_69 = arith.constant 0 : index
    %c0_70 = arith.constant 0 : index
    %100 = vector.load %arg7[%c0_69, %c0_70] : memref<32x16xf32, #tpu.memory_space<vmem>>, vector<32x16xf32>
    %101 = arith.truncf %100 : vector<32x16xf32> to vector<32x16xbf16>
    %c0_71 = arith.constant 0 : index
    %c0_72 = arith.constant 0 : index
    %102 = vector.load %arg8[%c0_71, %c0_72] : memref<32x16xf32, #tpu.memory_space<vmem>>, vector<32x16xf32>
    %103 = arith.truncf %102 : vector<32x16xf32> to vector<32x16xbf16>
    %cst_73 = arith.constant dense<0.000000e+00> : vector<32x16xf32>
    %104 = tpu.matmul %101, %9, %cst_73 {dimension_numbers = #tpu.dot_dimension_numbers<[1], [0], [0], [1], [0, 0, 1, 1], [], []>} : vector<32x16xbf16>, vector<16x16xbf16>, vector<32x16xf32> -> vector<32x16xf32>
    %cst_74 = arith.constant dense<0.000000e+00> : vector<32x16xf32>
    %105 = tpu.matmul %103, %11, %cst_74 {dimension_numbers = #tpu.dot_dimension_numbers<[1], [0], [0], [1], [0, 0, 1, 1], [], []>} : vector<32x16xbf16>, vector<16x16xbf16>, vector<32x16xf32> -> vector<32x16xf32>
    %106 = arith.addf %101, %103 : vector<32x16xbf16>
    %cst_75 = arith.constant dense<0.000000e+00> : vector<32x16xf32>
    %107 = tpu.matmul %106, %15, %cst_75 {dimension_numbers = #tpu.dot_dimension_numbers<[1], [0], [0], [1], [0, 0, 1, 1], [], []>} : vector<32x16xbf16>, vector<16x16xbf16>, vector<32x16xf32> -> vector<32x16xf32>
    %108 = arith.addf %104, %105 : vector<32x16xf32>
    %cst_76 = arith.constant 3.906250e-03 : f32
    %109 = vector.broadcast %cst_76 : f32 to vector<32x16xf32>
    %110 = arith.mulf %108, %109 : vector<32x16xf32>
    %111 = arith.subf %107, %104 : vector<32x16xf32>
    %112 = arith.addf %111, %105 : vector<32x16xf32>
    %cst_77 = arith.constant 3.906250e-03 : f32
    %113 = vector.broadcast %cst_77 : f32 to vector<32x16xf32>
    %114 = arith.mulf %112, %113 : vector<32x16xf32>
    %115 = vector.extract_strided_slice %110 {offsets = [0, 0], sizes = [16, 16], strides = [1, 1]} : vector<32x16xf32> to vector<16x16xf32>
    %c0_78 = arith.constant 0 : index
    %c0_79 = arith.constant 0 : index
    %c0_80 = arith.constant 0 : index
    %c0_81 = arith.constant 0 : index
    %116 = vector.load %arg6[%c0_78, %c0_79, %c0_80, %c0_81] : memref<2x2x16x16xf32, #tpu.memory_space<vmem>>, vector<1x1x16x16xf32>
    %117 = vector.shape_cast %116 : vector<1x1x16x16xf32> to vector<16x16xf32>
    %118 = vector.shape_cast %115 : vector<16x16xf32> to vector<1x1x16x16xf32>
    tpu.vector_store %arg6[%c0_78, %c0_79, %c0_80, %c0_81], %118 {strides = array<i32>} : memref<2x2x16x16xf32, #tpu.memory_space<vmem>>, vector<1x1x16x16xf32>,
    %119 = vector.extract_strided_slice %114 {offsets = [0, 0], sizes = [16, 16], strides = [1, 1]} : vector<32x16xf32> to vector<16x16xf32>
    %c0_82 = arith.constant 0 : index
    %c1_83 = arith.constant 1 : index
    %c0_84 = arith.constant 0 : index
    %c0_85 = arith.constant 0 : index
    %120 = vector.load %arg6[%c0_82, %c1_83, %c0_84, %c0_85] : memref<2x2x16x16xf32, #tpu.memory_space<vmem>>, vector<1x1x16x16xf32>
    %121 = vector.shape_cast %120 : vector<1x1x16x16xf32> to vector<16x16xf32>
    %122 = vector.shape_cast %119 : vector<16x16xf32> to vector<1x1x16x16xf32>
    tpu.vector_store %arg6[%c0_82, %c1_83, %c0_84, %c0_85], %122 {strides = array<i32>} : memref<2x2x16x16xf32, #tpu.memory_space<vmem>>, vector<1x1x16x16xf32>,
    %123 = vector.extract_strided_slice %110 {offsets = [16, 0], sizes = [16, 16], strides = [1, 1]} : vector<32x16xf32> to vector<16x16xf32>
    %c1_86 = arith.constant 1 : index
    %c0_87 = arith.constant 0 : index
    %c0_88 = arith.constant 0 : index
    %c0_89 = arith.constant 0 : index
    %124 = vector.load %arg6[%c1_86, %c0_87, %c0_88, %c0_89] : memref<2x2x16x16xf32, #tpu.memory_space<vmem>>, vector<1x1x16x16xf32>
    %125 = vector.shape_cast %124 : vector<1x1x16x16xf32> to vector<16x16xf32>
    %126 = vector.shape_cast %123 : vector<16x16xf32> to vector<1x1x16x16xf32>
    tpu.vector_store %arg6[%c1_86, %c0_87, %c0_88, %c0_89], %126 {strides = array<i32>} : memref<2x2x16x16xf32, #tpu.memory_space<vmem>>, vector<1x1x16x16xf32>,
    %127 = vector.extract_strided_slice %114 {offsets = [16, 0], sizes = [16, 16], strides = [1, 1]} : vector<32x16xf32> to vector<16x16xf32>
    %c1_90 = arith.constant 1 : index
    %c1_91 = arith.constant 1 : index
    %c0_92 = arith.constant 0 : index
    %c0_93 = arith.constant 0 : index
    %128 = vector.load %arg6[%c1_90, %c1_91, %c0_92, %c0_93] : memref<2x2x16x16xf32, #tpu.memory_space<vmem>>, vector<1x1x16x16xf32>
    %129 = vector.shape_cast %128 : vector<1x1x16x16xf32> to vector<16x16xf32>
    %130 = vector.shape_cast %127 : vector<16x16xf32> to vector<1x1x16x16xf32>
    tpu.vector_store %arg6[%c1_90, %c1_91, %c0_92, %c0_93], %130 {strides = array<i32>} : memref<2x2x16x16xf32, #tpu.memory_space<vmem>>, vector<1x1x16x16xf32>,
    return
  }
  func.func @transform_0(%arg0: i32) -> (i32, i32, i32, i32) {
    %c0_i32 = arith.constant 0 : i32
    %c0_i32_0 = arith.constant 0 : i32
    %c0_i32_1 = arith.constant 0 : i32
    %c0_i32_2 = arith.constant 0 : i32
    return %arg0, %c0_i32, %c0_i32_0, %c0_i32_1 : i32, i32, i32, i32
  }
  func.func @transform_1(%arg0: i32) -> (i32, i32, i32, i32) {
    %c0_i32 = arith.constant 0 : i32
    %c0_i32_0 = arith.constant 0 : i32
    %c0_i32_1 = arith.constant 0 : i32
    %c0_i32_2 = arith.constant 0 : i32
    return %arg0, %c0_i32, %c0_i32_0, %c0_i32_1 : i32, i32, i32, i32
  }
  func.func @transform_2(%arg0: i32) -> (i32, i32, i32, i32) {
    %c0_i32 = arith.constant 0 : i32
    %c0_i32_0 = arith.constant 0 : i32
    %c0_i32_1 = arith.constant 0 : i32
    %c0_i32_2 = arith.constant 0 : i32
    return %arg0, %c0_i32, %c0_i32_0, %c0_i32_1 : i32, i32, i32, i32
  }
  func.func @transform_3(%arg0: i32) -> (i32, i32, i32) {
    %c0_i32 = arith.constant 0 : i32
    %c0_i32_0 = arith.constant 0 : i32
    %c0_i32_1 = arith.constant 0 : i32
    %c0_i32_2 = arith.constant 0 : i32
    return %c0_i32, %c0_i32_0, %c0_i32_1 : i32, i32, i32
  }
  func.func @transform_4(%arg0: i32) -> (i32, i32, i32) {
    %c0_i32 = arith.constant 0 : i32
    %c0_i32_0 = arith.constant 0 : i32
    %c0_i32_1 = arith.constant 0 : i32
    %c0_i32_2 = arith.constant 0 : i32
    return %c0_i32, %c0_i32_0, %c0_i32_1 : i32, i32, i32
  }
  func.func @transform_5(%arg0: i32) -> (i32, i32, i32, i32) {
    %c0_i32 = arith.constant 0 : i32
    %c0_i32_0 = arith.constant 0 : i32
    %c0_i32_1 = arith.constant 0 : i32
    %c0_i32_2 = arith.constant 0 : i32
    return %arg0, %c0_i32, %c0_i32_0, %c0_i32_1 : i32, i32, i32, i32
  }
}

module attributes {stable_mosaic.version = 11 : i64} {
  func.func @dc_kernel(%arg0: i32, %arg1: memref<2x2x16x16xbf16, #tpu.memory_space<vmem>>, %arg2: memref<2x1x16x16xbf16, #tpu.memory_space<vmem>>, %arg3: memref<2x2x16x16xf32, #tpu.memory_space<vmem>>, %arg4: memref<4x16x16xbf16, #tpu.memory_space<vmem>>, %arg5: memref<4x16x16xbf16, #tpu.memory_space<vmem>>, %arg6: memref<2x2x16x16xf32, #tpu.memory_space<vmem>>, %arg7: memref<32x16xf32, #tpu.memory_space<vmem>>, %arg8: memref<32x16xf32, #tpu.memory_space<vmem>>) attributes {dimension_semantics = [#tpu.dimension_semantics<parallel>], iteration_bounds = array<i64: 1>, scalar_prefetch = 0 : i64, scratch_operands = 2 : i64, tpu.core_type = #tpu.core_type<tc>, window_params = [{transform_indices = @transform_0, window_bounds = array<i64: 2, 2, 16, 16>}, {transform_indices = @transform_1, window_bounds = array<i64: 2, 1, 16, 16>}, {transform_indices = @transform_2, window_bounds = array<i64: 2, 2, 16, 16>}, {pipeline_mode = #tpu.pipeline_mode<synchronous>, transform_indices = @transform_3, window_bounds = array<i64: 4, 16, 16>}, {pipeline_mode = #tpu.pipeline_mode<synchronous>, transform_indices = @transform_4, window_bounds = array<i64: 4, 16, 16>}, {transform_indices = @transform_5, window_bounds = array<i64: 2, 2, 16, 16>}]} {
    %c0 = arith.constant 0 : index
    %c0_0 = arith.constant 0 : index
    %c0_1 = arith.constant 0 : index
    %0 = vector.load %arg4[%c0, %c0_0, %c0_1] : memref<4x16x16xbf16, #tpu.memory_space<vmem>>, vector<1x16x16xbf16>
    %1 = vector.shape_cast %0 : vector<1x16x16xbf16> to vector<16x16xbf16>
    %c1 = arith.constant 1 : index
    %c0_2 = arith.constant 0 : index
    %c0_3 = arith.constant 0 : index
    %2 = vector.load %arg4[%c1, %c0_2, %c0_3] : memref<4x16x16xbf16, #tpu.memory_space<vmem>>, vector<1x16x16xbf16>
    %3 = vector.shape_cast %2 : vector<1x16x16xbf16> to vector<16x16xbf16>
    %c2 = arith.constant 2 : index
    %c0_4 = arith.constant 0 : index
    %c0_5 = arith.constant 0 : index
    %4 = vector.load %arg4[%c2, %c0_4, %c0_5] : memref<4x16x16xbf16, #tpu.memory_space<vmem>>, vector<1x16x16xbf16>
    %5 = vector.shape_cast %4 : vector<1x16x16xbf16> to vector<16x16xbf16>
    %c3 = arith.constant 3 : index
    %c0_6 = arith.constant 0 : index
    %c0_7 = arith.constant 0 : index
    %6 = vector.load %arg4[%c3, %c0_6, %c0_7] : memref<4x16x16xbf16, #tpu.memory_space<vmem>>, vector<1x16x16xbf16>
    %7 = vector.shape_cast %6 : vector<1x16x16xbf16> to vector<16x16xbf16>
    %c0_8 = arith.constant 0 : index
    %c0_9 = arith.constant 0 : index
    %c0_10 = arith.constant 0 : index
    %8 = vector.load %arg5[%c0_8, %c0_9, %c0_10] : memref<4x16x16xbf16, #tpu.memory_space<vmem>>, vector<1x16x16xbf16>
    %9 = vector.shape_cast %8 : vector<1x16x16xbf16> to vector<16x16xbf16>
    %c1_11 = arith.constant 1 : index
    %c0_12 = arith.constant 0 : index
    %c0_13 = arith.constant 0 : index
    %10 = vector.load %arg5[%c1_11, %c0_12, %c0_13] : memref<4x16x16xbf16, #tpu.memory_space<vmem>>, vector<1x16x16xbf16>
    %11 = vector.shape_cast %10 : vector<1x16x16xbf16> to vector<16x16xbf16>
    %c2_14 = arith.constant 2 : index
    %c0_15 = arith.constant 0 : index
    %c0_16 = arith.constant 0 : index
    %12 = vector.load %arg5[%c2_14, %c0_15, %c0_16] : memref<4x16x16xbf16, #tpu.memory_space<vmem>>, vector<1x16x16xbf16>
    %13 = vector.shape_cast %12 : vector<1x16x16xbf16> to vector<16x16xbf16>
    %c3_17 = arith.constant 3 : index
    %c0_18 = arith.constant 0 : index
    %c0_19 = arith.constant 0 : index
    %14 = vector.load %arg5[%c3_17, %c0_18, %c0_19] : memref<4x16x16xbf16, #tpu.memory_space<vmem>>, vector<1x16x16xbf16>
    %15 = vector.shape_cast %14 : vector<1x16x16xbf16> to vector<16x16xbf16>
    %c0_20 = arith.constant 0 : index
    %c0_21 = arith.constant 0 : index
    %c0_22 = arith.constant 0 : index
    %c0_23 = arith.constant 0 : index
    %16 = vector.load %arg1[%c0_20, %c0_21, %c0_22, %c0_23] : memref<2x2x16x16xbf16, #tpu.memory_space<vmem>>, vector<2x2x16x16xbf16>
    %17 = vector.extract_strided_slice %16 {offsets = [0, 0, 0, 0], sizes = [2, 1, 16, 16], strides = [1, 1, 1, 1]} : vector<2x2x16x16xbf16> to vector<2x1x16x16xbf16>
    %18 = vector.shape_cast %17 : vector<2x1x16x16xbf16> to vector<2x16x16xbf16>
    %19 = vector.shape_cast %18 : vector<2x16x16xbf16> to vector<32x16xbf16>
    %20 = vector.extract_strided_slice %16 {offsets = [0, 1, 0, 0], sizes = [2, 1, 16, 16], strides = [1, 1, 1, 1]} : vector<2x2x16x16xbf16> to vector<2x1x16x16xbf16>
    %21 = vector.shape_cast %20 : vector<2x1x16x16xbf16> to vector<2x16x16xbf16>
    %22 = vector.shape_cast %21 : vector<2x16x16xbf16> to vector<32x16xbf16>
    %cst = arith.constant dense<0.000000e+00> : vector<32x16xf32>
    %23 = tpu.matmul %19, %9, %cst {dimension_numbers = #tpu.dot_dimension_numbers<[1], [0], [0], [1], [0, 0, 1, 1], [], []>} : vector<32x16xbf16>, vector<16x16xbf16>, vector<32x16xf32> -> vector<32x16xf32>
    %cst_24 = arith.constant dense<0.000000e+00> : vector<32x16xf32>
    %24 = tpu.matmul %22, %11, %cst_24 {dimension_numbers = #tpu.dot_dimension_numbers<[1], [0], [0], [1], [0, 0, 1, 1], [], []>} : vector<32x16xbf16>, vector<16x16xbf16>, vector<32x16xf32> -> vector<32x16xf32>
    %25 = arith.addf %19, %22 : vector<32x16xbf16>
    %cst_25 = arith.constant dense<0.000000e+00> : vector<32x16xf32>
    %26 = tpu.matmul %25, %13, %cst_25 {dimension_numbers = #tpu.dot_dimension_numbers<[1], [0], [0], [1], [0, 0, 1, 1], [], []>} : vector<32x16xbf16>, vector<16x16xbf16>, vector<32x16xf32> -> vector<32x16xf32>
    %27 = arith.subf %23, %24 : vector<32x16xf32>
    %28 = arith.subf %26, %23 : vector<32x16xf32>
    %29 = arith.subf %28, %24 : vector<32x16xf32>
    %30 = vector.extract_strided_slice %27 {offsets = [0, 0], sizes = [16, 16], strides = [1, 1]} : vector<32x16xf32> to vector<16x16xf32>
    %31 = arith.truncf %30 : vector<16x16xf32> to vector<16x16xbf16>
    %32 = vector.extract_strided_slice %29 {offsets = [0, 0], sizes = [16, 16], strides = [1, 1]} : vector<32x16xf32> to vector<16x16xf32>
    %33 = arith.truncf %32 : vector<16x16xf32> to vector<16x16xbf16>
    %cst_26 = arith.constant dense<0.000000e+00> : vector<16x16xf32>
    %34 = tpu.matmul %1, %31, %cst_26 {dimension_numbers = #tpu.dot_dimension_numbers<[1], [0], [0], [1], [0, 0, 1, 1], [], []>} : vector<16x16xbf16>, vector<16x16xbf16>, vector<16x16xf32> -> vector<16x16xf32>
    %cst_27 = arith.constant dense<0.000000e+00> : vector<16x16xf32>
    %35 = tpu.matmul %3, %33, %cst_27 {dimension_numbers = #tpu.dot_dimension_numbers<[1], [0], [0], [1], [0, 0, 1, 1], [], []>} : vector<16x16xbf16>, vector<16x16xbf16>, vector<16x16xf32> -> vector<16x16xf32>
    %36 = arith.addf %31, %33 : vector<16x16xbf16>
    %cst_28 = arith.constant dense<0.000000e+00> : vector<16x16xf32>
    %37 = tpu.matmul %5, %36, %cst_28 {dimension_numbers = #tpu.dot_dimension_numbers<[1], [0], [0], [1], [0, 0, 1, 1], [], []>} : vector<16x16xbf16>, vector<16x16xbf16>, vector<16x16xf32> -> vector<16x16xf32>
    %38 = arith.subf %34, %35 : vector<16x16xf32>
    %39 = arith.subf %37, %34 : vector<16x16xf32>
    %40 = arith.subf %39, %35 : vector<16x16xf32>
    %c0_29 = arith.constant 0 : index
    %c0_30 = arith.constant 0 : index
    %c0_31 = arith.constant 0 : index
    %c0_32 = arith.constant 0 : index
    %41 = vector.load %arg2[%c0_29, %c0_30, %c0_31, %c0_32] : memref<2x1x16x16xbf16, #tpu.memory_space<vmem>>, vector<1x1x16x16xbf16>
    %42 = vector.shape_cast %41 : vector<1x1x16x16xbf16> to vector<16x16xbf16>
    %43 = arith.extf %42 : vector<16x16xbf16> to vector<16x16xf32>
    %c0_33 = arith.constant 0 : index
    %c0_34 = arith.constant 0 : index
    %c0_35 = arith.constant 0 : index
    %c0_36 = arith.constant 0 : index
    %44 = vector.load %arg3[%c0_33, %c0_34, %c0_35, %c0_36] : memref<2x2x16x16xf32, #tpu.memory_space<vmem>>, vector<1x1x16x16xf32>
    %45 = vector.shape_cast %44 : vector<1x1x16x16xf32> to vector<16x16xf32>
    %46 = arith.subf %38, %45 : vector<16x16xf32>
    %47 = arith.mulf %43, %46 : vector<16x16xf32>
    %48 = arith.subf %38, %47 : vector<16x16xf32>
    %c0_37 = arith.constant 0 : index
    %c1_38 = arith.constant 1 : index
    %c0_39 = arith.constant 0 : index
    %c0_40 = arith.constant 0 : index
    %49 = vector.load %arg3[%c0_37, %c1_38, %c0_39, %c0_40] : memref<2x2x16x16xf32, #tpu.memory_space<vmem>>, vector<1x1x16x16xf32>
    %50 = vector.shape_cast %49 : vector<1x1x16x16xf32> to vector<16x16xf32>
    %51 = arith.subf %40, %50 : vector<16x16xf32>
    %52 = arith.mulf %43, %51 : vector<16x16xf32>
    %53 = arith.subf %40, %52 : vector<16x16xf32>
    %54 = arith.truncf %48 : vector<16x16xf32> to vector<16x16xbf16>
    %55 = arith.truncf %53 : vector<16x16xf32> to vector<16x16xbf16>
    %cst_41 = arith.constant dense<0.000000e+00> : vector<16x16xf32>
    %56 = tpu.matmul %1, %54, %cst_41 {dimension_numbers = #tpu.dot_dimension_numbers<[1], [0], [0], [1], [0, 0, 1, 1], [], []>} : vector<16x16xbf16>, vector<16x16xbf16>, vector<16x16xf32> -> vector<16x16xf32>
    %cst_42 = arith.constant dense<0.000000e+00> : vector<16x16xf32>
    %57 = tpu.matmul %3, %55, %cst_42 {dimension_numbers = #tpu.dot_dimension_numbers<[1], [0], [0], [1], [0, 0, 1, 1], [], []>} : vector<16x16xbf16>, vector<16x16xbf16>, vector<16x16xf32> -> vector<16x16xf32>
    %58 = arith.addf %54, %55 : vector<16x16xbf16>
    %cst_43 = arith.constant dense<0.000000e+00> : vector<16x16xf32>
    %59 = tpu.matmul %7, %58, %cst_43 {dimension_numbers = #tpu.dot_dimension_numbers<[1], [0], [0], [1], [0, 0, 1, 1], [], []>} : vector<16x16xbf16>, vector<16x16xbf16>, vector<16x16xf32> -> vector<16x16xf32>
    %60 = arith.addf %56, %57 : vector<16x16xf32>
    %c0_44 = arith.constant 0 : index
    %c0_45 = arith.constant 0 : index
    %61 = vector.load %arg7[%c0_44, %c0_45] : memref<32x16xf32, #tpu.memory_space<vmem>>, vector<16x16xf32>
    tpu.vector_store %arg7[%c0_44, %c0_45], %60 {strides = array<i32>} : memref<32x16xf32, #tpu.memory_space<vmem>>, vector<16x16xf32>,
    %62 = arith.subf %59, %56 : vector<16x16xf32>
    %63 = arith.addf %62, %57 : vector<16x16xf32>
    %c0_46 = arith.constant 0 : index
    %c0_47 = arith.constant 0 : index
    %64 = vector.load %arg8[%c0_46, %c0_47] : memref<32x16xf32, #tpu.memory_space<vmem>>, vector<16x16xf32>
    tpu.vector_store %arg8[%c0_46, %c0_47], %63 {strides = array<i32>} : memref<32x16xf32, #tpu.memory_space<vmem>>, vector<16x16xf32>,
    %65 = vector.extract_strided_slice %27 {offsets = [16, 0], sizes = [16, 16], strides = [1, 1]} : vector<32x16xf32> to vector<16x16xf32>
    %66 = arith.truncf %65 : vector<16x16xf32> to vector<16x16xbf16>
    %67 = vector.extract_strided_slice %29 {offsets = [16, 0], sizes = [16, 16], strides = [1, 1]} : vector<32x16xf32> to vector<16x16xf32>
    %68 = arith.truncf %67 : vector<16x16xf32> to vector<16x16xbf16>
    %cst_48 = arith.constant dense<0.000000e+00> : vector<16x16xf32>
    %69 = tpu.matmul %1, %66, %cst_48 {dimension_numbers = #tpu.dot_dimension_numbers<[1], [0], [0], [1], [0, 0, 1, 1], [], []>} : vector<16x16xbf16>, vector<16x16xbf16>, vector<16x16xf32> -> vector<16x16xf32>
    %cst_49 = arith.constant dense<0.000000e+00> : vector<16x16xf32>
    %70 = tpu.matmul %3, %68, %cst_49 {dimension_numbers = #tpu.dot_dimension_numbers<[1], [0], [0], [1], [0, 0, 1, 1], [], []>} : vector<16x16xbf16>, vector<16x16xbf16>, vector<16x16xf32> -> vector<16x16xf32>
    %71 = arith.addf %66, %68 : vector<16x16xbf16>
    %cst_50 = arith.constant dense<0.000000e+00> : vector<16x16xf32>
    %72 = tpu.matmul %5, %71, %cst_50 {dimension_numbers = #tpu.dot_dimension_numbers<[1], [0], [0], [1], [0, 0, 1, 1], [], []>} : vector<16x16xbf16>, vector<16x16xbf16>, vector<16x16xf32> -> vector<16x16xf32>
    %73 = arith.subf %69, %70 : vector<16x16xf32>
    %74 = arith.subf %72, %69 : vector<16x16xf32>
    %75 = arith.subf %74, %70 : vector<16x16xf32>
    %c1_51 = arith.constant 1 : index
    %c0_52 = arith.constant 0 : index
    %c0_53 = arith.constant 0 : index
    %c0_54 = arith.constant 0 : index
    %76 = vector.load %arg2[%c1_51, %c0_52, %c0_53, %c0_54] : memref<2x1x16x16xbf16, #tpu.memory_space<vmem>>, vector<1x1x16x16xbf16>
    %77 = vector.shape_cast %76 : vector<1x1x16x16xbf16> to vector<16x16xbf16>
    %78 = arith.extf %77 : vector<16x16xbf16> to vector<16x16xf32>
    %c1_55 = arith.constant 1 : index
    %c0_56 = arith.constant 0 : index
    %c0_57 = arith.constant 0 : index
    %c0_58 = arith.constant 0 : index
    %79 = vector.load %arg3[%c1_55, %c0_56, %c0_57, %c0_58] : memref<2x2x16x16xf32, #tpu.memory_space<vmem>>, vector<1x1x16x16xf32>
    %80 = vector.shape_cast %79 : vector<1x1x16x16xf32> to vector<16x16xf32>
    %81 = arith.subf %73, %80 : vector<16x16xf32>
    %82 = arith.mulf %78, %81 : vector<16x16xf32>
    %83 = arith.subf %73, %82 : vector<16x16xf32>
    %c1_59 = arith.constant 1 : index
    %c1_60 = arith.constant 1 : index
    %c0_61 = arith.constant 0 : index
    %c0_62 = arith.constant 0 : index
    %84 = vector.load %arg3[%c1_59, %c1_60, %c0_61, %c0_62] : memref<2x2x16x16xf32, #tpu.memory_space<vmem>>, vector<1x1x16x16xf32>
    %85 = vector.shape_cast %84 : vector<1x1x16x16xf32> to vector<16x16xf32>
    %86 = arith.subf %75, %85 : vector<16x16xf32>
    %87 = arith.mulf %78, %86 : vector<16x16xf32>
    %88 = arith.subf %75, %87 : vector<16x16xf32>
    %89 = arith.truncf %83 : vector<16x16xf32> to vector<16x16xbf16>
    %90 = arith.truncf %88 : vector<16x16xf32> to vector<16x16xbf16>
    %cst_63 = arith.constant dense<0.000000e+00> : vector<16x16xf32>
    %91 = tpu.matmul %1, %89, %cst_63 {dimension_numbers = #tpu.dot_dimension_numbers<[1], [0], [0], [1], [0, 0, 1, 1], [], []>} : vector<16x16xbf16>, vector<16x16xbf16>, vector<16x16xf32> -> vector<16x16xf32>
    %cst_64 = arith.constant dense<0.000000e+00> : vector<16x16xf32>
    %92 = tpu.matmul %3, %90, %cst_64 {dimension_numbers = #tpu.dot_dimension_numbers<[1], [0], [0], [1], [0, 0, 1, 1], [], []>} : vector<16x16xbf16>, vector<16x16xbf16>, vector<16x16xf32> -> vector<16x16xf32>
    %93 = arith.addf %89, %90 : vector<16x16xbf16>
    %cst_65 = arith.constant dense<0.000000e+00> : vector<16x16xf32>
    %94 = tpu.matmul %7, %93, %cst_65 {dimension_numbers = #tpu.dot_dimension_numbers<[1], [0], [0], [1], [0, 0, 1, 1], [], []>} : vector<16x16xbf16>, vector<16x16xbf16>, vector<16x16xf32> -> vector<16x16xf32>
    %95 = arith.addf %91, %92 : vector<16x16xf32>
    %c16 = arith.constant 16 : index
    %c0_66 = arith.constant 0 : index
    %96 = vector.load %arg7[%c16, %c0_66] : memref<32x16xf32, #tpu.memory_space<vmem>>, vector<16x16xf32>
    tpu.vector_store %arg7[%c16, %c0_66], %95 {strides = array<i32>} : memref<32x16xf32, #tpu.memory_space<vmem>>, vector<16x16xf32>,
    %97 = arith.subf %94, %91 : vector<16x16xf32>
    %98 = arith.addf %97, %92 : vector<16x16xf32>
    %c16_67 = arith.constant 16 : index
    %c0_68 = arith.constant 0 : index
    %99 = vector.load %arg8[%c16_67, %c0_68] : memref<32x16xf32, #tpu.memory_space<vmem>>, vector<16x16xf32>
    tpu.vector_store %arg8[%c16_67, %c0_68], %98 {strides = array<i32>} : memref<32x16xf32, #tpu.memory_space<vmem>>, vector<16x16xf32>,
    %c0_69 = arith.constant 0 : index
    %c0_70 = arith.constant 0 : index
    %100 = vector.load %arg7[%c0_69, %c0_70] : memref<32x16xf32, #tpu.memory_space<vmem>>, vector<32x16xf32>
    %101 = arith.truncf %100 : vector<32x16xf32> to vector<32x16xbf16>
    %c0_71 = arith.constant 0 : index
    %c0_72 = arith.constant 0 : index
    %102 = vector.load %arg8[%c0_71, %c0_72] : memref<32x16xf32, #tpu.memory_space<vmem>>, vector<32x16xf32>
    %103 = arith.truncf %102 : vector<32x16xf32> to vector<32x16xbf16>
    %cst_73 = arith.constant dense<0.000000e+00> : vector<32x16xf32>
    %104 = tpu.matmul %101, %9, %cst_73 {dimension_numbers = #tpu.dot_dimension_numbers<[1], [0], [0], [1], [0, 0, 1, 1], [], []>} : vector<32x16xbf16>, vector<16x16xbf16>, vector<32x16xf32> -> vector<32x16xf32>
    %cst_74 = arith.constant dense<0.000000e+00> : vector<32x16xf32>
    %105 = tpu.matmul %103, %11, %cst_74 {dimension_numbers = #tpu.dot_dimension_numbers<[1], [0], [0], [1], [0, 0, 1, 1], [], []>} : vector<32x16xbf16>, vector<16x16xbf16>, vector<32x16xf32> -> vector<32x16xf32>
    %106 = arith.addf %101, %103 : vector<32x16xbf16>
    %cst_75 = arith.constant dense<0.000000e+00> : vector<32x16xf32>
    %107 = tpu.matmul %106, %15, %cst_75 {dimension_numbers = #tpu.dot_dimension_numbers<[1], [0], [0], [1], [0, 0, 1, 1], [], []>} : vector<32x16xbf16>, vector<16x16xbf16>, vector<32x16xf32> -> vector<32x16xf32>
    %108 = arith.addf %104, %105 : vector<32x16xf32>
    %cst_76 = arith.constant 3.906250e-03 : f32
    %109 = vector.broadcast %cst_76 : f32 to vector<32x16xf32>
    %110 = arith.mulf %108, %109 : vector<32x16xf32>
    %111 = arith.subf %107, %104 : vector<32x16xf32>
    %112 = arith.addf %111, %105 : vector<32x16xf32>
    %cst_77 = arith.constant 3.906250e-03 : f32
    %113 = vector.broadcast %cst_77 : f32 to vector<32x16xf32>
    %114 = arith.mulf %112, %113 : vector<32x16xf32>
    %115 = vector.extract_strided_slice %110 {offsets = [0, 0], sizes = [16, 16], strides = [1, 1]} : vector<32x16xf32> to vector<16x16xf32>
    %c0_78 = arith.constant 0 : index
    %c0_79 = arith.constant 0 : index
    %c0_80 = arith.constant 0 : index
    %c0_81 = arith.constant 0 : index
    %116 = vector.load %arg6[%c0_78, %c0_79, %c0_80, %c0_81] : memref<2x2x16x16xf32, #tpu.memory_space<vmem>>, vector<1x1x16x16xf32>
    %117 = vector.shape_cast %116 : vector<1x1x16x16xf32> to vector<16x16xf32>
    %118 = vector.shape_cast %115 : vector<16x16xf32> to vector<1x1x16x16xf32>
    tpu.vector_store %arg6[%c0_78, %c0_79, %c0_80, %c0_81], %118 {strides = array<i32>} : memref<2x2x16x16xf32, #tpu.memory_space<vmem>>, vector<1x1x16x16xf32>,
    %119 = vector.extract_strided_slice %114 {offsets = [0, 0], sizes = [16, 16], strides = [1, 1]} : vector<32x16xf32> to vector<16x16xf32>
    %c0_82 = arith.constant 0 : index
    %c1_83 = arith.constant 1 : index
    %c0_84 = arith.constant 0 : index
    %c0_85 = arith.constant 0 : index
    %120 = vector.load %arg6[%c0_82, %c1_83, %c0_84, %c0_85] : memref<2x2x16x16xf32, #tpu.memory_space<vmem>>, vector<1x1x16x16xf32>
    %121 = vector.shape_cast %120 : vector<1x1x16x16xf32> to vector<16x16xf32>
    %122 = vector.shape_cast %119 : vector<16x16xf32> to vector<1x1x16x16xf32>
    tpu.vector_store %arg6[%c0_82, %c1_83, %c0_84, %c0_85], %122 {strides = array<i32>} : memref<2x2x16x16xf32, #tpu.memory_space<vmem>>, vector<1x1x16x16xf32>,
    %123 = vector.extract_strided_slice %110 {offsets = [16, 0], sizes = [16, 16], strides = [1, 1]} : vector<32x16xf32> to vector<16x16xf32>
    %c1_86 = arith.constant 1 : index
    %c0_87 = arith.constant 0 : index
    %c0_88 = arith.constant 0 : index
    %c0_89 = arith.constant 0 : index
    %124 = vector.load %arg6[%c1_86, %c0_87, %c0_88, %c0_89] : memref<2x2x16x16xf32, #tpu.memory_space<vmem>>, vector<1x1x16x16xf32>
    %125 = vector.shape_cast %124 : vector<1x1x16x16xf32> to vector<16x16xf32>
    %126 = vector.shape_cast %123 : vector<16x16xf32> to vector<1x1x16x16xf32>
    tpu.vector_store %arg6[%c1_86, %c0_87, %c0_88, %c0_89], %126 {strides = array<i32>} : memref<2x2x16x16xf32, #tpu.memory_space<vmem>>, vector<1x1x16x16xf32>,
    %127 = vector.extract_strided_slice %114 {offsets = [16, 0], sizes = [16, 16], strides = [1, 1]} : vector<32x16xf32> to vector<16x16xf32>
    %c1_90 = arith.constant 1 : index
    %c1_91 = arith.constant 1 : index
    %c0_92 = arith.constant 0 : index
    %c0_93 = arith.constant 0 : index
    %128 = vector.load %arg6[%c1_90, %c1_91, %c0_92, %c0_93] : memref<2x2x16x16xf32, #tpu.memory_space<vmem>>, vector<1x1x16x16xf32>
    %129 = vector.shape_cast %128 : vector<1x1x16x16xf32> to vector<16x16xf32>
    %130 = vector.shape_cast %127 : vector<16x16xf32> to vector<1x1x16x16xf32>
    tpu.vector_store %arg6[%c1_90, %c1_91, %c0_92, %c0_93], %130 {strides = array<i32>} : memref<2x2x16x16xf32, #tpu.memory_space<vmem>>, vector<1x1x16x16xf32>,
    return
  }
  func.func @transform_0(%arg0: i32) -> (i32, i32, i32, i32) {
    %c0_i32 = arith.constant 0 : i32
    %c0_i32_0 = arith.constant 0 : i32
    %c0_i32_1 = arith.constant 0 : i32
    %c0_i32_2 = arith.constant 0 : i32
    return %arg0, %c0_i32, %c0_i32_0, %c0_i32_1 : i32, i32, i32, i32
  }
  func.func @transform_1(%arg0: i32) -> (i32, i32, i32, i32) {
    %c0_i32 = arith.constant 0 : i32
    %c0_i32_0 = arith.constant 0 : i32
    %c0_i32_1 = arith.constant 0 : i32
    %c0_i32_2 = arith.constant 0 : i32
    return %arg0, %c0_i32, %c0_i32_0, %c0_i32_1 : i32, i32, i32, i32
  }
  func.func @transform_2(%arg0: i32) -> (i32, i32, i32, i32) {
    %c0_i32 = arith.constant 0 : i32
    %c0_i32_0 = arith.constant 0 : i32
    %c0_i32_1 = arith.constant 0 : i32
    %c0_i32_2 = arith.constant 0 : i32
    return %arg0, %c0_i32, %c0_i32_0, %c0_i32_1 : i32, i32, i32, i32
  }
  func.func @transform_3(%arg0: i32) -> (i32, i32, i32) {
    %c0_i32 = arith.constant 0 : i32
    %c0_i32_0 = arith.constant 0 : i32
    %c0_i32_1 = arith.constant 0 : i32
    %c0_i32_2 = arith.constant 0 : i32
    return %c0_i32, %c0_i32_0, %c0_i32_1 : i32, i32, i32
  }
  func.func @transform_4(%arg0: i32) -> (i32, i32, i32) {
    %c0_i32 = arith.constant 0 : i32
    %c0_i32_0 = arith.constant 0 : i32
    %c0_i32_1 = arith.constant 0 : i32
    %c0_i32_2 = arith.constant 0 : i32
    return %c0_i32, %c0_i32_0, %c0_i32_1 : i32, i32, i32
  }
  func.func @transform_5(%arg0: i32) -> (i32, i32, i32, i32) {
    %c0_i32 = arith.constant 0 : i32
    %c0_i32_0 = arith.constant 0 : i32
    %c0_i32_1 = arith.constant 0 : i32
    %c0_i32_2 = arith.constant 0 : i32
    return %arg0, %c0_i32, %c0_i32_0, %c0_i32_1 : i32, i32, i32, i32
  }
}

</mosaic_0001>

<llo_original>
// kernel: tpu_custom_call.1
$region0: #{tpu_custom_call.1}
  #allocation0 [shape = 'u32[]', space=smem, size = 0x4, offset = 0x4, fixed_abs, tag = 'smem constant byte address 0x4 - core index']
  #allocation1 [shape = 'u32[144,128]{1,0:T(1,128)}', space=vmem, size = 0x12000, scoped, tag = 'internal scratch']
  #allocation2 [shape = 'f32[32,16]{1,0:T(8,128)}', space=vmem, size = 0x4000, scoped, tag = 'scratch operand']
  #allocation3 [shape = 'f32[32,16]{1,0:T(8,128)}', space=vmem, size = 0x4000, scoped, tag = 'scratch operand']
  %s0 = inlined_call_operand.hbm [shape: bf16[2,2,16,16], index: 0, kind: input, shape index: {}]
  %s1 = inlined_call_operand.hbm [shape: bf16[2,1,16,16], index: 1, kind: input, shape index: {}]
  %s2 = inlined_call_operand.hbm [shape: f32[2,2,16,16], index: 2, kind: input, shape index: {}]
  %s3 = inlined_call_operand.hbm [shape: bf16[4,16,16], index: 3, kind: input, shape index: {}]
  %s4 = inlined_call_operand.hbm [shape: bf16[4,16,16], index: 4, kind: input, shape index: {}]
  %s5 = inlined_call_operand.hbm [shape: f32[2,2,16,16], index: 5, kind: output, shape index: {}]
  %s6 = sld [smem:[#allocation0]]
  $region50: #{tpu_custom_call.1} parent=0
    _
  %s8 = ssub.s32 1, %s6
  %s9 = scalar_select 0, %s8, %s6
  $region1: #{tpu_custom_call.1} parent=0
    #allocation4 [shape = 'u8[16384]{0}', space=vmem, size = 0x4000, scoped, tag = 'input window, operand 0, single buffered']
    #allocation5 [shape = 's32[1]{0}', space=sflag, size = 0x4, scoped, tag = 'scoped memory for tpu_custom_call.1']
    #allocation6 [shape = 's32[1]{0}', space=sflag, size = 0x4, scoped, tag = 'scoped memory for tpu_custom_call.1']
    #allocation7 [shape = 'u8[8192]{0}', space=vmem, size = 0x2000, scoped, tag = 'input window, operand 1, single buffered']
    #allocation8 [shape = 's32[1]{0}', space=sflag, size = 0x4, scoped, tag = 'scoped memory for tpu_custom_call.1']
    #allocation9 [shape = 'u8[32768]{0}', space=vmem, size = 0x8000, scoped, tag = 'input window, operand 2, single buffered']
    #allocation10 [shape = 'u8[16384]{0}', space=vmem, size = 0x4000, scoped, tag = 'input window, operand 3, single buffered']
    #allocation11 [shape = 's32[1]{0}', space=sflag, size = 0x4, scoped, tag = 'scoped memory for tpu_custom_call.1']
    #allocation12 [shape = 'u8[16384]{0}', space=vmem, size = 0x4000, scoped, tag = 'input window, operand 4, single buffered']
    #allocation13 [shape = 'u8[32768]{0}', space=vmem, size = 0x8000, scoped, tag = 'output window, operand 0, single buffered']
    %10 = vsyncpa [#allocation5], 0
    %11 = vsyncpa [#allocation8], 0
    %12 = vsyncpa [#allocation11], 0
    %13 = vsyncpa [#allocation6], 0
    // Predicated region
    $region2: #{tpu_custom_call.1} parent=1 // pred_check
      _
    $region3: #{tpu_custom_call.1} parent=1 // pred_check_branch
      %15 = sbr.rel (0) target = $region5
    $region4: #{tpu_custom_call.1} parent=1 // pred_region
      %s17 = ssub.s32 512, 512
      %18 = vsyncadd [#allocation5], %s17
      %s19 = sshll.u32 [#allocation4], 4
      %s20 = int_to_ptr.vmem [resolvable:$true] %s19
      %25 = dma.hbm_to_vmem [thread:$0]  %s0, 512, %s20, [#allocation5], 64, 64, 4
    $region5: #{tpu_custom_call.1} parent=1 // pred_fallthru
      _
    // Predicated region
    $region6: #{tpu_custom_call.1} parent=1 // pred_check
      _
    $region7: #{tpu_custom_call.1} parent=1 // pred_check_branch
      %27 = sbr.rel (0) target = $region9
    $region8: #{tpu_custom_call.1} parent=1 // pred_region
      %s29 = ssub.s32 256, 256
      %30 = vsyncadd [#allocation8], %s29
      %s31 = sshll.u32 [#allocation7], 4
      %s32 = int_to_ptr.vmem [resolvable:$true] %s31
      %37 = dma.hbm_to_vmem [thread:$0]  %s1, 256, %s32, [#allocation8], 64, 64, 4
    $region9: #{tpu_custom_call.1} parent=1 // pred_fallthru
      _
    // Predicated region
    $region10: #{tpu_custom_call.1} parent=1 // pred_check
      _
    $region11: #{tpu_custom_call.1} parent=1 // pred_check_branch
      %39 = sbr.rel (0) target = $region13
    $region12: #{tpu_custom_call.1} parent=1 // pred_region
      %s41 = ssub.s32 1024, 1024
      %42 = vsyncadd [#allocation8], %s41
      %s43 = sshll.u32 [#allocation9], 4
      %s44 = int_to_ptr.vmem [resolvable:$true] %s43
      %49 = dma.hbm_to_vmem [thread:$0]  %s2, 1024, %s44, [#allocation8], 128, 128, 8
    $region13: #{tpu_custom_call.1} parent=1 // pred_fallthru
      _
    // Predicated region
    $region14: #{tpu_custom_call.1} parent=1 // pred_check
      _
    $region15: #{tpu_custom_call.1} parent=1 // pred_check_branch
      %51 = sbr.rel (0) target = $region17
    $region16: #{tpu_custom_call.1} parent=1 // pred_region
      %s53 = ssub.s32 512, 512
      %54 = vsyncadd [#allocation11], %s53
      %s55 = sshll.u32 [#allocation10], 4
      %s56 = int_to_ptr.vmem [resolvable:$true] %s55
      %61 = dma.hbm_to_vmem [thread:$0]  %s3, 512, %s56, [#allocation11], 64, 64, 4
    $region17: #{tpu_custom_call.1} parent=1 // pred_fallthru
      _
    // Predicated region
    $region18: #{tpu_custom_call.1} parent=1 // pred_check
      _
    $region19: #{tpu_custom_call.1} parent=1 // pred_check_branch
      %63 = sbr.rel (0) target = $region21
    $region20: #{tpu_custom_call.1} parent=1 // pred_region
      %s65 = ssub.s32 512, 512
      %66 = vsyncadd [#allocation11], %s65
      %s67 = sshll.u32 [#allocation12], 4
      %s68 = int_to_ptr.vmem [resolvable:$true] %s67
      %73 = dma.hbm_to_vmem [thread:$0]  %s4, 512, %s68, [#allocation11], 64, 64, 4
    $region21: #{tpu_custom_call.1} parent=1 // pred_fallthru
      _
    // Predicated region
    $region22: #{tpu_custom_call.1} parent=1 // pred_check
      _
    $region23: #{tpu_custom_call.1} parent=1 // pred_check_branch
      %75 = sbr.rel (0) target = $region25
    $region24: #{tpu_custom_call.1} parent=1 // pred_region
      %76 = dma.done [#allocation5], 512
    $region25: #{tpu_custom_call.1} parent=1 // pred_fallthru
      _
    // Predicated region
    $region26: #{tpu_custom_call.1} parent=1 // pred_check
      _
    $region27: #{tpu_custom_call.1} parent=1 // pred_check_branch
      %78 = sbr.rel (0) target = $region29
    $region28: #{tpu_custom_call.1} parent=1 // pred_region
      %79 = dma.done [#allocation8], 256
    $region29: #{tpu_custom_call.1} parent=1 // pred_fallthru
      _
    // Predicated region
    $region30: #{tpu_custom_call.1} parent=1 // pred_check
      _
    $region31: #{tpu_custom_call.1} parent=1 // pred_check_branch
      %81 = sbr.rel (0) target = $region33
    $region32: #{tpu_custom_call.1} parent=1 // pred_region
      %82 = dma.done [#allocation8], 1024
    $region33: #{tpu_custom_call.1} parent=1 // pred_fallthru
      _
    // Predicated region
    $region34: #{tpu_custom_call.1} parent=1 // pred_check
      _
    $region35: #{tpu_custom_call.1} parent=1 // pred_check_branch
      %84 = sbr.rel (0) target = $region37
    $region36: #{tpu_custom_call.1} parent=1 // pred_region
      %85 = dma.done [#allocation11], 512
    $region37: #{tpu_custom_call.1} parent=1 // pred_fallthru
      _
    // Predicated region
    $region38: #{tpu_custom_call.1} parent=1 // pred_check
      _
    $region39: #{tpu_custom_call.1} parent=1 // pred_check_branch
      %87 = sbr.rel (0) target = $region41
    $region40: #{tpu_custom_call.1} parent=1 // pred_region
      %88 = dma.done [#allocation11], 512
    $region41: #{tpu_custom_call.1} parent=1 // pred_fallthru
      _
    %v90 = vld [vmem:[#allocation10] sm:$0xf]
    %v91 = vld [vmem:[#allocation10 + $0x4] sm:$0xf]
    %s92 = scalar_lea.vmem [#allocation10], 8
    %v93 = vld [vmem:[%s92] sm:$0xf]
    %v94 = vld [vmem:[%s92 + $0x4] sm:$0xf]
    %s95 = scalar_lea.vmem [#allocation10], 16
    %v96 = vld [vmem:[%s95] sm:$0xf]
    %v97 = vld [vmem:[%s95 + $0x4] sm:$0xf]
    %s98 = scalar_lea.vmem [#allocation10], 24
    %v99 = vld [vmem:[%s98] sm:$0xf]
    %v100 = vld [vmem:[%s98 + $0x4] sm:$0xf]
    %v101 = vld [vmem:[#allocation12] sm:$0xf]
    %v102 = vld [vmem:[#allocation12 + $0x4] sm:$0xf]
    %s103 = scalar_lea.vmem [#allocation12], 8
    %v104 = vld [vmem:[%s103] sm:$0xf]
    %v105 = vld [vmem:[%s103 + $0x4] sm:$0xf]
    %s106 = scalar_lea.vmem [#allocation12], 16
    %v107 = vld [vmem:[%s106] sm:$0xf]
    %v108 = vld [vmem:[%s106 + $0x4] sm:$0xf]
    %s109 = scalar_lea.vmem [#allocation12], 24
    %v110 = vld [vmem:[%s109] sm:$0xf]
    %v111 = vld [vmem:[%s109 + $0x4] sm:$0xf]
    %v112 = vld [vmem:[#allocation4] sm:$0xf]
    %v113 = vld [vmem:[#allocation4 + $0x4] sm:$0xf]
    %v114 = vld [vmem:[#allocation4 + $0x8] sm:$0xf]
    %v115 = vld [vmem:[#allocation4 + $0xc] sm:$0xf]
    %v116 = vld [vmem:[#allocation4 + $0x10] sm:$0xf]
    %v117 = vld [vmem:[#allocation4 + $0x14] sm:$0xf]
    %v118 = vld [vmem:[#allocation4 + $0x18] sm:$0xf]
    %v119 = vld [vmem:[#allocation4 + $0x1c] sm:$0xf]
    %v124 = vunpack.c.l.b16 %v112
    %v125 = vunpack.c.l.b16 %v113
    %v126 = vunpack.c.l.b16 %v116
    %v127 = vunpack.c.l.b16 %v117
    %v128 = vpack.c.b16 %v125, %v124
    %v129 = vpack.c.b16 %v127, %v126
    %v132 = vunpack.c.l.b16 %v101
    %v133 = vunpack.c.l.b16 %v102
    %v134 = vpack.c.b16 %v133, %v132
    %vm136 = vcmask 130048
    %v138 = vsel %vm136, %v128, 0
    %v141 = vsel %vm136, %v129, 0
    %143 = vmatprep.subr.bf16.mxu0 0
    %144 = vmatpush1.bf16.msra.mxu0 0
    %145 = vmatprep.subr.bf16.mxu0 0
    %146 = vmatpush1.bf16.msra.mxu0 0
    %147 = vmatprep.subr.bf16.mxu0 0
    %148 = vmatpush1.bf16.msra.mxu0 0
    %149 = vmatprep.subr.bf16.mxu0 0
    %150 = vmatpush1.bf16.msra.mxu0 0
    %151 = vmatprep.subr.bf16.mxu0 0
    %152 = vmatpush1.bf16.msra.mxu0 0
    %153 = vmatprep.subr.bf16.mxu0 0
    %154 = vmatpush1.bf16.msra.mxu0 0
    %155 = vmatprep.subr.bf16.mxu0 0
    %156 = vmatpush1.bf16.msra.mxu0 0
    %157 = vmatprep.subr.bf16.mxu0 0
    %158 = vmatpush1.bf16.msra.mxu0 %v134
    %159 = vmatprep.subr.bf16.mxu0 0
    %160 = vmatpush2.bf16.msra.mxu0 0
    %161 = vmatprep.subr.bf16.mxu0 0
    %162 = vmatpush2.bf16.msra.mxu0 0
    %163 = vmatprep.subr.bf16.mxu0 0
    %164 = vmatpush2.bf16.msra.mxu0 0
    %165 = vmatprep.subr.bf16.mxu0 0
    %166 = vmatpush2.bf16.msra.mxu0 0
    %167 = vmatprep.subr.bf16.mxu0 0
    %168 = vmatpush2.bf16.msra.mxu0 0
    %169 = vmatprep.subr.bf16.mxu0 0
    %170 = vmatpush2.bf16.msra.mxu0 0
    %171 = vmatprep.subr.bf16.mxu0 0
    %172 = vmatpush2.bf16.msra.mxu0 0
    %173 = vmatprep.subr.bf16.mxu0 0
    %174 = vmatpush2.bf16.msra.mxu0 0
    %175 = vmatprep.mubr.bf16.mxu0 0
    %176 = vmatmul.mubr.bf16.gmra.mxu0 %v138
    %v177 = vpop.f32.mrf.mxu0
    %v178 = vadd.f32 0.0, %v177
    %v179 = vpop.f32.mrf.mxu0
    %v180 = vpop.f32.mrf.mxu0
    %v181 = vadd.f32 0.0, %v180
    %v182 = vpop.f32.mrf.mxu0
    %183 = vmatprep.mubr.bf16.mxu0 0
    %184 = vmatmul.mubr.bf16.gmra.mxu0 %v141
    %v185 = vpop.f32.mrf.mxu0
    %v186 = vadd.f32 0.0, %v185
    %v187 = vpop.f32.mrf.mxu0
    %v188 = vpop.f32.mrf.mxu0
    %v189 = vadd.f32 0.0, %v188
    %v190 = vpop.f32.mrf.mxu0
    %191 = vdwg.mxu0
    %v196 = vunpack.c.l.b16 %v114
    %v197 = vunpack.c.l.b16 %v115
    %v198 = vunpack.c.l.b16 %v118
    %v199 = vunpack.c.l.b16 %v119
    %v200 = vpack.c.b16 %v197, %v196
    %v201 = vpack.c.b16 %v199, %v198
    %v204 = vunpack.c.l.b16 %v104
    %v205 = vunpack.c.l.b16 %v105
    %v206 = vpack.c.b16 %v205, %v204
    %v209 = vsel %vm136, %v200, 0
    %v212 = vsel %vm136, %v201, 0
    %214 = vmatprep.subr.bf16.mxu0 0
    %215 = vmatpush1.bf16.msra.mxu0 0
    %216 = vmatprep.subr.bf16.mxu0 0
    %217 = vmatpush1.bf16.msra.mxu0 0
    %218 = vmatprep.subr.bf16.mxu0 0
    %219 = vmatpush1.bf16.msra.mxu0 0
    %220 = vmatprep.subr.bf16.mxu0 0
    %221 = vmatpush1.bf16.msra.mxu0 0
    %222 = vmatprep.subr.bf16.mxu0 0
    %223 = vmatpush1.bf16.msra.mxu0 0
    %224 = vmatprep.subr.bf16.mxu0 0
    %225 = vmatpush1.bf16.msra.mxu0 0
    %226 = vmatprep.subr.bf16.mxu0 0
    %227 = vmatpush1.bf16.msra.mxu0 0
    %228 = vmatprep.subr.bf16.mxu0 0
    %229 = vmatpush1.bf16.msra.mxu0 %v206
    %230 = vmatprep.subr.bf16.mxu0 0
    %231 = vmatpush2.bf16.msra.mxu0 0
    %232 = vmatprep.subr.bf16.mxu0 0
    %233 = vmatpush2.bf16.msra.mxu0 0
    %234 = vmatprep.subr.bf16.mxu0 0
    %235 = vmatpush2.bf16.msra.mxu0 0
    %236 = vmatprep.subr.bf16.mxu0 0
    %237 = vmatpush2.bf16.msra.mxu0 0
    %238 = vmatprep.subr.bf16.mxu0 0
    %239 = vmatpush2.bf16.msra.mxu0 0
    %240 = vmatprep.subr.bf16.mxu0 0
    %241 = vmatpush2.bf16.msra.mxu0 0
    %242 = vmatprep.subr.bf16.mxu0 0
    %243 = vmatpush2.bf16.msra.mxu0 0
    %244 = vmatprep.subr.bf16.mxu0 0
    %245 = vmatpush2.bf16.msra.mxu0 0
    %246 = vmatprep.mubr.bf16.mxu0 0
    %247 = vmatmul.mubr.bf16.gmra.mxu0 %v209
    %v248 = vpop.f32.mrf.mxu0
    %v249 = vadd.f32 0.0, %v248
    %v250 = vpop.f32.mrf.mxu0
    %v251 = vpop.f32.mrf.mxu0
    %v252 = vadd.f32 0.0, %v251
    %v253 = vpop.f32.mrf.mxu0
    %254 = vmatprep.mubr.bf16.mxu0 0
    %255 = vmatmul.mubr.bf16.gmra.mxu0 %v212
    %v256 = vpop.f32.mrf.mxu0
    %v257 = vadd.f32 0.0, %v256
    %v258 = vpop.f32.mrf.mxu0
    %v259 = vpop.f32.mrf.mxu0
    %v260 = vadd.f32 0.0, %v259
    %v261 = vpop.f32.mrf.mxu0
    %262 = vdwg.mxu0
    %v263 = vadd.bf16 %v112, %v114
    %v264 = vadd.bf16 %v113, %v115
    %v265 = vadd.bf16 %v116, %v118
    %v266 = vadd.bf16 %v117, %v119
    %v271 = vunpack.c.l.b16 %v263
    %v272 = vunpack.c.l.b16 %v264
    %v273 = vunpack.c.l.b16 %v265
    %v274 = vunpack.c.l.b16 %v266
    %v275 = vpack.c.b16 %v272, %v271
    %v276 = vpack.c.b16 %v274, %v273
    %v279 = vunpack.c.l.b16 %v107
    %v280 = vunpack.c.l.b16 %v108
    %v281 = vpack.c.b16 %v280, %v279
    %v284 = vsel %vm136, %v275, 0
    %v287 = vsel %vm136, %v276, 0
    %289 = vmatprep.subr.bf16.mxu0 0
    %290 = vmatpush1.bf16.msra.mxu0 0
    %291 = vmatprep.subr.bf16.mxu0 0
    %292 = vmatpush1.bf16.msra.mxu0 0
    %293 = vmatprep.subr.bf16.mxu0 0
    %294 = vmatpush1.bf16.msra.mxu0 0
    %295 = vmatprep.subr.bf16.mxu0 0
    %296 = vmatpush1.bf16.msra.mxu0 0
    %297 = vmatprep.subr.bf16.mxu0 0
    %298 = vmatpush1.bf16.msra.mxu0 0
    %299 = vmatprep.subr.bf16.mxu0 0
    %300 = vmatpush1.bf16.msra.mxu0 0
    %301 = vmatprep.subr.bf16.mxu0 0
    %302 = vmatpush1.bf16.msra.mxu0 0
    %303 = vmatprep.subr.bf16.mxu0 0
    %304 = vmatpush1.bf16.msra.mxu0 %v281
    %305 = vmatprep.subr.bf16.mxu0 0
    %306 = vmatpush2.bf16.msra.mxu0 0
    %307 = vmatprep.subr.bf16.mxu0 0
    %308 = vmatpush2.bf16.msra.mxu0 0
    %309 = vmatprep.subr.bf16.mxu0 0
    %310 = vmatpush2.bf16.msra.mxu0 0
    %311 = vmatprep.subr.bf16.mxu0 0
    %312 = vmatpush2.bf16.msra.mxu0 0
    %313 = vmatprep.subr.bf16.mxu0 0
    %314 = vmatpush2.bf16.msra.mxu0 0
    %315 = vmatprep.subr.bf16.mxu0 0
    %316 = vmatpush2.bf16.msra.mxu0 0
    %317 = vmatprep.subr.bf16.mxu0 0
    %318 = vmatpush2.bf16.msra.mxu0 0
    %319 = vmatprep.subr.bf16.mxu0 0
    %320 = vmatpush2.bf16.msra.mxu0 0
    %321 = vmatprep.mubr.bf16.mxu0 0
    %322 = vmatmul.mubr.bf16.gmra.mxu0 %v284
    %v323 = vpop.f32.mrf.mxu0
    %v324 = vadd.f32 0.0, %v323
    %v325 = vpop.f32.mrf.mxu0
    %v326 = vpop.f32.mrf.mxu0
    %v327 = vadd.f32 0.0, %v326
    %v328 = vpop.f32.mrf.mxu0
    %329 = vmatprep.mubr.bf16.mxu0 0
    %330 = vmatmul.mubr.bf16.gmra.mxu0 %v287
    %v331 = vpop.f32.mrf.mxu0
    %v332 = vadd.f32 0.0, %v331
    %v333 = vpop.f32.mrf.mxu0
    %v334 = vpop.f32.mrf.mxu0
    %v335 = vadd.f32 0.0, %v334
    %v336 = vpop.f32.mrf.mxu0
    %337 = vdwg.mxu0
    %v338 = vsub.f32 %v178, %v249
    %v339 = vsub.f32 %v181, %v252
    %v340 = vsub.f32 %v186, %v257
    %v341 = vsub.f32 %v189, %v260
    %v342 = vsub.f32 %v324, %v178
    %v343 = vsub.f32 %v327, %v181
    %v344 = vsub.f32 %v332, %v186
    %v345 = vsub.f32 %v335, %v189
    %v346 = vsub.f32 %v342, %v249
    %v347 = vsub.f32 %v343, %v252
    %v348 = vsub.f32 %v344, %v257
    %v349 = vsub.f32 %v345, %v260
    %v350 = vpack.c.bf16 %v339, %v338
    %v351 = vpack.c.bf16 %v347, %v346
    %v354 = vunpack.c.l.b16 %v90
    %v355 = vunpack.c.l.b16 %v91
    %v356 = vpack.c.b16 %v355, %v354
    %v358 = vsel %vm136, %v356, 0
    %360 = vmatprep.subr.bf16.mxu0 0
    %361 = vmatpush1.bf16.msra.mxu0 0
    %362 = vmatprep.subr.bf16.mxu0 0
    %363 = vmatpush1.bf16.msra.mxu0 0
    %364 = vmatprep.subr.bf16.mxu0 0
    %365 = vmatpush1.bf16.msra.mxu0 0
    %366 = vmatprep.subr.bf16.mxu0 0
    %367 = vmatpush1.bf16.msra.mxu0 0
    %368 = vmatprep.subr.bf16.mxu0 0
    %369 = vmatpush1.bf16.msra.mxu0 0
    %370 = vmatprep.subr.bf16.mxu0 0
    %371 = vmatpush1.bf16.msra.mxu0 0
    %372 = vmatprep.subr.bf16.mxu0 0
    %373 = vmatpush1.bf16.msra.mxu0 0
    %374 = vmatprep.subr.bf16.mxu0 0
    %375 = vmatpush1.bf16.msra.mxu0 %v350
    %376 = vmatprep.subr.bf16.mxu0 0
    %377 = vmatpush2.bf16.msra.mxu0 0
    %378 = vmatprep.subr.bf16.mxu0 0
    %379 = vmatpush2.bf16.msra.mxu0 0
    %380 = vmatprep.subr.bf16.mxu0 0
    %381 = vmatpush2.bf16.msra.mxu0 0
    %382 = vmatprep.subr.bf16.mxu0 0
    %383 = vmatpush2.bf16.msra.mxu0 0
    %384 = vmatprep.subr.bf16.mxu0 0
    %385 = vmatpush2.bf16.msra.mxu0 0
    %386 = vmatprep.subr.bf16.mxu0 0
    %387 = vmatpush2.bf16.msra.mxu0 0
    %388 = vmatprep.subr.bf16.mxu0 0
    %389 = vmatpush2.bf16.msra.mxu0 0
    %390 = vmatprep.subr.bf16.mxu0 0
    %391 = vmatpush2.bf16.msra.mxu0 0
    %392 = vmatprep.mubr.bf16.mxu0 0
    %393 = vmatmul.mubr.bf16.gmra.mxu0 %v358
    %v394 = vpop.f32.mrf.mxu0
    %v395 = vadd.f32 0.0, %v394
    %v396 = vpop.f32.mrf.mxu0
    %v397 = vpop.f32.mrf.mxu0
    %v398 = vadd.f32 0.0, %v397
    %v399 = vpop.f32.mrf.mxu0
    %400 = vdwg.mxu0
    %v403 = vunpack.c.l.b16 %v93
    %v404 = vunpack.c.l.b16 %v94
    %v405 = vpack.c.b16 %v404, %v403
    %v407 = vsel %vm136, %v405, 0
    %409 = vmatprep.subr.bf16.mxu0 0
    %410 = vmatpush1.bf16.msra.mxu0 0
    %411 = vmatprep.subr.bf16.mxu0 0
    %412 = vmatpush1.bf16.msra.mxu0 0
    %413 = vmatprep.subr.bf16.mxu0 0
    %414 = vmatpush1.bf16.msra.mxu0 0
    %415 = vmatprep.subr.bf16.mxu0 0
    %416 = vmatpush1.bf16.msra.mxu0 0
    %417 = vmatprep.subr.bf16.mxu0 0
    %418 = vmatpush1.bf16.msra.mxu0 0
    %419 = vmatprep.subr.bf16.mxu0 0
    %420 = vmatpush1.bf16.msra.mxu0 0
    %421 = vmatprep.subr.bf16.mxu0 0
    %422 = vmatpush1.bf16.msra.mxu0 0
    %423 = vmatprep.subr.bf16.mxu0 0
    %424 = vmatpush1.bf16.msra.mxu0 %v351
    %425 = vmatprep.subr.bf16.mxu0 0
    %426 = vmatpush2.bf16.msra.mxu0 0
    %427 = vmatprep.subr.bf16.mxu0 0
    %428 = vmatpush2.bf16.msra.mxu0 0
    %429 = vmatprep.subr.bf16.mxu0 0
    %430 = vmatpush2.bf16.msra.mxu0 0
    %431 = vmatprep.subr.bf16.mxu0 0
    %432 = vmatpush2.bf16.msra.mxu0 0
    %433 = vmatprep.subr.bf16.mxu0 0
    %434 = vmatpush2.bf16.msra.mxu0 0
    %435 = vmatprep.subr.bf16.mxu0 0
    %436 = vmatpush2.bf16.msra.mxu0 0
    %437 = vmatprep.subr.bf16.mxu0 0
    %438 = vmatpush2.bf16.msra.mxu0 0
    %439 = vmatprep.subr.bf16.mxu0 0
    %440 = vmatpush2.bf16.msra.mxu0 0
    %441 = vmatprep.mubr.bf16.mxu0 0
    %442 = vmatmul.mubr.bf16.gmra.mxu0 %v407
    %v443 = vpop.f32.mrf.mxu0
    %v444 = vadd.f32 0.0, %v443
    %v445 = vpop.f32.mrf.mxu0
    %v446 = vpop.f32.mrf.mxu0
    %v447 = vadd.f32 0.0, %v446
    %v448 = vpop.f32.mrf.mxu0
    %449 = vdwg.mxu0
    %v450 = vadd.bf16 %v350, %v351
    %v453 = vunpack.c.l.b16 %v96
    %v454 = vunpack.c.l.b16 %v97
    %v455 = vpack.c.b16 %v454, %v453
    %v457 = vsel %vm136, %v455, 0
    %459 = vmatprep.subr.bf16.mxu0 0
    %460 = vmatpush1.bf16.msra.mxu0 0
    %461 = vmatprep.subr.bf16.mxu0 0
    %462 = vmatpush1.bf16.msra.mxu0 0
    %463 = vmatprep.subr.bf16.mxu0 0
    %464 = vmatpush1.bf16.msra.mxu0 0
    %465 = vmatprep.subr.bf16.mxu0 0
    %466 = vmatpush1.bf16.msra.mxu0 0
    %467 = vmatprep.subr.bf16.mxu0 0
    %468 = vmatpush1.bf16.msra.mxu0 0
    %469 = vmatprep.subr.bf16.mxu0 0
    %470 = vmatpush1.bf16.msra.mxu0 0
    %471 = vmatprep.subr.bf16.mxu0 0
    %472 = vmatpush1.bf16.msra.mxu0 0
    %473 = vmatprep.subr.bf16.mxu0 0
    %474 = vmatpush1.bf16.msra.mxu0 %v450
    %475 = vmatprep.subr.bf16.mxu0 0
    %476 = vmatpush2.bf16.msra.mxu0 0
    %477 = vmatprep.subr.bf16.mxu0 0
    %478 = vmatpush2.bf16.msra.mxu0 0
    %479 = vmatprep.subr.bf16.mxu0 0
    %480 = vmatpush2.bf16.msra.mxu0 0
    %481 = vmatprep.subr.bf16.mxu0 0
    %482 = vmatpush2.bf16.msra.mxu0 0
    %483 = vmatprep.subr.bf16.mxu0 0
    %484 = vmatpush2.bf16.msra.mxu0 0
    %485 = vmatprep.subr.bf16.mxu0 0
    %486 = vmatpush2.bf16.msra.mxu0 0
    %487 = vmatprep.subr.bf16.mxu0 0
    %488 = vmatpush2.bf16.msra.mxu0 0
    %489 = vmatprep.subr.bf16.mxu0 0
    %490 = vmatpush2.bf16.msra.mxu0 0
    %491 = vmatprep.mubr.bf16.mxu0 0
    %492 = vmatmul.mubr.bf16.gmra.mxu0 %v457
    %v493 = vpop.f32.mrf.mxu0
    %v494 = vadd.f32 0.0, %v493
    %v495 = vpop.f32.mrf.mxu0
    %v496 = vpop.f32.mrf.mxu0
    %v497 = vadd.f32 0.0, %v496
    %v498 = vpop.f32.mrf.mxu0
    %499 = vdwg.mxu0
    %v500 = vsub.f32 %v395, %v444
    %v501 = vsub.f32 %v398, %v447
    %v502 = vsub.f32 %v494, %v395
    %v503 = vsub.f32 %v497, %v398
    %v504 = vsub.f32 %v502, %v444
    %v505 = vsub.f32 %v503, %v447
    %v506 = vld [vmem:[#allocation7] sm:$0xf]
    %v507 = vld [vmem:[#allocation7 + $0x4] sm:$0xf]
    %v508 = vunpack.c.l.bf16 %v506
    %v509 = vunpack.c.l.bf16 %v507
    %v510 = vld [vmem:[#allocation9] sm:$0xff]
    %v511 = vld [vmem:[#allocation9 + $0x8] sm:$0xff]
    %v512 = vsub.f32 %v500, %v510
    %v513 = vsub.f32 %v501, %v511
    %v514 = vmul.f32 %v508, %v512
    %v515 = vmul.f32 %v509, %v513
    %v516 = vsub.f32 %v500, %v514
    %v517 = vsub.f32 %v501, %v515
    %s518 = scalar_lea.vmem [#allocation9], 16
    %v519 = vld [vmem:[%s518] sm:$0xff]
    %v520 = vld [vmem:[%s518 + $0x8] sm:$0xff]
    %v521 = vsub.f32 %v504, %v519
    %v522 = vsub.f32 %v505, %v520
    %v523 = vmul.f32 %v508, %v521
    %v524 = vmul.f32 %v509, %v522
    %v525 = vsub.f32 %v504, %v523
    %v526 = vsub.f32 %v505, %v524
    %v527 = vpack.c.bf16 %v517, %v516
    %v528 = vpack.c.bf16 %v526, %v525
    %529 = vmatprep.subr.bf16.mxu0 0
    %530 = vmatpush1.bf16.msra.mxu0 0
    %531 = vmatprep.subr.bf16.mxu0 0
    %532 = vmatpush1.bf16.msra.mxu0 0
    %533 = vmatprep.subr.bf16.mxu0 0
    %534 = vmatpush1.bf16.msra.mxu0 0
    %535 = vmatprep.subr.bf16.mxu0 0
    %536 = vmatpush1.bf16.msra.mxu0 0
    %537 = vmatprep.subr.bf16.mxu0 0
    %538 = vmatpush1.bf16.msra.mxu0 0
    %539 = vmatprep.subr.bf16.mxu0 0
    %540 = vmatpush1.bf16.msra.mxu0 0
    %541 = vmatprep.subr.bf16.mxu0 0
    %542 = vmatpush1.bf16.msra.mxu0 0
    %543 = vmatprep.subr.bf16.mxu0 0
    %544 = vmatpush1.bf16.msra.mxu0 %v527
    %545 = vmatprep.subr.bf16.mxu0 0
    %546 = vmatpush2.bf16.msra.mxu0 0
    %547 = vmatprep.subr.bf16.mxu0 0
    %548 = vmatpush2.bf16.msra.mxu0 0
    %549 = vmatprep.subr.bf16.mxu0 0
    %550 = vmatpush2.bf16.msra.mxu0 0
    %551 = vmatprep.subr.bf16.mxu0 0
    %552 = vmatpush2.bf16.msra.mxu0 0
    %553 = vmatprep.subr.bf16.mxu0 0
    %554 = vmatpush2.bf16.msra.mxu0 0
    %555 = vmatprep.subr.bf16.mxu0 0
    %556 = vmatpush2.bf16.msra.mxu0 0
    %557 = vmatprep.subr.bf16.mxu0 0
    %558 = vmatpush2.bf16.msra.mxu0 0
    %559 = vmatprep.subr.bf16.mxu0 0
    %560 = vmatpush2.bf16.msra.mxu0 0
    %561 = vmatprep.mubr.bf16.mxu0 0
    %562 = vmatmul.mubr.bf16.gmra.mxu0 %v358
    %v563 = vpop.f32.mrf.mxu0
    %v564 = vadd.f32 0.0, %v563
    %v565 = vpop.f32.mrf.mxu0
    %v566 = vpop.f32.mrf.mxu0
    %v567 = vadd.f32 0.0, %v566
    %v568 = vpop.f32.mrf.mxu0
    %569 = vdwg.mxu0
    %570 = vmatprep.subr.bf16.mxu0 0
    %571 = vmatpush1.bf16.msra.mxu0 0
    %572 = vmatprep.subr.bf16.mxu0 0
    %573 = vmatpush1.bf16.msra.mxu0 0
    %574 = vmatprep.subr.bf16.mxu0 0
    %575 = vmatpush1.bf16.msra.mxu0 0
    %576 = vmatprep.subr.bf16.mxu0 0
    %577 = vmatpush1.bf16.msra.mxu0 0
    %578 = vmatprep.subr.bf16.mxu0 0
    %579 = vmatpush1.bf16.msra.mxu0 0
    %580 = vmatprep.subr.bf16.mxu0 0
    %581 = vmatpush1.bf16.msra.mxu0 0
    %582 = vmatprep.subr.bf16.mxu0 0
    %583 = vmatpush1.bf16.msra.mxu0 0
    %584 = vmatprep.subr.bf16.mxu0 0
    %585 = vmatpush1.bf16.msra.mxu0 %v528
    %586 = vmatprep.subr.bf16.mxu0 0
    %587 = vmatpush2.bf16.msra.mxu0 0
    %588 = vmatprep.subr.bf16.mxu0 0
    %589 = vmatpush2.bf16.msra.mxu0 0
    %590 = vmatprep.subr.bf16.mxu0 0
    %591 = vmatpush2.bf16.msra.mxu0 0
    %592 = vmatprep.subr.bf16.mxu0 0
    %593 = vmatpush2.bf16.msra.mxu0 0
    %594 = vmatprep.subr.bf16.mxu0 0
    %595 = vmatpush2.bf16.msra.mxu0 0
    %596 = vmatprep.subr.bf16.mxu0 0
    %597 = vmatpush2.bf16.msra.mxu0 0
    %598 = vmatprep.subr.bf16.mxu0 0
    %599 = vmatpush2.bf16.msra.mxu0 0
    %600 = vmatprep.subr.bf16.mxu0 0
    %601 = vmatpush2.bf16.msra.mxu0 0
    %602 = vmatprep.mubr.bf16.mxu0 0
    %603 = vmatmul.mubr.bf16.gmra.mxu0 %v407
    %v604 = vpop.f32.mrf.mxu0
    %v605 = vadd.f32 0.0, %v604
    %v606 = vpop.f32.mrf.mxu0
    %v607 = vpop.f32.mrf.mxu0
    %v608 = vadd.f32 0.0, %v607
    %v609 = vpop.f32.mrf.mxu0
    %610 = vdwg.mxu0
    %v611 = vadd.bf16 %v527, %v528
    %v614 = vunpack.c.l.b16 %v99
    %v615 = vunpack.c.l.b16 %v100
    %v616 = vpack.c.b16 %v615, %v614
    %v618 = vsel %vm136, %v616, 0
    %620 = vmatprep.subr.bf16.mxu0 0
    %621 = vmatpush1.bf16.msra.mxu0 0
    %622 = vmatprep.subr.bf16.mxu0 0
    %623 = vmatpush1.bf16.msra.mxu0 0
    %624 = vmatprep.subr.bf16.mxu0 0
    %625 = vmatpush1.bf16.msra.mxu0 0
    %626 = vmatprep.subr.bf16.mxu0 0
    %627 = vmatpush1.bf16.msra.mxu0 0
    %628 = vmatprep.subr.bf16.mxu0 0
    %629 = vmatpush1.bf16.msra.mxu0 0
    %630 = vmatprep.subr.bf16.mxu0 0
    %631 = vmatpush1.bf16.msra.mxu0 0
    %632 = vmatprep.subr.bf16.mxu0 0
    %633 = vmatpush1.bf16.msra.mxu0 0
    %634 = vmatprep.subr.bf16.mxu0 0
    %635 = vmatpush1.bf16.msra.mxu0 %v611
    %636 = vmatprep.subr.bf16.mxu0 0
    %637 = vmatpush2.bf16.msra.mxu0 0
    %638 = vmatprep.subr.bf16.mxu0 0
    %639 = vmatpush2.bf16.msra.mxu0 0
    %640 = vmatprep.subr.bf16.mxu0 0
    %641 = vmatpush2.bf16.msra.mxu0 0
    %642 = vmatprep.subr.bf16.mxu0 0
    %643 = vmatpush2.bf16.msra.mxu0 0
    %644 = vmatprep.subr.bf16.mxu0 0
    %645 = vmatpush2.bf16.msra.mxu0 0
    %646 = vmatprep.subr.bf16.mxu0 0
    %647 = vmatpush2.bf16.msra.mxu0 0
    %648 = vmatprep.subr.bf16.mxu0 0
    %649 = vmatpush2.bf16.msra.mxu0 0
    %650 = vmatprep.subr.bf16.mxu0 0
    %651 = vmatpush2.bf16.msra.mxu0 0
    %652 = vmatprep.mubr.bf16.mxu0 0
    %653 = vmatmul.mubr.bf16.gmra.mxu0 %v618
    %v654 = vpop.f32.mrf.mxu0
    %v655 = vadd.f32 0.0, %v654
    %v656 = vpop.f32.mrf.mxu0
    %v657 = vpop.f32.mrf.mxu0
    %v658 = vadd.f32 0.0, %v657
    %v659 = vpop.f32.mrf.mxu0
    %660 = vdwg.mxu0
    %v661 = vadd.f32 %v564, %v605
    %v662 = vadd.f32 %v567, %v608
    %663 = vst.msk [vmem:[#allocation2] sm:$0xff] %vm136, %v661
    %664 = vst.msk [vmem:[#allocation2 + $0x8] sm:$0xff] %vm136, %v662
    %v665 = vsub.f32 %v655, %v564
    %v666 = vsub.f32 %v658, %v567
    %v667 = vadd.f32 %v665, %v605
    %v668 = vadd.f32 %v666, %v608
    %669 = vst.msk [vmem:[#allocation3] sm:$0xff] %vm136, %v667
    %670 = vst.msk [vmem:[#allocation3 + $0x8] sm:$0xff] %vm136, %v668
    %v671 = vpack.c.bf16 %v341, %v340
    %v672 = vpack.c.bf16 %v349, %v348
    %673 = vmatprep.subr.bf16.mxu0 0
    %674 = vmatpush1.bf16.msra.mxu0 0
    %675 = vmatprep.subr.bf16.mxu0 0
    %676 = vmatpush1.bf16.msra.mxu0 0
    %677 = vmatprep.subr.bf16.mxu0 0
    %678 = vmatpush1.bf16.msra.mxu0 0
    %679 = vmatprep.subr.bf16.mxu0 0
    %680 = vmatpush1.bf16.msra.mxu0 0
    %681 = vmatprep.subr.bf16.mxu0 0
    %682 = vmatpush1.bf16.msra.mxu0 0
    %683 = vmatprep.subr.bf16.mxu0 0
    %684 = vmatpush1.bf16.msra.mxu0 0
    %685 = vmatprep.subr.bf16.mxu0 0
    %686 = vmatpush1.bf16.msra.mxu0 0
    %687 = vmatprep.subr.bf16.mxu0 0
    %688 = vmatpush1.bf16.msra.mxu0 %v671
    %689 = vmatprep.subr.bf16.mxu0 0
    %690 = vmatpush2.bf16.msra.mxu0 0
    %691 = vmatprep.subr.bf16.mxu0 0
    %692 = vmatpush2.bf16.msra.mxu0 0
    %693 = vmatprep.subr.bf16.mxu0 0
    %694 = vmatpush2.bf16.msra.mxu0 0
    %695 = vmatprep.subr.bf16.mxu0 0
    %696 = vmatpush2.bf16.msra.mxu0 0
    %697 = vmatprep.subr.bf16.mxu0 0
    %698 = vmatpush2.bf16.msra.mxu0 0
    %699 = vmatprep.subr.bf16.mxu0 0
    %700 = vmatpush2.bf16.msra.mxu0 0
    %701 = vmatprep.subr.bf16.mxu0 0
    %702 = vmatpush2.bf16.msra.mxu0 0
    %703 = vmatprep.subr.bf16.mxu0 0
    %704 = vmatpush2.bf16.msra.mxu0 0
    %705 = vmatprep.mubr.bf16.mxu0 0
    %706 = vmatmul.mubr.bf16.gmra.mxu0 %v358
    %v707 = vpop.f32.mrf.mxu0
    %v708 = vadd.f32 0.0, %v707
    %v709 = vpop.f32.mrf.mxu0
    %v710 = vpop.f32.mrf.mxu0
    %v711 = vadd.f32 0.0, %v710
    %v712 = vpop.f32.mrf.mxu0
    %713 = vdwg.mxu0
    %714 = vmatprep.subr.bf16.mxu0 0
    %715 = vmatpush1.bf16.msra.mxu0 0
    %716 = vmatprep.subr.bf16.mxu0 0
    %717 = vmatpush1.bf16.msra.mxu0 0
    %718 = vmatprep.subr.bf16.mxu0 0
    %719 = vmatpush1.bf16.msra.mxu0 0
    %720 = vmatprep.subr.bf16.mxu0 0
    %721 = vmatpush1.bf16.msra.mxu0 0
    %722 = vmatprep.subr.bf16.mxu0 0
    %723 = vmatpush1.bf16.msra.mxu0 0
    %724 = vmatprep.subr.bf16.mxu0 0
    %725 = vmatpush1.bf16.msra.mxu0 0
    %726 = vmatprep.subr.bf16.mxu0 0
    %727 = vmatpush1.bf16.msra.mxu0 0
    %728 = vmatprep.subr.bf16.mxu0 0
    %729 = vmatpush1.bf16.msra.mxu0 %v672
    %730 = vmatprep.subr.bf16.mxu0 0
    %731 = vmatpush2.bf16.msra.mxu0 0
    %732 = vmatprep.subr.bf16.mxu0 0
    %733 = vmatpush2.bf16.msra.mxu0 0
    %734 = vmatprep.subr.bf16.mxu0 0
    %735 = vmatpush2.bf16.msra.mxu0 0
    %736 = vmatprep.subr.bf16.mxu0 0
    %737 = vmatpush2.bf16.msra.mxu0 0
    %738 = vmatprep.subr.bf16.mxu0 0
    %739 = vmatpush2.bf16.msra.mxu0 0
    %740 = vmatprep.subr.bf16.mxu0 0
    %741 = vmatpush2.bf16.msra.mxu0 0
    %742 = vmatprep.subr.bf16.mxu0 0
    %743 = vmatpush2.bf16.msra.mxu0 0
    %744 = vmatprep.subr.bf16.mxu0 0
    %745 = vmatpush2.bf16.msra.mxu0 0
    %746 = vmatprep.mubr.bf16.mxu0 0
    %747 = vmatmul.mubr.bf16.gmra.mxu0 %v407
    %v748 = vpop.f32.mrf.mxu0
    %v749 = vadd.f32 0.0, %v748
    %v750 = vpop.f32.mrf.mxu0
    %v751 = vpop.f32.mrf.mxu0
    %v752 = vadd.f32 0.0, %v751
    %v753 = vpop.f32.mrf.mxu0
    %754 = vdwg.mxu0
    %v755 = vadd.bf16 %v671, %v672
    %756 = vmatprep.subr.bf16.mxu0 0
    %757 = vmatpush1.bf16.msra.mxu0 0
    %758 = vmatprep.subr.bf16.mxu0 0
    %759 = vmatpush1.bf16.msra.mxu0 0
    %760 = vmatprep.subr.bf16.mxu0 0
    %761 = vmatpush1.bf16.msra.mxu0 0
    %762 = vmatprep.subr.bf16.mxu0 0
    %763 = vmatpush1.bf16.msra.mxu0 0
    %764 = vmatprep.subr.bf16.mxu0 0
    %765 = vmatpush1.bf16.msra.mxu0 0
    %766 = vmatprep.subr.bf16.mxu0 0
    %767 = vmatpush1.bf16.msra.mxu0 0
    %768 = vmatprep.subr.bf16.mxu0 0
    %769 = vmatpush1.bf16.msra.mxu0 0
    %770 = vmatprep.subr.bf16.mxu0 0
    %771 = vmatpush1.bf16.msra.mxu0 %v755
    %772 = vmatprep.subr.bf16.mxu0 0
    %773 = vmatpush2.bf16.msra.mxu0 0
    %774 = vmatprep.subr.bf16.mxu0 0
    %775 = vmatpush2.bf16.msra.mxu0 0
    %776 = vmatprep.subr.bf16.mxu0 0
    %777 = vmatpush2.bf16.msra.mxu0 0
    %778 = vmatprep.subr.bf16.mxu0 0
    %779 = vmatpush2.bf16.msra.mxu0 0
    %780 = vmatprep.subr.bf16.mxu0 0
    %781 = vmatpush2.bf16.msra.mxu0 0
    %782 = vmatprep.subr.bf16.mxu0 0
    %783 = vmatpush2.bf16.msra.mxu0 0
    %784 = vmatprep.subr.bf16.mxu0 0
    %785 = vmatpush2.bf16.msra.mxu0 0
    %786 = vmatprep.subr.bf16.mxu0 0
    %787 = vmatpush2.bf16.msra.mxu0 0
    %788 = vmatprep.mubr.bf16.mxu0 0
    %789 = vmatmul.mubr.bf16.gmra.mxu0 %v457
    %v790 = vpop.f32.mrf.mxu0
    %v791 = vadd.f32 0.0, %v790
    %v792 = vpop.f32.mrf.mxu0
    %v793 = vpop.f32.mrf.mxu0
    %v794 = vadd.f32 0.0, %v793
    %v795 = vpop.f32.mrf.mxu0
    %796 = vdwg.mxu0
    %v797 = vsub.f32 %v708, %v749
    %v798 = vsub.f32 %v711, %v752
    %v799 = vsub.f32 %v791, %v708
    %v800 = vsub.f32 %v794, %v711
    %v801 = vsub.f32 %v799, %v749
    %v802 = vsub.f32 %v800, %v752
    %s803 = scalar_lea.vmem [#allocation7], 8
    %v804 = vld [vmem:[%s803] sm:$0xf]
    %v805 = vld [vmem:[%s803 + $0x4] sm:$0xf]
    %v806 = vunpack.c.l.bf16 %v804
    %v807 = vunpack.c.l.bf16 %v805
    %s808 = scalar_lea.vmem [#allocation9], 32
    %v809 = vld [vmem:[%s808] sm:$0xff]
    %v810 = vld [vmem:[%s808 + $0x8] sm:$0xff]
    %v811 = vsub.f32 %v797, %v809
    %v812 = vsub.f32 %v798, %v810
    %v813 = vmul.f32 %v806, %v811
    %v814 = vmul.f32 %v807, %v812
    %v815 = vsub.f32 %v797, %v813
    %v816 = vsub.f32 %v798, %v814
    %s817 = scalar_lea.vmem [#allocation9], 48
    %v818 = vld [vmem:[%s817] sm:$0xff]
    %v819 = vld [vmem:[%s817 + $0x8] sm:$0xff]
    %v820 = vsub.f32 %v801, %v818
    %v821 = vsub.f32 %v802, %v819
    %v822 = vmul.f32 %v806, %v820
    %v823 = vmul.f32 %v807, %v821
    %v824 = vsub.f32 %v801, %v822
    %v825 = vsub.f32 %v802, %v823
    %v826 = vpack.c.bf16 %v816, %v815
    %v827 = vpack.c.bf16 %v825, %v824
    %828 = vmatprep.subr.bf16.mxu0 0
    %829 = vmatpush1.bf16.msra.mxu0 0
    %830 = vmatprep.subr.bf16.mxu0 0
    %831 = vmatpush1.bf16.msra.mxu0 0
    %832 = vmatprep.subr.bf16.mxu0 0
    %833 = vmatpush1.bf16.msra.mxu0 0
    %834 = vmatprep.subr.bf16.mxu0 0
    %835 = vmatpush1.bf16.msra.mxu0 0
    %836 = vmatprep.subr.bf16.mxu0 0
    %837 = vmatpush1.bf16.msra.mxu0 0
    %838 = vmatprep.subr.bf16.mxu0 0
    %839 = vmatpush1.bf16.msra.mxu0 0
    %840 = vmatprep.subr.bf16.mxu0 0
    %841 = vmatpush1.bf16.msra.mxu0 0
    %842 = vmatprep.subr.bf16.mxu0 0
    %843 = vmatpush1.bf16.msra.mxu0 %v826
    %844 = vmatprep.subr.bf16.mxu0 0
    %845 = vmatpush2.bf16.msra.mxu0 0
    %846 = vmatprep.subr.bf16.mxu0 0
    %847 = vmatpush2.bf16.msra.mxu0 0
    %848 = vmatprep.subr.bf16.mxu0 0
    %849 = vmatpush2.bf16.msra.mxu0 0
    %850 = vmatprep.subr.bf16.mxu0 0
    %851 = vmatpush2.bf16.msra.mxu0 0
    %852 = vmatprep.subr.bf16.mxu0 0
    %853 = vmatpush2.bf16.msra.mxu0 0
    %854 = vmatprep.subr.bf16.mxu0 0
    %855 = vmatpush2.bf16.msra.mxu0 0
    %856 = vmatprep.subr.bf16.mxu0 0
    %857 = vmatpush2.bf16.msra.mxu0 0
    %858 = vmatprep.subr.bf16.mxu0 0
    %859 = vmatpush2.bf16.msra.mxu0 0
    %860 = vmatprep.mubr.bf16.mxu0 0
    %861 = vmatmul.mubr.bf16.gmra.mxu0 %v358
    %v862 = vpop.f32.mrf.mxu0
    %v863 = vadd.f32 0.0, %v862
    %v864 = vpop.f32.mrf.mxu0
    %v865 = vpop.f32.mrf.mxu0
    %v866 = vadd.f32 0.0, %v865
    %v867 = vpop.f32.mrf.mxu0
    %868 = vdwg.mxu0
    %869 = vmatprep.subr.bf16.mxu0 0
    %870 = vmatpush1.bf16.msra.mxu0 0
    %871 = vmatprep.subr.bf16.mxu0 0
    %872 = vmatpush1.bf16.msra.mxu0 0
    %873 = vmatprep.subr.bf16.mxu0 0
    %874 = vmatpush1.bf16.msra.mxu0 0
    %875 = vmatprep.subr.bf16.mxu0 0
    %876 = vmatpush1.bf16.msra.mxu0 0
    %877 = vmatprep.subr.bf16.mxu0 0
    %878 = vmatpush1.bf16.msra.mxu0 0
    %879 = vmatprep.subr.bf16.mxu0 0
    %880 = vmatpush1.bf16.msra.mxu0 0
    %881 = vmatprep.subr.bf16.mxu0 0
    %882 = vmatpush1.bf16.msra.mxu0 0
    %883 = vmatprep.subr.bf16.mxu0 0
    %884 = vmatpush1.bf16.msra.mxu0 %v827
    %885 = vmatprep.subr.bf16.mxu0 0
    %886 = vmatpush2.bf16.msra.mxu0 0
    %887 = vmatprep.subr.bf16.mxu0 0
    %888 = vmatpush2.bf16.msra.mxu0 0
    %889 = vmatprep.subr.bf16.mxu0 0
    %890 = vmatpush2.bf16.msra.mxu0 0
    %891 = vmatprep.subr.bf16.mxu0 0
    %892 = vmatpush2.bf16.msra.mxu0 0
    %893 = vmatprep.subr.bf16.mxu0 0
    %894 = vmatpush2.bf16.msra.mxu0 0
    %895 = vmatprep.subr.bf16.mxu0 0
    %896 = vmatpush2.bf16.msra.mxu0 0
    %897 = vmatprep.subr.bf16.mxu0 0
    %898 = vmatpush2.bf16.msra.mxu0 0
    %899 = vmatprep.subr.bf16.mxu0 0
    %900 = vmatpush2.bf16.msra.mxu0 0
    %901 = vmatprep.mubr.bf16.mxu0 0
    %902 = vmatmul.mubr.bf16.gmra.mxu0 %v407
    %v903 = vpop.f32.mrf.mxu0
    %v904 = vadd.f32 0.0, %v903
    %v905 = vpop.f32.mrf.mxu0
    %v906 = vpop.f32.mrf.mxu0
    %v907 = vadd.f32 0.0, %v906
    %v908 = vpop.f32.mrf.mxu0
    %909 = vdwg.mxu0
    %v910 = vadd.bf16 %v826, %v827
    %911 = vmatprep.subr.bf16.mxu0 0
    %912 = vmatpush1.bf16.msra.mxu0 0
    %913 = vmatprep.subr.bf16.mxu0 0
    %914 = vmatpush1.bf16.msra.mxu0 0
    %915 = vmatprep.subr.bf16.mxu0 0
    %916 = vmatpush1.bf16.msra.mxu0 0
    %917 = vmatprep.subr.bf16.mxu0 0
    %918 = vmatpush1.bf16.msra.mxu0 0
    %919 = vmatprep.subr.bf16.mxu0 0
    %920 = vmatpush1.bf16.msra.mxu0 0
    %921 = vmatprep.subr.bf16.mxu0 0
    %922 = vmatpush1.bf16.msra.mxu0 0
    %923 = vmatprep.subr.bf16.mxu0 0
    %924 = vmatpush1.bf16.msra.mxu0 0
    %925 = vmatprep.subr.bf16.mxu0 0
    %926 = vmatpush1.bf16.msra.mxu0 %v910
    %927 = vmatprep.subr.bf16.mxu0 0
    %928 = vmatpush2.bf16.msra.mxu0 0
    %929 = vmatprep.subr.bf16.mxu0 0
    %930 = vmatpush2.bf16.msra.mxu0 0
    %931 = vmatprep.subr.bf16.mxu0 0
    %932 = vmatpush2.bf16.msra.mxu0 0
    %933 = vmatprep.subr.bf16.mxu0 0
    %934 = vmatpush2.bf16.msra.mxu0 0
    %935 = vmatprep.subr.bf16.mxu0 0
    %936 = vmatpush2.bf16.msra.mxu0 0
    %937 = vmatprep.subr.bf16.mxu0 0
    %938 = vmatpush2.bf16.msra.mxu0 0
    %939 = vmatprep.subr.bf16.mxu0 0
    %940 = vmatpush2.bf16.msra.mxu0 0
    %941 = vmatprep.subr.bf16.mxu0 0
    %942 = vmatpush2.bf16.msra.mxu0 0
    %943 = vmatprep.mubr.bf16.mxu0 0
    %944 = vmatmul.mubr.bf16.gmra.mxu0 %v618
    %v945 = vpop.f32.mrf.mxu0
    %v946 = vadd.f32 0.0, %v945
    %v947 = vpop.f32.mrf.mxu0
    %v948 = vpop.f32.mrf.mxu0
    %v949 = vadd.f32 0.0, %v948
    %v950 = vpop.f32.mrf.mxu0
    %951 = vdwg.mxu0
    %v952 = vadd.f32 %v863, %v904
    %v953 = vadd.f32 %v866, %v907
    %954 = vst.msk [vmem:[#allocation2 + $0x10] sm:$0xff] %vm136, %v952
    %955 = vst.msk [vmem:[#allocation2 + $0x18] sm:$0xff] %vm136, %v953
    %v956 = vsub.f32 %v946, %v863
    %v957 = vsub.f32 %v949, %v866
    %v958 = vadd.f32 %v956, %v904
    %v959 = vadd.f32 %v957, %v907
    %960 = vst.msk [vmem:[#allocation3 + $0x10] sm:$0xff] %vm136, %v958
    %961 = vst.msk [vmem:[#allocation3 + $0x18] sm:$0xff] %vm136, %v959
    %v962 = vld [vmem:[#allocation2] sm:$0xff]
    %v963 = vld [vmem:[#allocation2 + $0x8] sm:$0xff]
    %v964 = vld [vmem:[#allocation2 + $0x10] sm:$0xff]
    %v965 = vld [vmem:[#allocation2 + $0x18] sm:$0xff]
    %v966 = vpack.c.bf16 %v963, %v962
    %v967 = vpack.c.bf16 %v965, %v964
    %v968 = vld [vmem:[#allocation3] sm:$0xff]
    %v969 = vld [vmem:[#allocation3 + $0x8] sm:$0xff]
    %v970 = vld [vmem:[#allocation3 + $0x10] sm:$0xff]
    %v971 = vld [vmem:[#allocation3 + $0x18] sm:$0xff]
    %v972 = vpack.c.bf16 %v969, %v968
    %v973 = vpack.c.bf16 %v971, %v970
    %v975 = vsel %vm136, %v966, 0
    %v978 = vsel %vm136, %v967, 0
    %980 = vmatprep.subr.bf16.mxu0 0
    %981 = vmatpush1.bf16.msra.mxu0 0
    %982 = vmatprep.subr.bf16.mxu0 0
    %983 = vmatpush1.bf16.msra.mxu0 0
    %984 = vmatprep.subr.bf16.mxu0 0
    %985 = vmatpush1.bf16.msra.mxu0 0
    %986 = vmatprep.subr.bf16.mxu0 0
    %987 = vmatpush1.bf16.msra.mxu0 0
    %988 = vmatprep.subr.bf16.mxu0 0
    %989 = vmatpush1.bf16.msra.mxu0 0
    %990 = vmatprep.subr.bf16.mxu0 0
    %991 = vmatpush1.bf16.msra.mxu0 0
    %992 = vmatprep.subr.bf16.mxu0 0
    %993 = vmatpush1.bf16.msra.mxu0 0
    %994 = vmatprep.subr.bf16.mxu0 0
    %995 = vmatpush1.bf16.msra.mxu0 %v134
    %996 = vmatprep.subr.bf16.mxu0 0
    %997 = vmatpush2.bf16.msra.mxu0 0
    %998 = vmatprep.subr.bf16.mxu0 0
    %999 = vmatpush2.bf16.msra.mxu0 0
    %1000 = vmatprep.subr.bf16.mxu0 0
    %1001 = vmatpush2.bf16.msra.mxu0 0
    %1002 = vmatprep.subr.bf16.mxu0 0
    %1003 = vmatpush2.bf16.msra.mxu0 0
    %1004 = vmatprep.subr.bf16.mxu0 0
    %1005 = vmatpush2.bf16.msra.mxu0 0
    %1006 = vmatprep.subr.bf16.mxu0 0
    %1007 = vmatpush2.bf16.msra.mxu0 0
    %1008 = vmatprep.subr.bf16.mxu0 0
    %1009 = vmatpush2.bf16.msra.mxu0 0
    %1010 = vmatprep.subr.bf16.mxu0 0
    %1011 = vmatpush2.bf16.msra.mxu0 0
    %1012 = vmatprep.mubr.bf16.mxu0 0
    %1013 = vmatmul.mubr.bf16.gmra.mxu0 %v975
    %v1014 = vpop.f32.mrf.mxu0
    %v1015 = vadd.f32 0.0, %v1014
    %v1016 = vpop.f32.mrf.mxu0
    %v1017 = vpop.f32.mrf.mxu0
    %v1018 = vadd.f32 0.0, %v1017
    %v1019 = vpop.f32.mrf.mxu0
    %1020 = vmatprep.mubr.bf16.mxu0 0
    %1021 = vmatmul.mubr.bf16.gmra.mxu0 %v978
    %v1022 = vpop.f32.mrf.mxu0
    %v1023 = vadd.f32 0.0, %v1022
    %v1024 = vpop.f32.mrf.mxu0
    %v1025 = vpop.f32.mrf.mxu0
    %v1026 = vadd.f32 0.0, %v1025
    %v1027 = vpop.f32.mrf.mxu0
    %1028 = vdwg.mxu0
    %v1030 = vsel %vm136, %v972, 0
    %v1033 = vsel %vm136, %v973, 0
    %1035 = vmatprep.subr.bf16.mxu0 0
    %1036 = vmatpush1.bf16.msra.mxu0 0
    %1037 = vmatprep.subr.bf16.mxu0 0
    %1038 = vmatpush1.bf16.msra.mxu0 0
    %1039 = vmatprep.subr.bf16.mxu0 0
    %1040 = vmatpush1.bf16.msra.mxu0 0
    %1041 = vmatprep.subr.bf16.mxu0 0
    %1042 = vmatpush1.bf16.msra.mxu0 0
    %1043 = vmatprep.subr.bf16.mxu0 0
    %1044 = vmatpush1.bf16.msra.mxu0 0
    %1045 = vmatprep.subr.bf16.mxu0 0
    %1046 = vmatpush1.bf16.msra.mxu0 0
    %1047 = vmatprep.subr.bf16.mxu0 0
    %1048 = vmatpush1.bf16.msra.mxu0 0
    %1049 = vmatprep.subr.bf16.mxu0 0
    %1050 = vmatpush1.bf16.msra.mxu0 %v206
    %1051 = vmatprep.subr.bf16.mxu0 0
    %1052 = vmatpush2.bf16.msra.mxu0 0
    %1053 = vmatprep.subr.bf16.mxu0 0
    %1054 = vmatpush2.bf16.msra.mxu0 0
    %1055 = vmatprep.subr.bf16.mxu0 0
    %1056 = vmatpush2.bf16.msra.mxu0 0
    %1057 = vmatprep.subr.bf16.mxu0 0
    %1058 = vmatpush2.bf16.msra.mxu0 0
    %1059 = vmatprep.subr.bf16.mxu0 0
    %1060 = vmatpush2.bf16.msra.mxu0 0
    %1061 = vmatprep.subr.bf16.mxu0 0
    %1062 = vmatpush2.bf16.msra.mxu0 0
    %1063 = vmatprep.subr.bf16.mxu0 0
    %1064 = vmatpush2.bf16.msra.mxu0 0
    %1065 = vmatprep.subr.bf16.mxu0 0
    %1066 = vmatpush2.bf16.msra.mxu0 0
    %1067 = vmatprep.mubr.bf16.mxu0 0
    %1068 = vmatmul.mubr.bf16.gmra.mxu0 %v1030
    %v1069 = vpop.f32.mrf.mxu0
    %v1070 = vadd.f32 0.0, %v1069
    %v1071 = vpop.f32.mrf.mxu0
    %v1072 = vpop.f32.mrf.mxu0
    %v1073 = vadd.f32 0.0, %v1072
    %v1074 = vpop.f32.mrf.mxu0
    %1075 = vmatprep.mubr.bf16.mxu0 0
    %1076 = vmatmul.mubr.bf16.gmra.mxu0 %v1033
    %v1077 = vpop.f32.mrf.mxu0
    %v1078 = vadd.f32 0.0, %v1077
    %v1079 = vpop.f32.mrf.mxu0
    %v1080 = vpop.f32.mrf.mxu0
    %v1081 = vadd.f32 0.0, %v1080
    %v1082 = vpop.f32.mrf.mxu0
    %1083 = vdwg.mxu0
    %v1084 = vadd.bf16 %v966, %v972
    %v1085 = vadd.bf16 %v967, %v973
    %v1088 = vunpack.c.l.b16 %v110
    %v1089 = vunpack.c.l.b16 %v111
    %v1090 = vpack.c.b16 %v1089, %v1088
    %v1093 = vsel %vm136, %v1084, 0
    %v1096 = vsel %vm136, %v1085, 0
    %1098 = vmatprep.subr.bf16.mxu0 0
    %1099 = vmatpush1.bf16.msra.mxu0 0
    %1100 = vmatprep.subr.bf16.mxu0 0
    %1101 = vmatpush1.bf16.msra.mxu0 0
    %1102 = vmatprep.subr.bf16.mxu0 0
    %1103 = vmatpush1.bf16.msra.mxu0 0
    %1104 = vmatprep.subr.bf16.mxu0 0
    %1105 = vmatpush1.bf16.msra.mxu0 0
    %1106 = vmatprep.subr.bf16.mxu0 0
    %1107 = vmatpush1.bf16.msra.mxu0 0
    %1108 = vmatprep.subr.bf16.mxu0 0
    %1109 = vmatpush1.bf16.msra.mxu0 0
    %1110 = vmatprep.subr.bf16.mxu0 0
    %1111 = vmatpush1.bf16.msra.mxu0 0
    %1112 = vmatprep.subr.bf16.mxu0 0
    %1113 = vmatpush1.bf16.msra.mxu0 %v1090
    %1114 = vmatprep.subr.bf16.mxu0 0
    %1115 = vmatpush2.bf16.msra.mxu0 0
    %1116 = vmatprep.subr.bf16.mxu0 0
    %1117 = vmatpush2.bf16.msra.mxu0 0
    %1118 = vmatprep.subr.bf16.mxu0 0
    %1119 = vmatpush2.bf16.msra.mxu0 0
    %1120 = vmatprep.subr.bf16.mxu0 0
    %1121 = vmatpush2.bf16.msra.mxu0 0
    %1122 = vmatprep.subr.bf16.mxu0 0
    %1123 = vmatpush2.bf16.msra.mxu0 0
    %1124 = vmatprep.subr.bf16.mxu0 0
    %1125 = vmatpush2.bf16.msra.mxu0 0
    %1126 = vmatprep.subr.bf16.mxu0 0
    %1127 = vmatpush2.bf16.msra.mxu0 0
    %1128 = vmatprep.subr.bf16.mxu0 0
    %1129 = vmatpush2.bf16.msra.mxu0 0
    %1130 = vmatprep.mubr.bf16.mxu0 0
    %1131 = vmatmul.mubr.bf16.gmra.mxu0 %v1093
    %v1132 = vpop.f32.mrf.mxu0
    %v1133 = vadd.f32 0.0, %v1132
    %v1134 = vpop.f32.mrf.mxu0
    %v1135 = vpop.f32.mrf.mxu0
    %v1136 = vadd.f32 0.0, %v1135
    %v1137 = vpop.f32.mrf.mxu0
    %1138 = vmatprep.mubr.bf16.mxu0 0
    %1139 = vmatmul.mubr.bf16.gmra.mxu0 %v1096
    %v1140 = vpop.f32.mrf.mxu0
    %v1141 = vadd.f32 0.0, %v1140
    %v1142 = vpop.f32.mrf.mxu0
    %v1143 = vpop.f32.mrf.mxu0
    %v1144 = vadd.f32 0.0, %v1143
    %v1145 = vpop.f32.mrf.mxu0
    %1146 = vdwg.mxu0
    %v1147 = vadd.f32 %v1015, %v1070
    %v1148 = vadd.f32 %v1018, %v1073
    %v1149 = vadd.f32 %v1023, %v1078
    %v1150 = vadd.f32 %v1026, %v1081
    %v1151 = vmul.f32 %v1147, 0.00390625
    %v1152 = vmul.f32 %v1148, 0.00390625
    %v1153 = vmul.f32 %v1149, 0.00390625
    %v1154 = vmul.f32 %v1150, 0.00390625
    %v1155 = vsub.f32 %v1133, %v1015
    %v1156 = vsub.f32 %v1136, %v1018
    %v1157 = vsub.f32 %v1141, %v1023
    %v1158 = vsub.f32 %v1144, %v1026
    %v1159 = vadd.f32 %v1155, %v1070
    %v1160 = vadd.f32 %v1156, %v1073
    %v1161 = vadd.f32 %v1157, %v1078
    %v1162 = vadd.f32 %v1158, %v1081
    %v1163 = vmul.f32 %v1159, 0.00390625
    %v1164 = vmul.f32 %v1160, 0.00390625
    %v1165 = vmul.f32 %v1161, 0.00390625
    %v1166 = vmul.f32 %v1162, 0.00390625
    %1167 = vst.msk [vmem:[#allocation13] sm:$0xff] %vm136, %v1151
    %1168 = vst.msk [vmem:[#allocation13 + $0x8] sm:$0xff] %vm136, %v1152
    %s1169 = scalar_lea.vmem [#allocation13], 16
    %1170 = vst.msk [vmem:[%s1169] sm:$0xff] %vm136, %v1163
    %1171 = vst.msk [vmem:[%s1169 + $0x8] sm:$0xff] %vm136, %v1164
    %s1172 = scalar_lea.vmem [#allocation13], 32
    %1173 = vst.msk [vmem:[%s1172] sm:$0xff] %vm136, %v1153
    %1174 = vst.msk [vmem:[%s1172 + $0x8] sm:$0xff] %vm136, %v1154
    %s1175 = scalar_lea.vmem [#allocation13], 48
    %1176 = vst.msk [vmem:[%s1175] sm:$0xff] %vm136, %v1165
    %1177 = vst.msk [vmem:[%s1175 + $0x8] sm:$0xff] %vm136, %v1166
    // Predicated region
    $region42: #{tpu_custom_call.1} parent=1 // pred_check
      _
    $region43: #{tpu_custom_call.1} parent=1 // pred_check_branch
      %1179 = sbr.rel (0) target = $region45
    $region44: #{tpu_custom_call.1} parent=1 // pred_region
      %s1181 = ssub.s32 1024, 1024
      %1182 = vsyncadd [#allocation6], %s1181
      %s1183 = sshll.u32 [#allocation13], 4
      %s1184 = int_to_ptr.vmem [resolvable:$true] %s1183
      %1189 = dma.vmem_to_hbm [thread:$0]  %s1184, 1024, %s5, [#allocation6], 128, 128, 8
    $region45: #{tpu_custom_call.1} parent=1 // pred_fallthru
      _
    // Predicated region
    $region46: #{tpu_custom_call.1} parent=1 // pred_check
      _
    $region47: #{tpu_custom_call.1} parent=1 // pred_check_branch
      %1191 = sbr.rel (0) target = $region49
    $region48: #{tpu_custom_call.1} parent=1 // pred_region
      %1192 = dma.done [#allocation6], 1024
    $region49: #{tpu_custom_call.1} parent=1 // pred_fallthru
      _
    %1193 = vsyncpa [#allocation5], 1
    %1194 = vsyncpa [#allocation8], 1
    %1195 = vsyncpa [#allocation11], 1
    %1196 = vsyncpa [#allocation6], 1

// kernel: tpu_custom_call.1
$region0: #{tpu_custom_call.1}
  #allocation0 [shape = 'u32[]', space=smem, size = 0x4, offset = 0x4, fixed_abs, tag = 'smem constant byte address 0x4 - core index']
  #allocation1 [shape = 'u32[144,128]{1,0:T(1,128)}', space=vmem, size = 0x12000, scoped, tag = 'internal scratch']
  #allocation2 [shape = 'f32[32,16]{1,0:T(8,128)}', space=vmem, size = 0x4000, scoped, tag = 'scratch operand']
  #allocation3 [shape = 'f32[32,16]{1,0:T(8,128)}', space=vmem, size = 0x4000, scoped, tag = 'scratch operand']
  %s0 = inlined_call_operand.hbm [shape: bf16[2,2,16,16], index: 0, kind: input, shape index: {}]
  %s1 = inlined_call_operand.hbm [shape: bf16[2,1,16,16], index: 1, kind: input, shape index: {}]
  %s2 = inlined_call_operand.hbm [shape: f32[2,2,16,16], index: 2, kind: input, shape index: {}]
  %s3 = inlined_call_operand.hbm [shape: bf16[4,16,16], index: 3, kind: input, shape index: {}]
  %s4 = inlined_call_operand.hbm [shape: bf16[4,16,16], index: 4, kind: input, shape index: {}]
  %s5 = inlined_call_operand.hbm [shape: f32[2,2,16,16], index: 5, kind: output, shape index: {}]
  %s6 = sld [smem:[#allocation0]]
  $region50: #{tpu_custom_call.1} parent=0
    _
  %s8 = ssub.s32 1, %s6
  %s9 = scalar_select 0, %s8, %s6
  $region1: #{tpu_custom_call.1} parent=0
    #allocation4 [shape = 'u8[16384]{0}', space=vmem, size = 0x4000, scoped, tag = 'input window, operand 0, single buffered']
    #allocation5 [shape = 's32[1]{0}', space=sflag, size = 0x4, scoped, tag = 'scoped memory for tpu_custom_call.1']
    #allocation6 [shape = 's32[1]{0}', space=sflag, size = 0x4, scoped, tag = 'scoped memory for tpu_custom_call.1']
    #allocation7 [shape = 'u8[8192]{0}', space=vmem, size = 0x2000, scoped, tag = 'input window, operand 1, single buffered']
    #allocation8 [shape = 's32[1]{0}', space=sflag, size = 0x4, scoped, tag = 'scoped memory for tpu_custom_call.1']
    #allocation9 [shape = 'u8[32768]{0}', space=vmem, size = 0x8000, scoped, tag = 'input window, operand 2, single buffered']
    #allocation10 [shape = 'u8[16384]{0}', space=vmem, size = 0x4000, scoped, tag = 'input window, operand 3, single buffered']
    #allocation11 [shape = 's32[1]{0}', space=sflag, size = 0x4, scoped, tag = 'scoped memory for tpu_custom_call.1']
    #allocation12 [shape = 'u8[16384]{0}', space=vmem, size = 0x4000, scoped, tag = 'input window, operand 4, single buffered']
    #allocation13 [shape = 'u8[32768]{0}', space=vmem, size = 0x8000, scoped, tag = 'output window, operand 0, single buffered']
    %10 = vsyncpa [#allocation5], 0
    %11 = vsyncpa [#allocation8], 0
    %12 = vsyncpa [#allocation11], 0
    %13 = vsyncpa [#allocation6], 0
    // Predicated region
    $region2: #{tpu_custom_call.1} parent=1 // pred_check
      _
    $region3: #{tpu_custom_call.1} parent=1 // pred_check_branch
      %15 = sbr.rel (0) target = $region5
    $region4: #{tpu_custom_call.1} parent=1 // pred_region
      %s17 = ssub.s32 512, 512
      %18 = vsyncadd [#allocation5], %s17
      %s19 = sshll.u32 [#allocation4], 4
      %s20 = int_to_ptr.vmem [resolvable:$true] %s19
      %25 = dma.hbm_to_vmem [thread:$0]  %s0, 512, %s20, [#allocation5], 64, 64, 4
    $region5: #{tpu_custom_call.1} parent=1 // pred_fallthru
      _
    // Predicated region
    $region6: #{tpu_custom_call.1} parent=1 // pred_check
      _
    $region7: #{tpu_custom_call.1} parent=1 // pred_check_branch
      %27 = sbr.rel (0) target = $region9
    $region8: #{tpu_custom_call.1} parent=1 // pred_region
      %s29 = ssub.s32 256, 256
      %30 = vsyncadd [#allocation8], %s29
      %s31 = sshll.u32 [#allocation7], 4
      %s32 = int_to_ptr.vmem [resolvable:$true] %s31
      %37 = dma.hbm_to_vmem [thread:$0]  %s1, 256, %s32, [#allocation8], 64, 64, 4
    $region9: #{tpu_custom_call.1} parent=1 // pred_fallthru
      _
    // Predicated region
    $region10: #{tpu_custom_call.1} parent=1 // pred_check
      _
    $region11: #{tpu_custom_call.1} parent=1 // pred_check_branch
      %39 = sbr.rel (0) target = $region13
    $region12: #{tpu_custom_call.1} parent=1 // pred_region
      %s41 = ssub.s32 1024, 1024
      %42 = vsyncadd [#allocation8], %s41
      %s43 = sshll.u32 [#allocation9], 4
      %s44 = int_to_ptr.vmem [resolvable:$true] %s43
      %49 = dma.hbm_to_vmem [thread:$0]  %s2, 1024, %s44, [#allocation8], 128, 128, 8
    $region13: #{tpu_custom_call.1} parent=1 // pred_fallthru
      _
    // Predicated region
    $region14: #{tpu_custom_call.1} parent=1 // pred_check
      _
    $region15: #{tpu_custom_call.1} parent=1 // pred_check_branch
      %51 = sbr.rel (0) target = $region17
    $region16: #{tpu_custom_call.1} parent=1 // pred_region
      %s53 = ssub.s32 512, 512
      %54 = vsyncadd [#allocation11], %s53
      %s55 = sshll.u32 [#allocation10], 4
      %s56 = int_to_ptr.vmem [resolvable:$true] %s55
      %61 = dma.hbm_to_vmem [thread:$0]  %s3, 512, %s56, [#allocation11], 64, 64, 4
    $region17: #{tpu_custom_call.1} parent=1 // pred_fallthru
      _
    // Predicated region
    $region18: #{tpu_custom_call.1} parent=1 // pred_check
      _
    $region19: #{tpu_custom_call.1} parent=1 // pred_check_branch
      %63 = sbr.rel (0) target = $region21
    $region20: #{tpu_custom_call.1} parent=1 // pred_region
      %s65 = ssub.s32 512, 512
      %66 = vsyncadd [#allocation11], %s65
      %s67 = sshll.u32 [#allocation12], 4
      %s68 = int_to_ptr.vmem [resolvable:$true] %s67
      %73 = dma.hbm_to_vmem [thread:$0]  %s4, 512, %s68, [#allocation11], 64, 64, 4
    $region21: #{tpu_custom_call.1} parent=1 // pred_fallthru
      _
    // Predicated region
    $region22: #{tpu_custom_call.1} parent=1 // pred_check
      _
    $region23: #{tpu_custom_call.1} parent=1 // pred_check_branch
      %75 = sbr.rel (0) target = $region25
    $region24: #{tpu_custom_call.1} parent=1 // pred_region
      %76 = dma.done [#allocation5], 512
    $region25: #{tpu_custom_call.1} parent=1 // pred_fallthru
      _
    // Predicated region
    $region26: #{tpu_custom_call.1} parent=1 // pred_check
      _
    $region27: #{tpu_custom_call.1} parent=1 // pred_check_branch
      %78 = sbr.rel (0) target = $region29
    $region28: #{tpu_custom_call.1} parent=1 // pred_region
      %79 = dma.done [#allocation8], 256
    $region29: #{tpu_custom_call.1} parent=1 // pred_fallthru
      _
    // Predicated region
    $region30: #{tpu_custom_call.1} parent=1 // pred_check
      _
    $region31: #{tpu_custom_call.1} parent=1 // pred_check_branch
      %81 = sbr.rel (0) target = $region33
    $region32: #{tpu_custom_call.1} parent=1 // pred_region
      %82 = dma.done [#allocation8], 1024
    $region33: #{tpu_custom_call.1} parent=1 // pred_fallthru
      _
    // Predicated region
    $region34: #{tpu_custom_call.1} parent=1 // pred_check
      _
    $region35: #{tpu_custom_call.1} parent=1 // pred_check_branch
      %84 = sbr.rel (0) target = $region37
    $region36: #{tpu_custom_call.1} parent=1 // pred_region
      %85 = dma.done [#allocation11], 512
    $region37: #{tpu_custom_call.1} parent=1 // pred_fallthru
      _
    // Predicated region
    $region38: #{tpu_custom_call.1} parent=1 // pred_check
      _
    $region39: #{tpu_custom_call.1} parent=1 // pred_check_branch
      %87 = sbr.rel (0) target = $region41
    $region40: #{tpu_custom_call.1} parent=1 // pred_region
      %88 = dma.done [#allocation11], 512
    $region41: #{tpu_custom_call.1} parent=1 // pred_fallthru
      _
    %v90 = vld [vmem:[#allocation10] sm:$0xf]
    %v91 = vld [vmem:[#allocation10 + $0x4] sm:$0xf]
    %s92 = scalar_lea.vmem [#allocation10], 8
    %v93 = vld [vmem:[%s92] sm:$0xf]
    %v94 = vld [vmem:[%s92 + $0x4] sm:$0xf]
    %s95 = scalar_lea.vmem [#allocation10], 16
    %v96 = vld [vmem:[%s95] sm:$0xf]
    %v97 = vld [vmem:[%s95 + $0x4] sm:$0xf]
    %s98 = scalar_lea.vmem [#allocation10], 24
    %v99 = vld [vmem:[%s98] sm:$0xf]
    %v100 = vld [vmem:[%s98 + $0x4] sm:$0xf]
    %v101 = vld [vmem:[#allocation12] sm:$0xf]
    %v102 = vld [vmem:[#allocation12 + $0x4] sm:$0xf]
    %s103 = scalar_lea.vmem [#allocation12], 8
    %v104 = vld [vmem:[%s103] sm:$0xf]
    %v105 = vld [vmem:[%s103 + $0x4] sm:$0xf]
    %s106 = scalar_lea.vmem [#allocation12], 16
    %v107 = vld [vmem:[%s106] sm:$0xf]
    %v108 = vld [vmem:[%s106 + $0x4] sm:$0xf]
    %s109 = scalar_lea.vmem [#allocation12], 24
    %v110 = vld [vmem:[%s109] sm:$0xf]
    %v111 = vld [vmem:[%s109 + $0x4] sm:$0xf]
    %v112 = vld [vmem:[#allocation4] sm:$0xf]
    %v113 = vld [vmem:[#allocation4 + $0x4] sm:$0xf]
    %v114 = vld [vmem:[#allocation4 + $0x8] sm:$0xf]
    %v115 = vld [vmem:[#allocation4 + $0xc] sm:$0xf]
    %v116 = vld [vmem:[#allocation4 + $0x10] sm:$0xf]
    %v117 = vld [vmem:[#allocation4 + $0x14] sm:$0xf]
    %v118 = vld [vmem:[#allocation4 + $0x18] sm:$0xf]
    %v119 = vld [vmem:[#allocation4 + $0x1c] sm:$0xf]
    %v124 = vunpack.c.l.b16 %v112
    %v125 = vunpack.c.l.b16 %v113
    %v126 = vunpack.c.l.b16 %v116
    %v127 = vunpack.c.l.b16 %v117
    %v128 = vpack.c.b16 %v125, %v124
    %v129 = vpack.c.b16 %v127, %v126
    %v132 = vunpack.c.l.b16 %v101
    %v133 = vunpack.c.l.b16 %v102
    %v134 = vpack.c.b16 %v133, %v132
    %vm136 = vcmask 130048
    %v138 = vsel %vm136, %v128, 0
    %v141 = vsel %vm136, %v129, 0
    %143 = vmatprep.subr.bf16.mxu0 0
    %144 = vmatpush1.bf16.msra.mxu0 0
    %145 = vmatprep.subr.bf16.mxu0 0
    %146 = vmatpush1.bf16.msra.mxu0 0
    %147 = vmatprep.subr.bf16.mxu0 0
    %148 = vmatpush1.bf16.msra.mxu0 0
    %149 = vmatprep.subr.bf16.mxu0 0
    %150 = vmatpush1.bf16.msra.mxu0 0
    %151 = vmatprep.subr.bf16.mxu0 0
    %152 = vmatpush1.bf16.msra.mxu0 0
    %153 = vmatprep.subr.bf16.mxu0 0
    %154 = vmatpush1.bf16.msra.mxu0 0
    %155 = vmatprep.subr.bf16.mxu0 0
    %156 = vmatpush1.bf16.msra.mxu0 0
    %157 = vmatprep.subr.bf16.mxu0 0
    %158 = vmatpush1.bf16.msra.mxu0 %v134
    %159 = vmatprep.subr.bf16.mxu0 0
    %160 = vmatpush2.bf16.msra.mxu0 0
    %161 = vmatprep.subr.bf16.mxu0 0
    %162 = vmatpush2.bf16.msra.mxu0 0
    %163 = vmatprep.subr.bf16.mxu0 0
    %164 = vmatpush2.bf16.msra.mxu0 0
    %165 = vmatprep.subr.bf16.mxu0 0
    %166 = vmatpush2.bf16.msra.mxu0 0
    %167 = vmatprep.subr.bf16.mxu0 0
    %168 = vmatpush2.bf16.msra.mxu0 0
    %169 = vmatprep.subr.bf16.mxu0 0
    %170 = vmatpush2.bf16.msra.mxu0 0
    %171 = vmatprep.subr.bf16.mxu0 0
    %172 = vmatpush2.bf16.msra.mxu0 0
    %173 = vmatprep.subr.bf16.mxu0 0
    %174 = vmatpush2.bf16.msra.mxu0 0
    %175 = vmatprep.mubr.bf16.mxu0 0
    %176 = vmatmul.mubr.bf16.gmra.mxu0 %v138
    %v177 = vpop.f32.mrf.mxu0
    %v178 = vadd.f32 0.0, %v177
    %v179 = vpop.f32.mrf.mxu0
    %v180 = vpop.f32.mrf.mxu0
    %v181 = vadd.f32 0.0, %v180
    %v182 = vpop.f32.mrf.mxu0
    %183 = vmatprep.mubr.bf16.mxu0 0
    %184 = vmatmul.mubr.bf16.gmra.mxu0 %v141
    %v185 = vpop.f32.mrf.mxu0
    %v186 = vadd.f32 0.0, %v185
    %v187 = vpop.f32.mrf.mxu0
    %v188 = vpop.f32.mrf.mxu0
    %v189 = vadd.f32 0.0, %v188
    %v190 = vpop.f32.mrf.mxu0
    %191 = vdwg.mxu0
    %v196 = vunpack.c.l.b16 %v114
    %v197 = vunpack.c.l.b16 %v115
    %v198 = vunpack.c.l.b16 %v118
    %v199 = vunpack.c.l.b16 %v119
    %v200 = vpack.c.b16 %v197, %v196
    %v201 = vpack.c.b16 %v199, %v198
    %v204 = vunpack.c.l.b16 %v104
    %v205 = vunpack.c.l.b16 %v105
    %v206 = vpack.c.b16 %v205, %v204
    %v209 = vsel %vm136, %v200, 0
    %v212 = vsel %vm136, %v201, 0
    %214 = vmatprep.subr.bf16.mxu0 0
    %215 = vmatpush1.bf16.msra.mxu0 0
    %216 = vmatprep.subr.bf16.mxu0 0
    %217 = vmatpush1.bf16.msra.mxu0 0
    %218 = vmatprep.subr.bf16.mxu0 0
    %219 = vmatpush1.bf16.msra.mxu0 0
    %220 = vmatprep.subr.bf16.mxu0 0
    %221 = vmatpush1.bf16.msra.mxu0 0
    %222 = vmatprep.subr.bf16.mxu0 0
    %223 = vmatpush1.bf16.msra.mxu0 0
    %224 = vmatprep.subr.bf16.mxu0 0
    %225 = vmatpush1.bf16.msra.mxu0 0
    %226 = vmatprep.subr.bf16.mxu0 0
    %227 = vmatpush1.bf16.msra.mxu0 0
    %228 = vmatprep.subr.bf16.mxu0 0
    %229 = vmatpush1.bf16.msra.mxu0 %v206
    %230 = vmatprep.subr.bf16.mxu0 0
    %231 = vmatpush2.bf16.msra.mxu0 0
    %232 = vmatprep.subr.bf16.mxu0 0
    %233 = vmatpush2.bf16.msra.mxu0 0
    %234 = vmatprep.subr.bf16.mxu0 0
    %235 = vmatpush2.bf16.msra.mxu0 0
    %236 = vmatprep.subr.bf16.mxu0 0
    %237 = vmatpush2.bf16.msra.mxu0 0
    %238 = vmatprep.subr.bf16.mxu0 0
    %239 = vmatpush2.bf16.msra.mxu0 0
    %240 = vmatprep.subr.bf16.mxu0 0
    %241 = vmatpush2.bf16.msra.mxu0 0
    %242 = vmatprep.subr.bf16.mxu0 0
    %243 = vmatpush2.bf16.msra.mxu0 0
    %244 = vmatprep.subr.bf16.mxu0 0
    %245 = vmatpush2.bf16.msra.mxu0 0
    %246 = vmatprep.mubr.bf16.mxu0 0
    %247 = vmatmul.mubr.bf16.gmra.mxu0 %v209
    %v248 = vpop.f32.mrf.mxu0
    %v249 = vadd.f32 0.0, %v248
    %v250 = vpop.f32.mrf.mxu0
    %v251 = vpop.f32.mrf.mxu0
    %v252 = vadd.f32 0.0, %v251
    %v253 = vpop.f32.mrf.mxu0
    %254 = vmatprep.mubr.bf16.mxu0 0
    %255 = vmatmul.mubr.bf16.gmra.mxu0 %v212
    %v256 = vpop.f32.mrf.mxu0
    %v257 = vadd.f32 0.0, %v256
    %v258 = vpop.f32.mrf.mxu0
    %v259 = vpop.f32.mrf.mxu0
    %v260 = vadd.f32 0.0, %v259
    %v261 = vpop.f32.mrf.mxu0
    %262 = vdwg.mxu0
    %v263 = vadd.bf16 %v112, %v114
    %v264 = vadd.bf16 %v113, %v115
    %v265 = vadd.bf16 %v116, %v118
    %v266 = vadd.bf16 %v117, %v119
    %v271 = vunpack.c.l.b16 %v263
    %v272 = vunpack.c.l.b16 %v264
    %v273 = vunpack.c.l.b16 %v265
    %v274 = vunpack.c.l.b16 %v266
    %v275 = vpack.c.b16 %v272, %v271
    %v276 = vpack.c.b16 %v274, %v273
    %v279 = vunpack.c.l.b16 %v107
    %v280 = vunpack.c.l.b16 %v108
    %v281 = vpack.c.b16 %v280, %v279
    %v284 = vsel %vm136, %v275, 0
    %v287 = vsel %vm136, %v276, 0
    %289 = vmatprep.subr.bf16.mxu0 0
    %290 = vmatpush1.bf16.msra.mxu0 0
    %291 = vmatprep.subr.bf16.mxu0 0
    %292 = vmatpush1.bf16.msra.mxu0 0
    %293 = vmatprep.subr.bf16.mxu0 0
    %294 = vmatpush1.bf16.msra.mxu0 0
    %295 = vmatprep.subr.bf16.mxu0 0
    %296 = vmatpush1.bf16.msra.mxu0 0
    %297 = vmatprep.subr.bf16.mxu0 0
    %298 = vmatpush1.bf16.msra.mxu0 0
    %299 = vmatprep.subr.bf16.mxu0 0
    %300 = vmatpush1.bf16.msra.mxu0 0
    %301 = vmatprep.subr.bf16.mxu0 0
    %302 = vmatpush1.bf16.msra.mxu0 0
    %303 = vmatprep.subr.bf16.mxu0 0
    %304 = vmatpush1.bf16.msra.mxu0 %v281
    %305 = vmatprep.subr.bf16.mxu0 0
    %306 = vmatpush2.bf16.msra.mxu0 0
    %307 = vmatprep.subr.bf16.mxu0 0
    %308 = vmatpush2.bf16.msra.mxu0 0
    %309 = vmatprep.subr.bf16.mxu0 0
    %310 = vmatpush2.bf16.msra.mxu0 0
    %311 = vmatprep.subr.bf16.mxu0 0
    %312 = vmatpush2.bf16.msra.mxu0 0
    %313 = vmatprep.subr.bf16.mxu0 0
    %314 = vmatpush2.bf16.msra.mxu0 0
    %315 = vmatprep.subr.bf16.mxu0 0
    %316 = vmatpush2.bf16.msra.mxu0 0
    %317 = vmatprep.subr.bf16.mxu0 0
    %318 = vmatpush2.bf16.msra.mxu0 0
    %319 = vmatprep.subr.bf16.mxu0 0
    %320 = vmatpush2.bf16.msra.mxu0 0
    %321 = vmatprep.mubr.bf16.mxu0 0
    %322 = vmatmul.mubr.bf16.gmra.mxu0 %v284
    %v323 = vpop.f32.mrf.mxu0
    %v324 = vadd.f32 0.0, %v323
    %v325 = vpop.f32.mrf.mxu0
    %v326 = vpop.f32.mrf.mxu0
    %v327 = vadd.f32 0.0, %v326
    %v328 = vpop.f32.mrf.mxu0
    %329 = vmatprep.mubr.bf16.mxu0 0
    %330 = vmatmul.mubr.bf16.gmra.mxu0 %v287
    %v331 = vpop.f32.mrf.mxu0
    %v332 = vadd.f32 0.0, %v331
    %v333 = vpop.f32.mrf.mxu0
    %v334 = vpop.f32.mrf.mxu0
    %v335 = vadd.f32 0.0, %v334
    %v336 = vpop.f32.mrf.mxu0
    %337 = vdwg.mxu0
    %v338 = vsub.f32 %v178, %v249
    %v339 = vsub.f32 %v181, %v252
    %v340 = vsub.f32 %v186, %v257
    %v341 = vsub.f32 %v189, %v260
    %v342 = vsub.f32 %v324, %v178
    %v343 = vsub.f32 %v327, %v181
    %v344 = vsub.f32 %v332, %v186
    %v345 = vsub.f32 %v335, %v189
    %v346 = vsub.f32 %v342, %v249
    %v347 = vsub.f32 %v343, %v252
    %v348 = vsub.f32 %v344, %v257
    %v349 = vsub.f32 %v345, %v260
    %v350 = vpack.c.bf16 %v339, %v338
    %v351 = vpack.c.bf16 %v347, %v346
    %v354 = vunpack.c.l.b16 %v90
    %v355 = vunpack.c.l.b16 %v91
    %v356 = vpack.c.b16 %v355, %v354
    %v358 = vsel %vm136, %v356, 0
    %360 = vmatprep.subr.bf16.mxu0 0
    %361 = vmatpush1.bf16.msra.mxu0 0
    %362 = vmatprep.subr.bf16.mxu0 0
    %363 = vmatpush1.bf16.msra.mxu0 0
    %364 = vmatprep.subr.bf16.mxu0 0
    %365 = vmatpush1.bf16.msra.mxu0 0
    %366 = vmatprep.subr.bf16.mxu0 0
    %367 = vmatpush1.bf16.msra.mxu0 0
    %368 = vmatprep.subr.bf16.mxu0 0
    %369 = vmatpush1.bf16.msra.mxu0 0
    %370 = vmatprep.subr.bf16.mxu0 0
    %371 = vmatpush1.bf16.msra.mxu0 0
    %372 = vmatprep.subr.bf16.mxu0 0
    %373 = vmatpush1.bf16.msra.mxu0 0
    %374 = vmatprep.subr.bf16.mxu0 0
    %375 = vmatpush1.bf16.msra.mxu0 %v350
    %376 = vmatprep.subr.bf16.mxu0 0
    %377 = vmatpush2.bf16.msra.mxu0 0
    %378 = vmatprep.subr.bf16.mxu0 0
    %379 = vmatpush2.bf16.msra.mxu0 0
    %380 = vmatprep.subr.bf16.mxu0 0
    %381 = vmatpush2.bf16.msra.mxu0 0
    %382 = vmatprep.subr.bf16.mxu0 0
    %383 = vmatpush2.bf16.msra.mxu0 0
    %384 = vmatprep.subr.bf16.mxu0 0
    %385 = vmatpush2.bf16.msra.mxu0 0
    %386 = vmatprep.subr.bf16.mxu0 0
    %387 = vmatpush2.bf16.msra.mxu0 0
    %388 = vmatprep.subr.bf16.mxu0 0
    %389 = vmatpush2.bf16.msra.mxu0 0
    %390 = vmatprep.subr.bf16.mxu0 0
    %391 = vmatpush2.bf16.msra.mxu0 0
    %392 = vmatprep.mubr.bf16.mxu0 0
    %393 = vmatmul.mubr.bf16.gmra.mxu0 %v358
    %v394 = vpop.f32.mrf.mxu0
    %v395 = vadd.f32 0.0, %v394
    %v396 = vpop.f32.mrf.mxu0
    %v397 = vpop.f32.mrf.mxu0
    %v398 = vadd.f32 0.0, %v397
    %v399 = vpop.f32.mrf.mxu0
    %400 = vdwg.mxu0
    %v403 = vunpack.c.l.b16 %v93
    %v404 = vunpack.c.l.b16 %v94
    %v405 = vpack.c.b16 %v404, %v403
    %v407 = vsel %vm136, %v405, 0
    %409 = vmatprep.subr.bf16.mxu0 0
    %410 = vmatpush1.bf16.msra.mxu0 0
    %411 = vmatprep.subr.bf16.mxu0 0
    %412 = vmatpush1.bf16.msra.mxu0 0
    %413 = vmatprep.subr.bf16.mxu0 0
    %414 = vmatpush1.bf16.msra.mxu0 0
    %415 = vmatprep.subr.bf16.mxu0 0
    %416 = vmatpush1.bf16.msra.mxu0 0
    %417 = vmatprep.subr.bf16.mxu0 0
    %418 = vmatpush1.bf16.msra.mxu0 0
    %419 = vmatprep.subr.bf16.mxu0 0
    %420 = vmatpush1.bf16.msra.mxu0 0
    %421 = vmatprep.subr.bf16.mxu0 0
    %422 = vmatpush1.bf16.msra.mxu0 0
    %423 = vmatprep.subr.bf16.mxu0 0
    %424 = vmatpush1.bf16.msra.mxu0 %v351
    %425 = vmatprep.subr.bf16.mxu0 0
    %426 = vmatpush2.bf16.msra.mxu0 0
    %427 = vmatprep.subr.bf16.mxu0 0
    %428 = vmatpush2.bf16.msra.mxu0 0
    %429 = vmatprep.subr.bf16.mxu0 0
    %430 = vmatpush2.bf16.msra.mxu0 0
    %431 = vmatprep.subr.bf16.mxu0 0
    %432 = vmatpush2.bf16.msra.mxu0 0
    %433 = vmatprep.subr.bf16.mxu0 0
    %434 = vmatpush2.bf16.msra.mxu0 0
    %435 = vmatprep.subr.bf16.mxu0 0
    %436 = vmatpush2.bf16.msra.mxu0 0
    %437 = vmatprep.subr.bf16.mxu0 0
    %438 = vmatpush2.bf16.msra.mxu0 0
    %439 = vmatprep.subr.bf16.mxu0 0
    %440 = vmatpush2.bf16.msra.mxu0 0
    %441 = vmatprep.mubr.bf16.mxu0 0
    %442 = vmatmul.mubr.bf16.gmra.mxu0 %v407
    %v443 = vpop.f32.mrf.mxu0
    %v444 = vadd.f32 0.0, %v443
    %v445 = vpop.f32.mrf.mxu0
    %v446 = vpop.f32.mrf.mxu0
    %v447 = vadd.f32 0.0, %v446
    %v448 = vpop.f32.mrf.mxu0
    %449 = vdwg.mxu0
    %v450 = vadd.bf16 %v350, %v351
    %v453 = vunpack.c.l.b16 %v96
    %v454 = vunpack.c.l.b16 %v97
    %v455 = vpack.c.b16 %v454, %v453
    %v457 = vsel %vm136, %v455, 0
    %459 = vmatprep.subr.bf16.mxu0 0
    %460 = vmatpush1.bf16.msra.mxu0 0
    %461 = vmatprep.subr.bf16.mxu0 0
    %462 = vmatpush1.bf16.msra.mxu0 0
    %463 = vmatprep.subr.bf16.mxu0 0
    %464 = vmatpush1.bf16.msra.mxu0 0
    %465 = vmatprep.subr.bf16.mxu0 0
    %466 = vmatpush1.bf16.msra.mxu0 0
    %467 = vmatprep.subr.bf16.mxu0 0
    %468 = vmatpush1.bf16.msra.mxu0 0
    %469 = vmatprep.subr.bf16.mxu0 0
    %470 = vmatpush1.bf16.msra.mxu0 0
    %471 = vmatprep.subr.bf16.mxu0 0
    %472 = vmatpush1.bf16.msra.mxu0 0
    %473 = vmatprep.subr.bf16.mxu0 0
    %474 = vmatpush1.bf16.msra.mxu0 %v450
    %475 = vmatprep.subr.bf16.mxu0 0
    %476 = vmatpush2.bf16.msra.mxu0 0
    %477 = vmatprep.subr.bf16.mxu0 0
    %478 = vmatpush2.bf16.msra.mxu0 0
    %479 = vmatprep.subr.bf16.mxu0 0
    %480 = vmatpush2.bf16.msra.mxu0 0
    %481 = vmatprep.subr.bf16.mxu0 0
    %482 = vmatpush2.bf16.msra.mxu0 0
    %483 = vmatprep.subr.bf16.mxu0 0
    %484 = vmatpush2.bf16.msra.mxu0 0
    %485 = vmatprep.subr.bf16.mxu0 0
    %486 = vmatpush2.bf16.msra.mxu0 0
    %487 = vmatprep.subr.bf16.mxu0 0
    %488 = vmatpush2.bf16.msra.mxu0 0
    %489 = vmatprep.subr.bf16.mxu0 0
    %490 = vmatpush2.bf16.msra.mxu0 0
    %491 = vmatprep.mubr.bf16.mxu0 0
    %492 = vmatmul.mubr.bf16.gmra.mxu0 %v457
    %v493 = vpop.f32.mrf.mxu0
    %v494 = vadd.f32 0.0, %v493
    %v495 = vpop.f32.mrf.mxu0
    %v496 = vpop.f32.mrf.mxu0
    %v497 = vadd.f32 0.0, %v496
    %v498 = vpop.f32.mrf.mxu0
    %499 = vdwg.mxu0
    %v500 = vsub.f32 %v395, %v444
    %v501 = vsub.f32 %v398, %v447
    %v502 = vsub.f32 %v494, %v395
    %v503 = vsub.f32 %v497, %v398
    %v504 = vsub.f32 %v502, %v444
    %v505 = vsub.f32 %v503, %v447
    %v506 = vld [vmem:[#allocation7] sm:$0xf]
    %v507 = vld [vmem:[#allocation7 + $0x4] sm:$0xf]
    %v508 = vunpack.c.l.bf16 %v506
    %v509 = vunpack.c.l.bf16 %v507
    %v510 = vld [vmem:[#allocation9] sm:$0xff]
    %v511 = vld [vmem:[#allocation9 + $0x8] sm:$0xff]
    %v512 = vsub.f32 %v500, %v510
    %v513 = vsub.f32 %v501, %v511
    %v514 = vmul.f32 %v508, %v512
    %v515 = vmul.f32 %v509, %v513
    %v516 = vsub.f32 %v500, %v514
    %v517 = vsub.f32 %v501, %v515
    %s518 = scalar_lea.vmem [#allocation9], 16
    %v519 = vld [vmem:[%s518] sm:$0xff]
    %v520 = vld [vmem:[%s518 + $0x8] sm:$0xff]
    %v521 = vsub.f32 %v504, %v519
    %v522 = vsub.f32 %v505, %v520
    %v523 = vmul.f32 %v508, %v521
    %v524 = vmul.f32 %v509, %v522
    %v525 = vsub.f32 %v504, %v523
    %v526 = vsub.f32 %v505, %v524
    %v527 = vpack.c.bf16 %v517, %v516
    %v528 = vpack.c.bf16 %v526, %v525
    %529 = vmatprep.subr.bf16.mxu0 0
    %530 = vmatpush1.bf16.msra.mxu0 0
    %531 = vmatprep.subr.bf16.mxu0 0
    %532 = vmatpush1.bf16.msra.mxu0 0
    %533 = vmatprep.subr.bf16.mxu0 0
    %534 = vmatpush1.bf16.msra.mxu0 0
    %535 = vmatprep.subr.bf16.mxu0 0
    %536 = vmatpush1.bf16.msra.mxu0 0
    %537 = vmatprep.subr.bf16.mxu0 0
    %538 = vmatpush1.bf16.msra.mxu0 0
    %539 = vmatprep.subr.bf16.mxu0 0
    %540 = vmatpush1.bf16.msra.mxu0 0
    %541 = vmatprep.subr.bf16.mxu0 0
    %542 = vmatpush1.bf16.msra.mxu0 0
    %543 = vmatprep.subr.bf16.mxu0 0
    %544 = vmatpush1.bf16.msra.mxu0 %v527
    %545 = vmatprep.subr.bf16.mxu0 0
    %546 = vmatpush2.bf16.msra.mxu0 0
    %547 = vmatprep.subr.bf16.mxu0 0
    %548 = vmatpush2.bf16.msra.mxu0 0
    %549 = vmatprep.subr.bf16.mxu0 0
    %550 = vmatpush2.bf16.msra.mxu0 0
    %551 = vmatprep.subr.bf16.mxu0 0
    %552 = vmatpush2.bf16.msra.mxu0 0
    %553 = vmatprep.subr.bf16.mxu0 0
    %554 = vmatpush2.bf16.msra.mxu0 0
    %555 = vmatprep.subr.bf16.mxu0 0
    %556 = vmatpush2.bf16.msra.mxu0 0
    %557 = vmatprep.subr.bf16.mxu0 0
    %558 = vmatpush2.bf16.msra.mxu0 0
    %559 = vmatprep.subr.bf16.mxu0 0
    %560 = vmatpush2.bf16.msra.mxu0 0
    %561 = vmatprep.mubr.bf16.mxu0 0
    %562 = vmatmul.mubr.bf16.gmra.mxu0 %v358
    %v563 = vpop.f32.mrf.mxu0
    %v564 = vadd.f32 0.0, %v563
    %v565 = vpop.f32.mrf.mxu0
    %v566 = vpop.f32.mrf.mxu0
    %v567 = vadd.f32 0.0, %v566
    %v568 = vpop.f32.mrf.mxu0
    %569 = vdwg.mxu0
    %570 = vmatprep.subr.bf16.mxu0 0
    %571 = vmatpush1.bf16.msra.mxu0 0
    %572 = vmatprep.subr.bf16.mxu0 0
    %573 = vmatpush1.bf16.msra.mxu0 0
    %574 = vmatprep.subr.bf16.mxu0 0
    %575 = vmatpush1.bf16.msra.mxu0 0
    %576 = vmatprep.subr.bf16.mxu0 0
    %577 = vmatpush1.bf16.msra.mxu0 0
    %578 = vmatprep.subr.bf16.mxu0 0
    %579 = vmatpush1.bf16.msra.mxu0 0
    %580 = vmatprep.subr.bf16.mxu0 0
    %581 = vmatpush1.bf16.msra.mxu0 0
    %582 = vmatprep.subr.bf16.mxu0 0
    %583 = vmatpush1.bf16.msra.mxu0 0
    %584 = vmatprep.subr.bf16.mxu0 0
    %585 = vmatpush1.bf16.msra.mxu0 %v528
    %586 = vmatprep.subr.bf16.mxu0 0
    %587 = vmatpush2.bf16.msra.mxu0 0
    %588 = vmatprep.subr.bf16.mxu0 0
    %589 = vmatpush2.bf16.msra.mxu0 0
    %590 = vmatprep.subr.bf16.mxu0 0
    %591 = vmatpush2.bf16.msra.mxu0 0
    %592 = vmatprep.subr.bf16.mxu0 0
    %593 = vmatpush2.bf16.msra.mxu0 0
    %594 = vmatprep.subr.bf16.mxu0 0
    %595 = vmatpush2.bf16.msra.mxu0 0
    %596 = vmatprep.subr.bf16.mxu0 0
    %597 = vmatpush2.bf16.msra.mxu0 0
    %598 = vmatprep.subr.bf16.mxu0 0
    %599 = vmatpush2.bf16.msra.mxu0 0
    %600 = vmatprep.subr.bf16.mxu0 0
    %601 = vmatpush2.bf16.msra.mxu0 0
    %602 = vmatprep.mubr.bf16.mxu0 0
    %603 = vmatmul.mubr.bf16.gmra.mxu0 %v407
    %v604 = vpop.f32.mrf.mxu0
    %v605 = vadd.f32 0.0, %v604
    %v606 = vpop.f32.mrf.mxu0
    %v607 = vpop.f32.mrf.mxu0
    %v608 = vadd.f32 0.0, %v607
    %v609 = vpop.f32.mrf.mxu0
    %610 = vdwg.mxu0
    %v611 = vadd.bf16 %v527, %v528
    %v614 = vunpack.c.l.b16 %v99
    %v615 = vunpack.c.l.b16 %v100
    %v616 = vpack.c.b16 %v615, %v614
    %v618 = vsel %vm136, %v616, 0
    %620 = vmatprep.subr.bf16.mxu0 0
    %621 = vmatpush1.bf16.msra.mxu0 0
    %622 = vmatprep.subr.bf16.mxu0 0
    %623 = vmatpush1.bf16.msra.mxu0 0
    %624 = vmatprep.subr.bf16.mxu0 0
    %625 = vmatpush1.bf16.msra.mxu0 0
    %626 = vmatprep.subr.bf16.mxu0 0
    %627 = vmatpush1.bf16.msra.mxu0 0
    %628 = vmatprep.subr.bf16.mxu0 0
    %629 = vmatpush1.bf16.msra.mxu0 0
    %630 = vmatprep.subr.bf16.mxu0 0
    %631 = vmatpush1.bf16.msra.mxu0 0
    %632 = vmatprep.subr.bf16.mxu0 0
    %633 = vmatpush1.bf16.msra.mxu0 0
    %634 = vmatprep.subr.bf16.mxu0 0
    %635 = vmatpush1.bf16.msra.mxu0 %v611
    %636 = vmatprep.subr.bf16.mxu0 0
    %637 = vmatpush2.bf16.msra.mxu0 0
    %638 = vmatprep.subr.bf16.mxu0 0
    %639 = vmatpush2.bf16.msra.mxu0 0
    %640 = vmatprep.subr.bf16.mxu0 0
    %641 = vmatpush2.bf16.msra.mxu0 0
    %642 = vmatprep.subr.bf16.mxu0 0
    %643 = vmatpush2.bf16.msra.mxu0 0
    %644 = vmatprep.subr.bf16.mxu0 0
    %645 = vmatpush2.bf16.msra.mxu0 0
    %646 = vmatprep.subr.bf16.mxu0 0
    %647 = vmatpush2.bf16.msra.mxu0 0
    %648 = vmatprep.subr.bf16.mxu0 0
    %649 = vmatpush2.bf16.msra.mxu0 0
    %650 = vmatprep.subr.bf16.mxu0 0
    %651 = vmatpush2.bf16.msra.mxu0 0
    %652 = vmatprep.mubr.bf16.mxu0 0
    %653 = vmatmul.mubr.bf16.gmra.mxu0 %v618
    %v654 = vpop.f32.mrf.mxu0
    %v655 = vadd.f32 0.0, %v654
    %v656 = vpop.f32.mrf.mxu0
    %v657 = vpop.f32.mrf.mxu0
    %v658 = vadd.f32 0.0, %v657
    %v659 = vpop.f32.mrf.mxu0
    %660 = vdwg.mxu0
    %v661 = vadd.f32 %v564, %v605
    %v662 = vadd.f32 %v567, %v608
    %663 = vst.msk [vmem:[#allocation2] sm:$0xff] %vm136, %v661
    %664 = vst.msk [vmem:[#allocation2 + $0x8] sm:$0xff] %vm136, %v662
    %v665 = vsub.f32 %v655, %v564
    %v666 = vsub.f32 %v658, %v567
    %v667 = vadd.f32 %v665, %v605
    %v668 = vadd.f32 %v666, %v608
    %669 = vst.msk [vmem:[#allocation3] sm:$0xff] %vm136, %v667
    %670 = vst.msk [vmem:[#allocation3 + $0x8] sm:$0xff] %vm136, %v668
    %v671 = vpack.c.bf16 %v341, %v340
    %v672 = vpack.c.bf16 %v349, %v348
    %673 = vmatprep.subr.bf16.mxu0 0
    %674 = vmatpush1.bf16.msra.mxu0 0
    %675 = vmatprep.subr.bf16.mxu0 0
    %676 = vmatpush1.bf16.msra.mxu0 0
    %677 = vmatprep.subr.bf16.mxu0 0
    %678 = vmatpush1.bf16.msra.mxu0 0
    %679 = vmatprep.subr.bf16.mxu0 0
    %680 = vmatpush1.bf16.msra.mxu0 0
    %681 = vmatprep.subr.bf16.mxu0 0
    %682 = vmatpush1.bf16.msra.mxu0 0
    %683 = vmatprep.subr.bf16.mxu0 0
    %684 = vmatpush1.bf16.msra.mxu0 0
    %685 = vmatprep.subr.bf16.mxu0 0
    %686 = vmatpush1.bf16.msra.mxu0 0
    %687 = vmatprep.subr.bf16.mxu0 0
    %688 = vmatpush1.bf16.msra.mxu0 %v671
    %689 = vmatprep.subr.bf16.mxu0 0
    %690 = vmatpush2.bf16.msra.mxu0 0
    %691 = vmatprep.subr.bf16.mxu0 0
    %692 = vmatpush2.bf16.msra.mxu0 0
    %693 = vmatprep.subr.bf16.mxu0 0
    %694 = vmatpush2.bf16.msra.mxu0 0
    %695 = vmatprep.subr.bf16.mxu0 0
    %696 = vmatpush2.bf16.msra.mxu0 0
    %697 = vmatprep.subr.bf16.mxu0 0
    %698 = vmatpush2.bf16.msra.mxu0 0
    %699 = vmatprep.subr.bf16.mxu0 0
    %700 = vmatpush2.bf16.msra.mxu0 0
    %701 = vmatprep.subr.bf16.mxu0 0
    %702 = vmatpush2.bf16.msra.mxu0 0
    %703 = vmatprep.subr.bf16.mxu0 0
    %704 = vmatpush2.bf16.msra.mxu0 0
    %705 = vmatprep.mubr.bf16.mxu0 0
    %706 = vmatmul.mubr.bf16.gmra.mxu0 %v358
    %v707 = vpop.f32.mrf.mxu0
    %v708 = vadd.f32 0.0, %v707
    %v709 = vpop.f32.mrf.mxu0
    %v710 = vpop.f32.mrf.mxu0
    %v711 = vadd.f32 0.0, %v710
    %v712 = vpop.f32.mrf.mxu0
    %713 = vdwg.mxu0
    %714 = vmatprep.subr.bf16.mxu0 0
    %715 = vmatpush1.bf16.msra.mxu0 0
    %716 = vmatprep.subr.bf16.mxu0 0
    %717 = vmatpush1.bf16.msra.mxu0 0
    %718 = vmatprep.subr.bf16.mxu0 0
    %719 = vmatpush1.bf16.msra.mxu0 0
    %720 = vmatprep.subr.bf16.mxu0 0
    %721 = vmatpush1.bf16.msra.mxu0 0
    %722 = vmatprep.subr.bf16.mxu0 0
    %723 = vmatpush1.bf16.msra.mxu0 0
    %724 = vmatprep.subr.bf16.mxu0 0
    %725 = vmatpush1.bf16.msra.mxu0 0
    %726 = vmatprep.subr.bf16.mxu0 0
    %727 = vmatpush1.bf16.msra.mxu0 0
    %728 = vmatprep.subr.bf16.mxu0 0
    %729 = vmatpush1.bf16.msra.mxu0 %v672
    %730 = vmatprep.subr.bf16.mxu0 0
    %731 = vmatpush2.bf16.msra.mxu0 0
    %732 = vmatprep.subr.bf16.mxu0 0
    %733 = vmatpush2.bf16.msra.mxu0 0
    %734 = vmatprep.subr.bf16.mxu0 0
    %735 = vmatpush2.bf16.msra.mxu0 0
    %736 = vmatprep.subr.bf16.mxu0 0
    %737 = vmatpush2.bf16.msra.mxu0 0
    %738 = vmatprep.subr.bf16.mxu0 0
    %739 = vmatpush2.bf16.msra.mxu0 0
    %740 = vmatprep.subr.bf16.mxu0 0
    %741 = vmatpush2.bf16.msra.mxu0 0
    %742 = vmatprep.subr.bf16.mxu0 0
    %743 = vmatpush2.bf16.msra.mxu0 0
    %744 = vmatprep.subr.bf16.mxu0 0
    %745 = vmatpush2.bf16.msra.mxu0 0
    %746 = vmatprep.mubr.bf16.mxu0 0
    %747 = vmatmul.mubr.bf16.gmra.mxu0 %v407
    %v748 = vpop.f32.mrf.mxu0
    %v749 = vadd.f32 0.0, %v748
    %v750 = vpop.f32.mrf.mxu0
    %v751 = vpop.f32.mrf.mxu0
    %v752 = vadd.f32 0.0, %v751
    %v753 = vpop.f32.mrf.mxu0
    %754 = vdwg.mxu0
    %v755 = vadd.bf16 %v671, %v672
    %756 = vmatprep.subr.bf16.mxu0 0
    %757 = vmatpush1.bf16.msra.mxu0 0
    %758 = vmatprep.subr.bf16.mxu0 0
    %759 = vmatpush1.bf16.msra.mxu0 0
    %760 = vmatprep.subr.bf16.mxu0 0
    %761 = vmatpush1.bf16.msra.mxu0 0
    %762 = vmatprep.subr.bf16.mxu0 0
    %763 = vmatpush1.bf16.msra.mxu0 0
    %764 = vmatprep.subr.bf16.mxu0 0
    %765 = vmatpush1.bf16.msra.mxu0 0
    %766 = vmatprep.subr.bf16.mxu0 0
    %767 = vmatpush1.bf16.msra.mxu0 0
    %768 = vmatprep.subr.bf16.mxu0 0
    %769 = vmatpush1.bf16.msra.mxu0 0
    %770 = vmatprep.subr.bf16.mxu0 0
    %771 = vmatpush1.bf16.msra.mxu0 %v755
    %772 = vmatprep.subr.bf16.mxu0 0
    %773 = vmatpush2.bf16.msra.mxu0 0
    %774 = vmatprep.subr.bf16.mxu0 0
    %775 = vmatpush2.bf16.msra.mxu0 0
    %776 = vmatprep.subr.bf16.mxu0 0
    %777 = vmatpush2.bf16.msra.mxu0 0
    %778 = vmatprep.subr.bf16.mxu0 0
    %779 = vmatpush2.bf16.msra.mxu0 0
    %780 = vmatprep.subr.bf16.mxu0 0
    %781 = vmatpush2.bf16.msra.mxu0 0
    %782 = vmatprep.subr.bf16.mxu0 0
    %783 = vmatpush2.bf16.msra.mxu0 0
    %784 = vmatprep.subr.bf16.mxu0 0
    %785 = vmatpush2.bf16.msra.mxu0 0
    %786 = vmatprep.subr.bf16.mxu0 0
    %787 = vmatpush2.bf16.msra.mxu0 0
    %788 = vmatprep.mubr.bf16.mxu0 0
    %789 = vmatmul.mubr.bf16.gmra.mxu0 %v457
    %v790 = vpop.f32.mrf.mxu0
    %v791 = vadd.f32 0.0, %v790
    %v792 = vpop.f32.mrf.mxu0
    %v793 = vpop.f32.mrf.mxu0
    %v794 = vadd.f32 0.0, %v793
    %v795 = vpop.f32.mrf.mxu0
    %796 = vdwg.mxu0
    %v797 = vsub.f32 %v708, %v749
    %v798 = vsub.f32 %v711, %v752
    %v799 = vsub.f32 %v791, %v708
    %v800 = vsub.f32 %v794, %v711
    %v801 = vsub.f32 %v799, %v749
    %v802 = vsub.f32 %v800, %v752
    %s803 = scalar_lea.vmem [#allocation7], 8
    %v804 = vld [vmem:[%s803] sm:$0xf]
    %v805 = vld [vmem:[%s803 + $0x4] sm:$0xf]
    %v806 = vunpack.c.l.bf16 %v804
    %v807 = vunpack.c.l.bf16 %v805
    %s808 = scalar_lea.vmem [#allocation9], 32
    %v809 = vld [vmem:[%s808] sm:$0xff]
    %v810 = vld [vmem:[%s808 + $0x8] sm:$0xff]
    %v811 = vsub.f32 %v797, %v809
    %v812 = vsub.f32 %v798, %v810
    %v813 = vmul.f32 %v806, %v811
    %v814 = vmul.f32 %v807, %v812
    %v815 = vsub.f32 %v797, %v813
    %v816 = vsub.f32 %v798, %v814
    %s817 = scalar_lea.vmem [#allocation9], 48
    %v818 = vld [vmem:[%s817] sm:$0xff]
    %v819 = vld [vmem:[%s817 + $0x8] sm:$0xff]
    %v820 = vsub.f32 %v801, %v818
    %v821 = vsub.f32 %v802, %v819
    %v822 = vmul.f32 %v806, %v820
    %v823 = vmul.f32 %v807, %v821
    %v824 = vsub.f32 %v801, %v822
    %v825 = vsub.f32 %v802, %v823
    %v826 = vpack.c.bf16 %v816, %v815
    %v827 = vpack.c.bf16 %v825, %v824
    %828 = vmatprep.subr.bf16.mxu0 0
    %829 = vmatpush1.bf16.msra.mxu0 0
    %830 = vmatprep.subr.bf16.mxu0 0
    %831 = vmatpush1.bf16.msra.mxu0 0
    %832 = vmatprep.subr.bf16.mxu0 0
    %833 = vmatpush1.bf16.msra.mxu0 0
    %834 = vmatprep.subr.bf16.mxu0 0
    %835 = vmatpush1.bf16.msra.mxu0 0
    %836 = vmatprep.subr.bf16.mxu0 0
    %837 = vmatpush1.bf16.msra.mxu0 0
    %838 = vmatprep.subr.bf16.mxu0 0
    %839 = vmatpush1.bf16.msra.mxu0 0
    %840 = vmatprep.subr.bf16.mxu0 0
    %841 = vmatpush1.bf16.msra.mxu0 0
    %842 = vmatprep.subr.bf16.mxu0 0
    %843 = vmatpush1.bf16.msra.mxu0 %v826
    %844 = vmatprep.subr.bf16.mxu0 0
    %845 = vmatpush2.bf16.msra.mxu0 0
    %846 = vmatprep.subr.bf16.mxu0 0
    %847 = vmatpush2.bf16.msra.mxu0 0
    %848 = vmatprep.subr.bf16.mxu0 0
    %849 = vmatpush2.bf16.msra.mxu0 0
    %850 = vmatprep.subr.bf16.mxu0 0
    %851 = vmatpush2.bf16.msra.mxu0 0
    %852 = vmatprep.subr.bf16.mxu0 0
    %853 = vmatpush2.bf16.msra.mxu0 0
    %854 = vmatprep.subr.bf16.mxu0 0
    %855 = vmatpush2.bf16.msra.mxu0 0
    %856 = vmatprep.subr.bf16.mxu0 0
    %857 = vmatpush2.bf16.msra.mxu0 0
    %858 = vmatprep.subr.bf16.mxu0 0
    %859 = vmatpush2.bf16.msra.mxu0 0
    %860 = vmatprep.mubr.bf16.mxu0 0
    %861 = vmatmul.mubr.bf16.gmra.mxu0 %v358
    %v862 = vpop.f32.mrf.mxu0
    %v863 = vadd.f32 0.0, %v862
    %v864 = vpop.f32.mrf.mxu0
    %v865 = vpop.f32.mrf.mxu0
    %v866 = vadd.f32 0.0, %v865
    %v867 = vpop.f32.mrf.mxu0
    %868 = vdwg.mxu0
    %869 = vmatprep.subr.bf16.mxu0 0
    %870 = vmatpush1.bf16.msra.mxu0 0
    %871 = vmatprep.subr.bf16.mxu0 0
    %872 = vmatpush1.bf16.msra.mxu0 0
    %873 = vmatprep.subr.bf16.mxu0 0
    %874 = vmatpush1.bf16.msra.mxu0 0
    %875 = vmatprep.subr.bf16.mxu0 0
    %876 = vmatpush1.bf16.msra.mxu0 0
    %877 = vmatprep.subr.bf16.mxu0 0
    %878 = vmatpush1.bf16.msra.mxu0 0
    %879 = vmatprep.subr.bf16.mxu0 0
    %880 = vmatpush1.bf16.msra.mxu0 0
    %881 = vmatprep.subr.bf16.mxu0 0
    %882 = vmatpush1.bf16.msra.mxu0 0
    %883 = vmatprep.subr.bf16.mxu0 0
    %884 = vmatpush1.bf16.msra.mxu0 %v827
    %885 = vmatprep.subr.bf16.mxu0 0
    %886 = vmatpush2.bf16.msra.mxu0 0
    %887 = vmatprep.subr.bf16.mxu0 0
    %888 = vmatpush2.bf16.msra.mxu0 0
    %889 = vmatprep.subr.bf16.mxu0 0
    %890 = vmatpush2.bf16.msra.mxu0 0
    %891 = vmatprep.subr.bf16.mxu0 0
    %892 = vmatpush2.bf16.msra.mxu0 0
    %893 = vmatprep.subr.bf16.mxu0 0
    %894 = vmatpush2.bf16.msra.mxu0 0
    %895 = vmatprep.subr.bf16.mxu0 0
    %896 = vmatpush2.bf16.msra.mxu0 0
    %897 = vmatprep.subr.bf16.mxu0 0
    %898 = vmatpush2.bf16.msra.mxu0 0
    %899 = vmatprep.subr.bf16.mxu0 0
    %900 = vmatpush2.bf16.msra.mxu0 0
    %901 = vmatprep.mubr.bf16.mxu0 0
    %902 = vmatmul.mubr.bf16.gmra.mxu0 %v407
    %v903 = vpop.f32.mrf.mxu0
    %v904 = vadd.f32 0.0, %v903
    %v905 = vpop.f32.mrf.mxu0
    %v906 = vpop.f32.mrf.mxu0
    %v907 = vadd.f32 0.0, %v906
    %v908 = vpop.f32.mrf.mxu0
    %909 = vdwg.mxu0
    %v910 = vadd.bf16 %v826, %v827
    %911 = vmatprep.subr.bf16.mxu0 0
    %912 = vmatpush1.bf16.msra.mxu0 0
    %913 = vmatprep.subr.bf16.mxu0 0
    %914 = vmatpush1.bf16.msra.mxu0 0
    %915 = vmatprep.subr.bf16.mxu0 0
    %916 = vmatpush1.bf16.msra.mxu0 0
    %917 = vmatprep.subr.bf16.mxu0 0
    %918 = vmatpush1.bf16.msra.mxu0 0
    %919 = vmatprep.subr.bf16.mxu0 0
    %920 = vmatpush1.bf16.msra.mxu0 0
    %921 = vmatprep.subr.bf16.mxu0 0
    %922 = vmatpush1.bf16.msra.mxu0 0
    %923 = vmatprep.subr.bf16.mxu0 0
    %924 = vmatpush1.bf16.msra.mxu0 0
    %925 = vmatprep.subr.bf16.mxu0 0
    %926 = vmatpush1.bf16.msra.mxu0 %v910
    %927 = vmatprep.subr.bf16.mxu0 0
    %928 = vmatpush2.bf16.msra.mxu0 0
    %929 = vmatprep.subr.bf16.mxu0 0
    %930 = vmatpush2.bf16.msra.mxu0 0
    %931 = vmatprep.subr.bf16.mxu0 0
    %932 = vmatpush2.bf16.msra.mxu0 0
    %933 = vmatprep.subr.bf16.mxu0 0
    %934 = vmatpush2.bf16.msra.mxu0 0
    %935 = vmatprep.subr.bf16.mxu0 0
    %936 = vmatpush2.bf16.msra.mxu0 0
    %937 = vmatprep.subr.bf16.mxu0 0
    %938 = vmatpush2.bf16.msra.mxu0 0
    %939 = vmatprep.subr.bf16.mxu0 0
    %940 = vmatpush2.bf16.msra.mxu0 0
    %941 = vmatprep.subr.bf16.mxu0 0
    %942 = vmatpush2.bf16.msra.mxu0 0
    %943 = vmatprep.mubr.bf16.mxu0 0
    %944 = vmatmul.mubr.bf16.gmra.mxu0 %v618
    %v945 = vpop.f32.mrf.mxu0
    %v946 = vadd.f32 0.0, %v945
    %v947 = vpop.f32.mrf.mxu0
    %v948 = vpop.f32.mrf.mxu0
    %v949 = vadd.f32 0.0, %v948
    %v950 = vpop.f32.mrf.mxu0
    %951 = vdwg.mxu0
    %v952 = vadd.f32 %v863, %v904
    %v953 = vadd.f32 %v866, %v907
    %954 = vst.msk [vmem:[#allocation2 + $0x10] sm:$0xff] %vm136, %v952
    %955 = vst.msk [vmem:[#allocation2 + $0x18] sm:$0xff] %vm136, %v953
    %v956 = vsub.f32 %v946, %v863
    %v957 = vsub.f32 %v949, %v866
    %v958 = vadd.f32 %v956, %v904
    %v959 = vadd.f32 %v957, %v907
    %960 = vst.msk [vmem:[#allocation3 + $0x10] sm:$0xff] %vm136, %v958
    %961 = vst.msk [vmem:[#allocation3 + $0x18] sm:$0xff] %vm136, %v959
    %v962 = vld [vmem:[#allocation2] sm:$0xff]
    %v963 = vld [vmem:[#allocation2 + $0x8] sm:$0xff]
    %v964 = vld [vmem:[#allocation2 + $0x10] sm:$0xff]
    %v965 = vld [vmem:[#allocation2 + $0x18] sm:$0xff]
    %v966 = vpack.c.bf16 %v963, %v962
    %v967 = vpack.c.bf16 %v965, %v964
    %v968 = vld [vmem:[#allocation3] sm:$0xff]
    %v969 = vld [vmem:[#allocation3 + $0x8] sm:$0xff]
    %v970 = vld [vmem:[#allocation3 + $0x10] sm:$0xff]
    %v971 = vld [vmem:[#allocation3 + $0x18] sm:$0xff]
    %v972 = vpack.c.bf16 %v969, %v968
    %v973 = vpack.c.bf16 %v971, %v970
    %v975 = vsel %vm136, %v966, 0
    %v978 = vsel %vm136, %v967, 0
    %980 = vmatprep.subr.bf16.mxu0 0
    %981 = vmatpush1.bf16.msra.mxu0 0
    %982 = vmatprep.subr.bf16.mxu0 0
    %983 = vmatpush1.bf16.msra.mxu0 0
    %984 = vmatprep.subr.bf16.mxu0 0
    %985 = vmatpush1.bf16.msra.mxu0 0
    %986 = vmatprep.subr.bf16.mxu0 0
    %987 = vmatpush1.bf16.msra.mxu0 0
    %988 = vmatprep.subr.bf16.mxu0 0
    %989 = vmatpush1.bf16.msra.mxu0 0
    %990 = vmatprep.subr.bf16.mxu0 0
    %991 = vmatpush1.bf16.msra.mxu0 0
    %992 = vmatprep.subr.bf16.mxu0 0
    %993 = vmatpush1.bf16.msra.mxu0 0
    %994 = vmatprep.subr.bf16.mxu0 0
    %995 = vmatpush1.bf16.msra.mxu0 %v134
    %996 = vmatprep.subr.bf16.mxu0 0
    %997 = vmatpush2.bf16.msra.mxu0 0
    %998 = vmatprep.subr.bf16.mxu0 0
    %999 = vmatpush2.bf16.msra.mxu0 0
    %1000 = vmatprep.subr.bf16.mxu0 0
    %1001 = vmatpush2.bf16.msra.mxu0 0
    %1002 = vmatprep.subr.bf16.mxu0 0
    %1003 = vmatpush2.bf16.msra.mxu0 0
    %1004 = vmatprep.subr.bf16.mxu0 0
    %1005 = vmatpush2.bf16.msra.mxu0 0
    %1006 = vmatprep.subr.bf16.mxu0 0
    %1007 = vmatpush2.bf16.msra.mxu0 0
    %1008 = vmatprep.subr.bf16.mxu0 0
    %1009 = vmatpush2.bf16.msra.mxu0 0
    %1010 = vmatprep.subr.bf16.mxu0 0
    %1011 = vmatpush2.bf16.msra.mxu0 0
    %1012 = vmatprep.mubr.bf16.mxu0 0
    %1013 = vmatmul.mubr.bf16.gmra.mxu0 %v975
    %v1014 = vpop.f32.mrf.mxu0
    %v1015 = vadd.f32 0.0, %v1014
    %v1016 = vpop.f32.mrf.mxu0
    %v1017 = vpop.f32.mrf.mxu0
    %v1018 = vadd.f32 0.0, %v1017
    %v1019 = vpop.f32.mrf.mxu0
    %1020 = vmatprep.mubr.bf16.mxu0 0
    %1021 = vmatmul.mubr.bf16.gmra.mxu0 %v978
    %v1022 = vpop.f32.mrf.mxu0
    %v1023 = vadd.f32 0.0, %v1022
    %v1024 = vpop.f32.mrf.mxu0
    %v1025 = vpop.f32.mrf.mxu0
    %v1026 = vadd.f32 0.0, %v1025
    %v1027 = vpop.f32.mrf.mxu0
    %1028 = vdwg.mxu0
    %v1030 = vsel %vm136, %v972, 0
    %v1033 = vsel %vm136, %v973, 0
    %1035 = vmatprep.subr.bf16.mxu0 0
    %1036 = vmatpush1.bf16.msra.mxu0 0
    %1037 = vmatprep.subr.bf16.mxu0 0
    %1038 = vmatpush1.bf16.msra.mxu0 0
    %1039 = vmatprep.subr.bf16.mxu0 0
    %1040 = vmatpush1.bf16.msra.mxu0 0
    %1041 = vmatprep.subr.bf16.mxu0 0
    %1042 = vmatpush1.bf16.msra.mxu0 0
    %1043 = vmatprep.subr.bf16.mxu0 0
    %1044 = vmatpush1.bf16.msra.mxu0 0
    %1045 = vmatprep.subr.bf16.mxu0 0
    %1046 = vmatpush1.bf16.msra.mxu0 0
    %1047 = vmatprep.subr.bf16.mxu0 0
    %1048 = vmatpush1.bf16.msra.mxu0 0
    %1049 = vmatprep.subr.bf16.mxu0 0
    %1050 = vmatpush1.bf16.msra.mxu0 %v206
    %1051 = vmatprep.subr.bf16.mxu0 0
    %1052 = vmatpush2.bf16.msra.mxu0 0
    %1053 = vmatprep.subr.bf16.mxu0 0
    %1054 = vmatpush2.bf16.msra.mxu0 0
    %1055 = vmatprep.subr.bf16.mxu0 0
    %1056 = vmatpush2.bf16.msra.mxu0 0
    %1057 = vmatprep.subr.bf16.mxu0 0
    %1058 = vmatpush2.bf16.msra.mxu0 0
    %1059 = vmatprep.subr.bf16.mxu0 0
    %1060 = vmatpush2.bf16.msra.mxu0 0
    %1061 = vmatprep.subr.bf16.mxu0 0
    %1062 = vmatpush2.bf16.msra.mxu0 0
    %1063 = vmatprep.subr.bf16.mxu0 0
    %1064 = vmatpush2.bf16.msra.mxu0 0
    %1065 = vmatprep.subr.bf16.mxu0 0
    %1066 = vmatpush2.bf16.msra.mxu0 0
    %1067 = vmatprep.mubr.bf16.mxu0 0
    %1068 = vmatmul.mubr.bf16.gmra.mxu0 %v1030
    %v1069 = vpop.f32.mrf.mxu0
    %v1070 = vadd.f32 0.0, %v1069
    %v1071 = vpop.f32.mrf.mxu0
    %v1072 = vpop.f32.mrf.mxu0
    %v1073 = vadd.f32 0.0, %v1072
    %v1074 = vpop.f32.mrf.mxu0
    %1075 = vmatprep.mubr.bf16.mxu0 0
    %1076 = vmatmul.mubr.bf16.gmra.mxu0 %v1033
    %v1077 = vpop.f32.mrf.mxu0
    %v1078 = vadd.f32 0.0, %v1077
    %v1079 = vpop.f32.mrf.mxu0
    %v1080 = vpop.f32.mrf.mxu0
    %v1081 = vadd.f32 0.0, %v1080
    %v1082 = vpop.f32.mrf.mxu0
    %1083 = vdwg.mxu0
    %v1084 = vadd.bf16 %v966, %v972
    %v1085 = vadd.bf16 %v967, %v973
    %v1088 = vunpack.c.l.b16 %v110
    %v1089 = vunpack.c.l.b16 %v111
    %v1090 = vpack.c.b16 %v1089, %v1088
    %v1093 = vsel %vm136, %v1084, 0
    %v1096 = vsel %vm136, %v1085, 0
    %1098 = vmatprep.subr.bf16.mxu0 0
    %1099 = vmatpush1.bf16.msra.mxu0 0
    %1100 = vmatprep.subr.bf16.mxu0 0
    %1101 = vmatpush1.bf16.msra.mxu0 0
    %1102 = vmatprep.subr.bf16.mxu0 0
    %1103 = vmatpush1.bf16.msra.mxu0 0
    %1104 = vmatprep.subr.bf16.mxu0 0
    %1105 = vmatpush1.bf16.msra.mxu0 0
    %1106 = vmatprep.subr.bf16.mxu0 0
    %1107 = vmatpush1.bf16.msra.mxu0 0
    %1108 = vmatprep.subr.bf16.mxu0 0
    %1109 = vmatpush1.bf16.msra.mxu0 0
    %1110 = vmatprep.subr.bf16.mxu0 0
    %1111 = vmatpush1.bf16.msra.mxu0 0
    %1112 = vmatprep.subr.bf16.mxu0 0
    %1113 = vmatpush1.bf16.msra.mxu0 %v1090
    %1114 = vmatprep.subr.bf16.mxu0 0
    %1115 = vmatpush2.bf16.msra.mxu0 0
    %1116 = vmatprep.subr.bf16.mxu0 0
    %1117 = vmatpush2.bf16.msra.mxu0 0
    %1118 = vmatprep.subr.bf16.mxu0 0
    %1119 = vmatpush2.bf16.msra.mxu0 0
    %1120 = vmatprep.subr.bf16.mxu0 0
    %1121 = vmatpush2.bf16.msra.mxu0 0
    %1122 = vmatprep.subr.bf16.mxu0 0
    %1123 = vmatpush2.bf16.msra.mxu0 0
    %1124 = vmatprep.subr.bf16.mxu0 0
    %1125 = vmatpush2.bf16.msra.mxu0 0
    %1126 = vmatprep.subr.bf16.mxu0 0
    %1127 = vmatpush2.bf16.msra.mxu0 0
    %1128 = vmatprep.subr.bf16.mxu0 0
    %1129 = vmatpush2.bf16.msra.mxu0 0
    %1130 = vmatprep.mubr.bf16.mxu0 0
    %1131 = vmatmul.mubr.bf16.gmra.mxu0 %v1093
    %v1132 = vpop.f32.mrf.mxu0
    %v1133 = vadd.f32 0.0, %v1132
    %v1134 = vpop.f32.mrf.mxu0
    %v1135 = vpop.f32.mrf.mxu0
    %v1136 = vadd.f32 0.0, %v1135
    %v1137 = vpop.f32.mrf.mxu0
    %1138 = vmatprep.mubr.bf16.mxu0 0
    %1139 = vmatmul.mubr.bf16.gmra.mxu0 %v1096
    %v1140 = vpop.f32.mrf.mxu0
    %v1141 = vadd.f32 0.0, %v1140
    %v1142 = vpop.f32.mrf.mxu0
    %v1143 = vpop.f32.mrf.mxu0
    %v1144 = vadd.f32 0.0, %v1143
    %v1145 = vpop.f32.mrf.mxu0
    %1146 = vdwg.mxu0
    %v1147 = vadd.f32 %v1015, %v1070
    %v1148 = vadd.f32 %v1018, %v1073
    %v1149 = vadd.f32 %v1023, %v1078
    %v1150 = vadd.f32 %v1026, %v1081
    %v1151 = vmul.f32 %v1147, 0.00390625
    %v1152 = vmul.f32 %v1148, 0.00390625
    %v1153 = vmul.f32 %v1149, 0.00390625
    %v1154 = vmul.f32 %v1150, 0.00390625
    %v1155 = vsub.f32 %v1133, %v1015
    %v1156 = vsub.f32 %v1136, %v1018
    %v1157 = vsub.f32 %v1141, %v1023
    %v1158 = vsub.f32 %v1144, %v1026
    %v1159 = vadd.f32 %v1155, %v1070
    %v1160 = vadd.f32 %v1156, %v1073
    %v1161 = vadd.f32 %v1157, %v1078
    %v1162 = vadd.f32 %v1158, %v1081
    %v1163 = vmul.f32 %v1159, 0.00390625
    %v1164 = vmul.f32 %v1160, 0.00390625
    %v1165 = vmul.f32 %v1161, 0.00390625
    %v1166 = vmul.f32 %v1162, 0.00390625
    %1167 = vst.msk [vmem:[#allocation13] sm:$0xff] %vm136, %v1151
    %1168 = vst.msk [vmem:[#allocation13 + $0x8] sm:$0xff] %vm136, %v1152
    %s1169 = scalar_lea.vmem [#allocation13], 16
    %1170 = vst.msk [vmem:[%s1169] sm:$0xff] %vm136, %v1163
    %1171 = vst.msk [vmem:[%s1169 + $0x8] sm:$0xff] %vm136, %v1164
    %s1172 = scalar_lea.vmem [#allocation13], 32
    %1173 = vst.msk [vmem:[%s1172] sm:$0xff] %vm136, %v1153
    %1174 = vst.msk [vmem:[%s1172 + $0x8] sm:$0xff] %vm136, %v1154
    %s1175 = scalar_lea.vmem [#allocation13], 48
    %1176 = vst.msk [vmem:[%s1175] sm:$0xff] %vm136, %v1165
    %1177 = vst.msk [vmem:[%s1175 + $0x8] sm:$0xff] %vm136, %v1166
    // Predicated region
    $region42: #{tpu_custom_call.1} parent=1 // pred_check
      _
    $region43: #{tpu_custom_call.1} parent=1 // pred_check_branch
      %1179 = sbr.rel (0) target = $region45
    $region44: #{tpu_custom_call.1} parent=1 // pred_region
      %s1181 = ssub.s32 1024, 1024
      %1182 = vsyncadd [#allocation6], %s1181
      %s1183 = sshll.u32 [#allocation13], 4
      %s1184 = int_to_ptr.vmem [resolvable:$true] %s1183
      %1189 = dma.vmem_to_hbm [thread:$0]  %s1184, 1024, %s5, [#allocation6], 128, 128, 8
    $region45: #{tpu_custom_call.1} parent=1 // pred_fallthru
      _
    // Predicated region
    $region46: #{tpu_custom_call.1} parent=1 // pred_check
      _
    $region47: #{tpu_custom_call.1} parent=1 // pred_check_branch
      %1191 = sbr.rel (0) target = $region49
    $region48: #{tpu_custom_call.1} parent=1 // pred_region
      %1192 = dma.done [#allocation6], 1024
    $region49: #{tpu_custom_call.1} parent=1 // pred_fallthru
      _
    %1193 = vsyncpa [#allocation5], 1
    %1194 = vsyncpa [#allocation8], 1
    %1195 = vsyncpa [#allocation11], 1
    %1196 = vsyncpa [#allocation6], 1

</llo_original>
